<compile_context>
chip_gen: v7x
topology: tpu7x:2x2x1
jax: 0.10.0
libtpu: 0.0.40
codegen_flags: <defaults>
</compile_context>

<pallas_src>
import math
from functools import partial

import jax
import jax.numpy as jnp
from jax.experimental import pallas as pl
from jax.experimental.pallas import tpu as pltpu  # noqa: F401  (TPU backend)

# ----------------------- model config (args) -----------------------
N_LAYERS = 2          # args.n_fusion_layers
MODEL_DIM = 32        # args.fusion_hid_dim
N_HEADS = 4           # args.n_attn_heads
FFW_DIM = 64          # args.fusion_ffw_dim
DROPOUT = 0.0         # args.transformer_dropout (eval mode -> no-op)
HEAD_DIM = MODEL_DIM // N_HEADS

BATCH = 2
SEQ = 8
LN_EPS = 1e-5


# ----------------------- fused Pallas kernel -----------------------
def _layernorm(x, gamma, beta, eps):
    mean = jnp.mean(x, axis=-1, keepdims=True)
    cen = x - mean
    var = jnp.mean(cen * cen, axis=-1, keepdims=True)
    return cen * jax.lax.rsqrt(var + eps) * gamma + beta


def fused_encoder_kernel(
    x_ref,
    wqkv_ref, bqkv_ref, wo_ref, bo_ref,
    ln1g_ref, ln1b_ref,
    w1_ref, b1_ref, w2_ref, b2_ref,
    ln2g_ref, ln2b_ref,
    y_ref, attn_ref,
    *, n_layers, n_heads, head_dim, batch, seq, eps,
):
    D = n_heads * head_dim
    M = batch * seq
    x = x_ref[...].astype(jnp.float32)            # [M, D] activation slab, VMEM-resident

    for l in range(n_layers):                     # static unroll (L=2): fully static indexing
        # ---- fused Q/K/V projection: one MXU pass, 96-lane-wide output ----
        qkv = jnp.dot(x, wqkv_ref[l], preferred_element_type=jnp.float32) + bqkv_ref[l]
        q = qkv[:, 0 * D:1 * D]                   # 1/sqrt(head_dim) folded into wq/bq
        k = qkv[:, 1 * D:2 * D]
        v = qkv[:, 2 * D:3 * D]

        # ---- multi-head self-attention: loop heads, batched over batch dim ----
        ctx_heads = []
        for h in range(n_heads):
            cols = slice(h * head_dim, (h + 1) * head_dim)
            qh = q[:, cols].reshape(batch, seq, head_dim)
            kh = k[:, cols].reshape(batch, seq, head_dim)
            vh = v[:, cols].reshape(batch, seq, head_dim)
            s = jnp.einsum("bqd,bkd->bqk", qh, kh,
                           preferred_element_type=jnp.float32)         # [B, S, S]
            s = s - jnp.max(s, axis=-1, keepdims=True)                  # stable softmax
            p = jnp.exp(s)
            p = p * pl.reciprocal(jnp.sum(p, axis=-1, keepdims=True), approx=False)
            attn_ref[l, h] = p.astype(attn_ref.dtype)                   # one [B,S,S] store
            ctx_heads.append(
                jnp.einsum("bqk,bkd->bqd", p, vh,
                           preferred_element_type=jnp.float32).reshape(M, head_dim))
        ctx = jnp.concatenate(ctx_heads, axis=-1)                       # [M, D]

        # ---- output projection + residual + LayerNorm ----
        attn_out = jnp.dot(ctx, wo_ref[l], preferred_element_type=jnp.float32) + bo_ref[l]
        x = _layernorm(x + attn_out, ln1g_ref[l], ln1b_ref[l], eps)

        # ---- FFN (Linear-ReLU-Linear) + residual + LayerNorm ----
        h1 = jnp.dot(x, w1_ref[l], preferred_element_type=jnp.float32) + b1_ref[l]
        h1 = jnp.maximum(h1, 0.0)
        h2 = jnp.dot(h1, w2_ref[l], preferred_element_type=jnp.float32) + b2_ref[l]
        x = _layernorm(x + h2, ln2g_ref[l], ln2b_ref[l], eps)

    y_ref[...] = x.astype(y_ref.dtype)


def _full_spec(shape):
    zeros = (0,) * len(shape)
    return pl.BlockSpec(shape, lambda: zeros)


def fusion_model_forward(x, stacked, attn_mask=None):
    # TODO(synk): attn_mask handling (mask broadcast + -inf fill) not wired in;
    # the reference call path uses attn_mask=None.
    B, S, D = x.shape
    M = B * S
    x2d = x.reshape(M, D)

    inputs = (
        x2d,
        stacked["wqkv"], stacked["bqkv"], stacked["wo"], stacked["bo"],
        stacked["ln1_g"], stacked["ln1_b"],
        stacked["w1"], stacked["b1"], stacked["w2"], stacked["b2"],
        stacked["ln2_g"], stacked["ln2_b"],
    )
    out_shapes = (
        jax.ShapeDtypeStruct((M, D), x.dtype),
        jax.ShapeDtypeStruct((N_LAYERS, N_HEADS, B, S, S), jnp.float32),
    )
    kernel = partial(
        fused_encoder_kernel,
        n_layers=N_LAYERS, n_heads=N_HEADS, head_dim=HEAD_DIM,
        batch=B, seq=S, eps=LN_EPS,
    )
    y2d, attn = pl.pallas_call(
        kernel,
        out_shape=out_shapes,
        in_specs=[_full_spec(a.shape) for a in inputs],
        out_specs=(_full_spec((M, D)),
                   _full_spec((N_LAYERS, N_HEADS, B, S, S))),
    )(*inputs)

    y = y2d.reshape(B, S, D)
    attns = attn.transpose(0, 2, 1, 3, 4)          # [L, B, H, S, S]
    return y, attns


# ----------------------- parameter init (deterministic, PyTorch-style) -----------------------
def _linear_init(key, fan_in, fan_out):
    kw, kb = jax.random.split(key)
    bound = 1.0 / math.sqrt(fan_in)
    w = jax.random.uniform(kw, (fan_in, fan_out), jnp.float32, -bound, bound)
    b = jax.random.uniform(kb, (fan_out,), jnp.float32, -bound, bound)
    return w, b


def init_params(key):
    layers = []
    for l in range(N_LAYERS):
        lk = jax.random.fold_in(key, l)
        ks = jax.random.split(lk, 6)
        wq, bq = _linear_init(ks[0], MODEL_DIM, MODEL_DIM)
        wk, bk = _linear_init(ks[1], MODEL_DIM, MODEL_DIM)
        wv, bv = _linear_init(ks[2], MODEL_DIM, MODEL_DIM)
        wo, bo = _linear_init(ks[3], MODEL_DIM, MODEL_DIM)
        w1, b1 = _linear_init(ks[4], MODEL_DIM, FFW_DIM)
        w2, b2 = _linear_init(ks[5], FFW_DIM, MODEL_DIM)
        layers.append(dict(
            wq=wq, bq=bq, wk=wk, bk=bk, wv=wv, bv=bv, wo=wo, bo=bo,
            w1=w1, b1=b1, w2=w2, b2=b2,
            ln1_g=jnp.ones((MODEL_DIM,), jnp.float32),
            ln1_b=jnp.zeros((MODEL_DIM,), jnp.float32),
            ln2_g=jnp.ones((MODEL_DIM,), jnp.float32),
            ln2_b=jnp.zeros((MODEL_DIM,), jnp.float32),
        ))
    return layers


def stack_params(layers):
    """Stack per-layer params to [L, ...]; fold 1/sqrt(head_dim) into Q; fuse QKV weights."""
    scale = 1.0 / math.sqrt(HEAD_DIM)
    stk = lambda name: jnp.stack([p[name] for p in layers], axis=0)
    wqkv = jnp.concatenate([stk("wq") * scale, stk("wk"), stk("wv")], axis=-1)  # [L, D, 3D]
    bqkv = jnp.concatenate([stk("bq") * scale, stk("bk"), stk("bv")], axis=-1)[:, None, :]
    row = lambda name: stk(name)[:, None, :]   # [L, 1, N] rows for sublane broadcast
    return dict(
        wqkv=wqkv, bqkv=bqkv,
        wo=stk("wo"), bo=row("bo"),
        w1=stk("w1"), b1=row("b1"),
        w2=stk("w2"), b2=row("b2"),
        ln1_g=row("ln1_g"), ln1_b=row("ln1_b"),
        ln2_g=row("ln2_g"), ln2_b=row("ln2_b"),
    )


# ----------------------- pure-JAX reference (correctness check) -----------------------
def _ref_layernorm(x, g, b):
    mean = jnp.mean(x, axis=-1, keepdims=True)
    var = jnp.mean((x - mean) ** 2, axis=-1, keepdims=True)
    return (x - mean) * jax.lax.rsqrt(var + LN_EPS) * g + b


def _ref_forward(x, layers):
    B, S, D = x.shape
    attns = []
    cur = x
    for p in layers:
        x2d = cur.reshape(B * S, D)
        heads = lambda t: t.reshape(B, S, N_HEADS, HEAD_DIM).transpose(0, 2, 1, 3)
        q = heads(x2d @ p["wq"] + p["bq"])
        k = heads(x2d @ p["wk"] + p["bk"])
        v = heads(x2d @ p["wv"] + p["bv"])
        s = jnp.einsum("bhqd,bhkd->bhqk", q, k) / math.sqrt(HEAD_DIM)
        a = jax.nn.softmax(s, axis=-1)
        ctx = jnp.einsum("bhqk,bhkd->bhqd", a, v).transpose(0, 2, 1, 3).reshape(B * S, D)
        y = _ref_layernorm(x2d + (ctx @ p["wo"] + p["bo"]), p["ln1_g"], p["ln1_b"])
        f = jnp.maximum(y @ p["w1"] + p["b1"], 0.0) @ p["w2"] + p["b2"]
        y = _ref_layernorm(y + f, p["ln2_g"], p["ln2_b"])
        cur = y.reshape(B, S, D)
        attns.append(a)
    return cur, jnp.stack(attns, axis=0)


# ----------------------- main -----------------------
if __name__ == "__main__":
    key = jax.random.PRNGKey(0)
    pkey, xkey = jax.random.split(key)
    params = init_params(pkey)
    stacked = stack_params(params)
    x = jax.random.normal(xkey, (BATCH, SEQ, MODEL_DIM), jnp.float32)

    fwd = jax.jit(lambda xx: fusion_model_forward(xx, stacked))
    out, attns = fwd(x)
    jax.block_until_ready(out)
    jax.block_until_ready(attns)

    assert out.shape == (BATCH, SEQ, MODEL_DIM)
    assert attns.shape == (N_LAYERS, BATCH, N_HEADS, SEQ, SEQ)
    assert bool(jnp.all(jnp.isfinite(out)))
    # attention rows must sum to 1
    assert bool(jnp.allclose(jnp.sum(attns, axis=-1), 1.0, atol=1e-5))

    # cross-check against a pure-JAX reference of the same encoder
    ref_out, ref_attns = _ref_forward(x, params)
    assert bool(jnp.allclose(out, ref_out, rtol=1e-4, atol=1e-4))
    assert bool(jnp.allclose(attns, ref_attns, rtol=1e-4, atol=1e-4))

    print("KERNEL_OK")
</pallas_src>

<mosaic_0001>
module attributes {stable_mosaic.version = 11 : i64} {
  func.func @fused_encoder_kernel(%arg0: memref<16x32xf32, #tpu.memory_space<vmem>>, %arg1: memref<2x32x96xf32, #tpu.memory_space<vmem>>, %arg2: memref<2x1x96xf32, #tpu.memory_space<vmem>>, %arg3: memref<2x32x32xf32, #tpu.memory_space<vmem>>, %arg4: memref<2x1x32xf32, #tpu.memory_space<vmem>>, %arg5: memref<2x1x32xf32, #tpu.memory_space<vmem>>, %arg6: memref<2x1x32xf32, #tpu.memory_space<vmem>>, %arg7: memref<2x32x64xf32, #tpu.memory_space<vmem>>, %arg8: memref<2x1x64xf32, #tpu.memory_space<vmem>>, %arg9: memref<2x64x32xf32, #tpu.memory_space<vmem>>, %arg10: memref<2x1x32xf32, #tpu.memory_space<vmem>>, %arg11: memref<2x1x32xf32, #tpu.memory_space<vmem>>, %arg12: memref<2x1x32xf32, #tpu.memory_space<vmem>>, %arg13: memref<16x32xf32, #tpu.memory_space<vmem>>, %arg14: memref<2x4x2x8x8xf32, #tpu.memory_space<vmem>>) attributes {dimension_semantics = [], scalar_prefetch = 0 : i64, scratch_operands = 0 : i64, tpu.core_type = #tpu.core_type<tc>} {
    %c0 = arith.constant 0 : index
    %c0_0 = arith.constant 0 : index
    %0 = vector.load %arg0[%c0, %c0_0] : memref<16x32xf32, #tpu.memory_space<vmem>>, vector<16x32xf32>
    %c0_1 = arith.constant 0 : index
    %c0_2 = arith.constant 0 : index
    %c0_3 = arith.constant 0 : index
    %1 = vector.load %arg1[%c0_1, %c0_2, %c0_3] : memref<2x32x96xf32, #tpu.memory_space<vmem>>, vector<1x32x96xf32>
    %2 = vector.shape_cast %1 : vector<1x32x96xf32> to vector<32x96xf32>
    %cst = arith.constant dense<0.000000e+00> : vector<16x96xf32>
    %3 = tpu.matmul %0, %2, %cst {dimension_numbers = #tpu.dot_dimension_numbers<[1], [0], [0], [1], [0, 0, 1, 1], [], []>} : vector<16x32xf32>, vector<32x96xf32>, vector<16x96xf32> -> vector<16x96xf32>
    %c0_4 = arith.constant 0 : index
    %c0_5 = arith.constant 0 : index
    %c0_6 = arith.constant 0 : index
    %4 = vector.load %arg2[%c0_4, %c0_5, %c0_6] : memref<2x1x96xf32, #tpu.memory_space<vmem>>, vector<1x1x96xf32>
    %5 = vector.shape_cast %4 : vector<1x1x96xf32> to vector<1x96xf32>
    %6 = vector.broadcast %5 : vector<1x96xf32> to vector<16x96xf32>
    %7 = arith.addf %3, %6 : vector<16x96xf32>
    %8 = vector.extract_strided_slice %7 {offsets = [0, 0], sizes = [16, 32], strides = [1, 1]} : vector<16x96xf32> to vector<16x32xf32>
    %9 = vector.extract_strided_slice %7 {offsets = [0, 32], sizes = [16, 32], strides = [1, 1]} : vector<16x96xf32> to vector<16x32xf32>
    %10 = vector.extract_strided_slice %7 {offsets = [0, 64], sizes = [16, 32], strides = [1, 1]} : vector<16x96xf32> to vector<16x32xf32>
    %11 = vector.extract_strided_slice %8 {offsets = [0, 0], sizes = [16, 8], strides = [1, 1]} : vector<16x32xf32> to vector<16x8xf32>
    %12 = vector.shape_cast %11 : vector<16x8xf32> to vector<2x8x8xf32>
    %13 = vector.extract_strided_slice %9 {offsets = [0, 0], sizes = [16, 8], strides = [1, 1]} : vector<16x32xf32> to vector<16x8xf32>
    %14 = vector.shape_cast %13 : vector<16x8xf32> to vector<2x8x8xf32>
    %15 = vector.extract_strided_slice %10 {offsets = [0, 0], sizes = [16, 8], strides = [1, 1]} : vector<16x32xf32> to vector<16x8xf32>
    %16 = vector.shape_cast %15 : vector<16x8xf32> to vector<2x8x8xf32>
    "tpu.trace_start"() <{level = 10 : i32, message = "bqd,bkd->bqk"}> : () -> ()
    %cst_7 = arith.constant dense<0.000000e+00> : vector<2x8x8xf32>
    %17 = tpu.matmul %12, %14, %cst_7 {dimension_numbers = #tpu.dot_dimension_numbers<[2], [2], [1], [1], [0, 0, 0, 1, 1, 1], [0], [0]>} : vector<2x8x8xf32>, vector<2x8x8xf32>, vector<2x8x8xf32> -> vector<2x8x8xf32>
    "tpu.trace_stop"() : () -> ()
    %cst_8 = arith.constant dense<0xFF800000> : vector<2x8xf32>
    %18 = vector.multi_reduction <maximumf>, %17, %cst_8 [2] : vector<2x8x8xf32> to vector<2x8xf32>
    %19 = vector.shape_cast %18 : vector<2x8xf32> to vector<2x8x1xf32>
    %20 = vector.broadcast %19 : vector<2x8x1xf32> to vector<2x8x8xf32>
    %21 = arith.subf %17, %20 : vector<2x8x8xf32>
    %22 = math.exp %21 : vector<2x8x8xf32>
    %cst_9 = arith.constant dense<0.000000e+00> : vector<2x8xf32>
    %23 = vector.multi_reduction <add>, %22, %cst_9 [2] : vector<2x8x8xf32> to vector<2x8xf32>
    %24 = vector.shape_cast %23 : vector<2x8xf32> to vector<2x8x1xf32>
    %25 = tpu.reciprocal %24 : vector<2x8x1xf32> -> vector<2x8x1xf32>
    %26 = vector.broadcast %25 : vector<2x8x1xf32> to vector<2x8x8xf32>
    %27 = arith.mulf %22, %26 : vector<2x8x8xf32>
    %c0_10 = arith.constant 0 : index
    %c0_11 = arith.constant 0 : index
    %c0_12 = arith.constant 0 : index
    %c0_13 = arith.constant 0 : index
    %c0_14 = arith.constant 0 : index
    %28 = vector.load %arg14[%c0_10, %c0_11, %c0_12, %c0_13, %c0_14] : memref<2x4x2x8x8xf32, #tpu.memory_space<vmem>>, vector<1x1x2x8x8xf32>
    %29 = vector.shape_cast %28 : vector<1x1x2x8x8xf32> to vector<2x8x8xf32>
    %30 = vector.shape_cast %27 : vector<2x8x8xf32> to vector<1x1x2x8x8xf32>
    tpu.vector_store %arg14[%c0_10, %c0_11, %c0_12, %c0_13, %c0_14], %30 {strides = array<i32>} : memref<2x4x2x8x8xf32, #tpu.memory_space<vmem>>, vector<1x1x2x8x8xf32>,
    "tpu.trace_start"() <{level = 10 : i32, message = "bqk,bkd->bqd"}> : () -> ()
    %cst_15 = arith.constant dense<0.000000e+00> : vector<2x8x8xf32>
    %31 = tpu.matmul %27, %16, %cst_15 {dimension_numbers = #tpu.dot_dimension_numbers<[2], [1], [1], [2], [0, 0, 0, 1, 1, 2], [0], [0]>} : vector<2x8x8xf32>, vector<2x8x8xf32>, vector<2x8x8xf32> -> vector<2x8x8xf32>
    "tpu.trace_stop"() : () -> ()
    %32 = vector.shape_cast %31 : vector<2x8x8xf32> to vector<16x8xf32>
    %33 = vector.extract_strided_slice %8 {offsets = [0, 8], sizes = [16, 8], strides = [1, 1]} : vector<16x32xf32> to vector<16x8xf32>
    %34 = vector.shape_cast %33 : vector<16x8xf32> to vector<2x8x8xf32>
    %35 = vector.extract_strided_slice %9 {offsets = [0, 8], sizes = [16, 8], strides = [1, 1]} : vector<16x32xf32> to vector<16x8xf32>
    %36 = vector.shape_cast %35 : vector<16x8xf32> to vector<2x8x8xf32>
    %37 = vector.extract_strided_slice %10 {offsets = [0, 8], sizes = [16, 8], strides = [1, 1]} : vector<16x32xf32> to vector<16x8xf32>
    %38 = vector.shape_cast %37 : vector<16x8xf32> to vector<2x8x8xf32>
    "tpu.trace_start"() <{level = 10 : i32, message = "bqd,bkd->bqk"}> : () -> ()
    %cst_16 = arith.constant dense<0.000000e+00> : vector<2x8x8xf32>
    %39 = tpu.matmul %34, %36, %cst_16 {dimension_numbers = #tpu.dot_dimension_numbers<[2], [2], [1], [1], [0, 0, 0, 1, 1, 1], [0], [0]>} : vector<2x8x8xf32>, vector<2x8x8xf32>, vector<2x8x8xf32> -> vector<2x8x8xf32>
    "tpu.trace_stop"() : () -> ()
    %cst_17 = arith.constant dense<0xFF800000> : vector<2x8xf32>
    %40 = vector.multi_reduction <maximumf>, %39, %cst_17 [2] : vector<2x8x8xf32> to vector<2x8xf32>
    %41 = vector.shape_cast %40 : vector<2x8xf32> to vector<2x8x1xf32>
    %42 = vector.broadcast %41 : vector<2x8x1xf32> to vector<2x8x8xf32>
    %43 = arith.subf %39, %42 : vector<2x8x8xf32>
    %44 = math.exp %43 : vector<2x8x8xf32>
    %cst_18 = arith.constant dense<0.000000e+00> : vector<2x8xf32>
    %45 = vector.multi_reduction <add>, %44, %cst_18 [2] : vector<2x8x8xf32> to vector<2x8xf32>
    %46 = vector.shape_cast %45 : vector<2x8xf32> to vector<2x8x1xf32>
    %47 = tpu.reciprocal %46 : vector<2x8x1xf32> -> vector<2x8x1xf32>
    %48 = vector.broadcast %47 : vector<2x8x1xf32> to vector<2x8x8xf32>
    %49 = arith.mulf %44, %48 : vector<2x8x8xf32>
    %c0_19 = arith.constant 0 : index
    %c1 = arith.constant 1 : index
    %c0_20 = arith.constant 0 : index
    %c0_21 = arith.constant 0 : index
    %c0_22 = arith.constant 0 : index
    %50 = vector.load %arg14[%c0_19, %c1, %c0_20, %c0_21, %c0_22] : memref<2x4x2x8x8xf32, #tpu.memory_space<vmem>>, vector<1x1x2x8x8xf32>
    %51 = vector.shape_cast %50 : vector<1x1x2x8x8xf32> to vector<2x8x8xf32>
    %52 = vector.shape_cast %49 : vector<2x8x8xf32> to vector<1x1x2x8x8xf32>
    tpu.vector_store %arg14[%c0_19, %c1, %c0_20, %c0_21, %c0_22], %52 {strides = array<i32>} : memref<2x4x2x8x8xf32, #tpu.memory_space<vmem>>, vector<1x1x2x8x8xf32>,
    "tpu.trace_start"() <{level = 10 : i32, message = "bqk,bkd->bqd"}> : () -> ()
    %cst_23 = arith.constant dense<0.000000e+00> : vector<2x8x8xf32>
    %53 = tpu.matmul %49, %38, %cst_23 {dimension_numbers = #tpu.dot_dimension_numbers<[2], [1], [1], [2], [0, 0, 0, 1, 1, 2], [0], [0]>} : vector<2x8x8xf32>, vector<2x8x8xf32>, vector<2x8x8xf32> -> vector<2x8x8xf32>
    "tpu.trace_stop"() : () -> ()
    %54 = vector.shape_cast %53 : vector<2x8x8xf32> to vector<16x8xf32>
    %55 = vector.extract_strided_slice %8 {offsets = [0, 16], sizes = [16, 8], strides = [1, 1]} : vector<16x32xf32> to vector<16x8xf32>
    %56 = vector.shape_cast %55 : vector<16x8xf32> to vector<2x8x8xf32>
    %57 = vector.extract_strided_slice %9 {offsets = [0, 16], sizes = [16, 8], strides = [1, 1]} : vector<16x32xf32> to vector<16x8xf32>
    %58 = vector.shape_cast %57 : vector<16x8xf32> to vector<2x8x8xf32>
    %59 = vector.extract_strided_slice %10 {offsets = [0, 16], sizes = [16, 8], strides = [1, 1]} : vector<16x32xf32> to vector<16x8xf32>
    %60 = vector.shape_cast %59 : vector<16x8xf32> to vector<2x8x8xf32>
    "tpu.trace_start"() <{level = 10 : i32, message = "bqd,bkd->bqk"}> : () -> ()
    %cst_24 = arith.constant dense<0.000000e+00> : vector<2x8x8xf32>
    %61 = tpu.matmul %56, %58, %cst_24 {dimension_numbers = #tpu.dot_dimension_numbers<[2], [2], [1], [1], [0, 0, 0, 1, 1, 1], [0], [0]>} : vector<2x8x8xf32>, vector<2x8x8xf32>, vector<2x8x8xf32> -> vector<2x8x8xf32>
    "tpu.trace_stop"() : () -> ()
    %cst_25 = arith.constant dense<0xFF800000> : vector<2x8xf32>
    %62 = vector.multi_reduction <maximumf>, %61, %cst_25 [2] : vector<2x8x8xf32> to vector<2x8xf32>
    %63 = vector.shape_cast %62 : vector<2x8xf32> to vector<2x8x1xf32>
    %64 = vector.broadcast %63 : vector<2x8x1xf32> to vector<2x8x8xf32>
    %65 = arith.subf %61, %64 : vector<2x8x8xf32>
    %66 = math.exp %65 : vector<2x8x8xf32>
    %cst_26 = arith.constant dense<0.000000e+00> : vector<2x8xf32>
    %67 = vector.multi_reduction <add>, %66, %cst_26 [2] : vector<2x8x8xf32> to vector<2x8xf32>
    %68 = vector.shape_cast %67 : vector<2x8xf32> to vector<2x8x1xf32>
    %69 = tpu.reciprocal %68 : vector<2x8x1xf32> -> vector<2x8x1xf32>
    %70 = vector.broadcast %69 : vector<2x8x1xf32> to vector<2x8x8xf32>
    %71 = arith.mulf %66, %70 : vector<2x8x8xf32>
    %c0_27 = arith.constant 0 : index
    %c2 = arith.constant 2 : index
    %c0_28 = arith.constant 0 : index
    %c0_29 = arith.constant 0 : index
    %c0_30 = arith.constant 0 : index
    %72 = vector.load %arg14[%c0_27, %c2, %c0_28, %c0_29, %c0_30] : memref<2x4x2x8x8xf32, #tpu.memory_space<vmem>>, vector<1x1x2x8x8xf32>
    %73 = vector.shape_cast %72 : vector<1x1x2x8x8xf32> to vector<2x8x8xf32>
    %74 = vector.shape_cast %71 : vector<2x8x8xf32> to vector<1x1x2x8x8xf32>
    tpu.vector_store %arg14[%c0_27, %c2, %c0_28, %c0_29, %c0_30], %74 {strides = array<i32>} : memref<2x4x2x8x8xf32, #tpu.memory_space<vmem>>, vector<1x1x2x8x8xf32>,
    "tpu.trace_start"() <{level = 10 : i32, message = "bqk,bkd->bqd"}> : () -> ()
    %cst_31 = arith.constant dense<0.000000e+00> : vector<2x8x8xf32>
    %75 = tpu.matmul %71, %60, %cst_31 {dimension_numbers = #tpu.dot_dimension_numbers<[2], [1], [1], [2], [0, 0, 0, 1, 1, 2], [0], [0]>} : vector<2x8x8xf32>, vector<2x8x8xf32>, vector<2x8x8xf32> -> vector<2x8x8xf32>
    "tpu.trace_stop"() : () -> ()
    %76 = vector.shape_cast %75 : vector<2x8x8xf32> to vector<16x8xf32>
    %77 = vector.extract_strided_slice %8 {offsets = [0, 24], sizes = [16, 8], strides = [1, 1]} : vector<16x32xf32> to vector<16x8xf32>
    %78 = vector.shape_cast %77 : vector<16x8xf32> to vector<2x8x8xf32>
    %79 = vector.extract_strided_slice %9 {offsets = [0, 24], sizes = [16, 8], strides = [1, 1]} : vector<16x32xf32> to vector<16x8xf32>
    %80 = vector.shape_cast %79 : vector<16x8xf32> to vector<2x8x8xf32>
    %81 = vector.extract_strided_slice %10 {offsets = [0, 24], sizes = [16, 8], strides = [1, 1]} : vector<16x32xf32> to vector<16x8xf32>
    %82 = vector.shape_cast %81 : vector<16x8xf32> to vector<2x8x8xf32>
    "tpu.trace_start"() <{level = 10 : i32, message = "bqd,bkd->bqk"}> : () -> ()
    %cst_32 = arith.constant dense<0.000000e+00> : vector<2x8x8xf32>
    %83 = tpu.matmul %78, %80, %cst_32 {dimension_numbers = #tpu.dot_dimension_numbers<[2], [2], [1], [1], [0, 0, 0, 1, 1, 1], [0], [0]>} : vector<2x8x8xf32>, vector<2x8x8xf32>, vector<2x8x8xf32> -> vector<2x8x8xf32>
    "tpu.trace_stop"() : () -> ()
    %cst_33 = arith.constant dense<0xFF800000> : vector<2x8xf32>
    %84 = vector.multi_reduction <maximumf>, %83, %cst_33 [2] : vector<2x8x8xf32> to vector<2x8xf32>
    %85 = vector.shape_cast %84 : vector<2x8xf32> to vector<2x8x1xf32>
    %86 = vector.broadcast %85 : vector<2x8x1xf32> to vector<2x8x8xf32>
    %87 = arith.subf %83, %86 : vector<2x8x8xf32>
    %88 = math.exp %87 : vector<2x8x8xf32>
    %cst_34 = arith.constant dense<0.000000e+00> : vector<2x8xf32>
    %89 = vector.multi_reduction <add>, %88, %cst_34 [2] : vector<2x8x8xf32> to vector<2x8xf32>
    %90 = vector.shape_cast %89 : vector<2x8xf32> to vector<2x8x1xf32>
    %91 = tpu.reciprocal %90 : vector<2x8x1xf32> -> vector<2x8x1xf32>
    %92 = vector.broadcast %91 : vector<2x8x1xf32> to vector<2x8x8xf32>
    %93 = arith.mulf %88, %92 : vector<2x8x8xf32>
    %c0_35 = arith.constant 0 : index
    %c3 = arith.constant 3 : index
    %c0_36 = arith.constant 0 : index
    %c0_37 = arith.constant 0 : index
    %c0_38 = arith.constant 0 : index
    %94 = vector.load %arg14[%c0_35, %c3, %c0_36, %c0_37, %c0_38] : memref<2x4x2x8x8xf32, #tpu.memory_space<vmem>>, vector<1x1x2x8x8xf32>
    %95 = vector.shape_cast %94 : vector<1x1x2x8x8xf32> to vector<2x8x8xf32>
    %96 = vector.shape_cast %93 : vector<2x8x8xf32> to vector<1x1x2x8x8xf32>
    tpu.vector_store %arg14[%c0_35, %c3, %c0_36, %c0_37, %c0_38], %96 {strides = array<i32>} : memref<2x4x2x8x8xf32, #tpu.memory_space<vmem>>, vector<1x1x2x8x8xf32>,
    "tpu.trace_start"() <{level = 10 : i32, message = "bqk,bkd->bqd"}> : () -> ()
    %cst_39 = arith.constant dense<0.000000e+00> : vector<2x8x8xf32>
    %97 = tpu.matmul %93, %82, %cst_39 {dimension_numbers = #tpu.dot_dimension_numbers<[2], [1], [1], [2], [0, 0, 0, 1, 1, 2], [0], [0]>} : vector<2x8x8xf32>, vector<2x8x8xf32>, vector<2x8x8xf32> -> vector<2x8x8xf32>
    "tpu.trace_stop"() : () -> ()
    %98 = vector.shape_cast %97 : vector<2x8x8xf32> to vector<16x8xf32>
    %99 = tpu.concatenate %32, %54, %76, %98 in 1 : vector<16x8xf32>, vector<16x8xf32>, vector<16x8xf32>, vector<16x8xf32> -> vector<16x32xf32>
    %c0_40 = arith.constant 0 : index
    %c0_41 = arith.constant 0 : index
    %c0_42 = arith.constant 0 : index
    %100 = vector.load %arg3[%c0_40, %c0_41, %c0_42] : memref<2x32x32xf32, #tpu.memory_space<vmem>>, vector<1x32x32xf32>
    %101 = vector.shape_cast %100 : vector<1x32x32xf32> to vector<32x32xf32>
    %cst_43 = arith.constant dense<0.000000e+00> : vector<16x32xf32>
    %102 = tpu.matmul %99, %101, %cst_43 {dimension_numbers = #tpu.dot_dimension_numbers<[1], [0], [0], [1], [0, 0, 1, 1], [], []>} : vector<16x32xf32>, vector<32x32xf32>, vector<16x32xf32> -> vector<16x32xf32>
    %c0_44 = arith.constant 0 : index
    %c0_45 = arith.constant 0 : index
    %c0_46 = arith.constant 0 : index
    %103 = vector.load %arg4[%c0_44, %c0_45, %c0_46] : memref<2x1x32xf32, #tpu.memory_space<vmem>>, vector<1x1x32xf32>
    %104 = vector.shape_cast %103 : vector<1x1x32xf32> to vector<1x32xf32>
    %105 = vector.broadcast %104 : vector<1x32xf32> to vector<16x32xf32>
    %106 = arith.addf %102, %105 : vector<16x32xf32>
    %107 = arith.addf %0, %106 : vector<16x32xf32>
    %c0_47 = arith.constant 0 : index
    %c0_48 = arith.constant 0 : index
    %c0_49 = arith.constant 0 : index
    %108 = vector.load %arg5[%c0_47, %c0_48, %c0_49] : memref<2x1x32xf32, #tpu.memory_space<vmem>>, vector<1x1x32xf32>
    %109 = vector.shape_cast %108 : vector<1x1x32xf32> to vector<1x32xf32>
    %c0_50 = arith.constant 0 : index
    %c0_51 = arith.constant 0 : index
    %c0_52 = arith.constant 0 : index
    %110 = vector.load %arg6[%c0_50, %c0_51, %c0_52] : memref<2x1x32xf32, #tpu.memory_space<vmem>>, vector<1x1x32xf32>
    %111 = vector.shape_cast %110 : vector<1x1x32xf32> to vector<1x32xf32>
    %cst_53 = arith.constant dense<0.000000e+00> : vector<16xf32>
    %112 = vector.multi_reduction <add>, %107, %cst_53 [1] : vector<16x32xf32> to vector<16xf32>
    %113 = vector.shape_cast %112 : vector<16xf32> to vector<16x1xf32>
    %cst_54 = arith.constant 3.200000e+01 : f32
    %114 = vector.broadcast %cst_54 : f32 to vector<16x1xf32>
    %115 = arith.divf %113, %114 : vector<16x1xf32>
    %116 = vector.broadcast %115 : vector<16x1xf32> to vector<16x32xf32>
    %117 = arith.subf %107, %116 : vector<16x32xf32>
    %118 = arith.mulf %117, %117 : vector<16x32xf32>
    %cst_55 = arith.constant dense<0.000000e+00> : vector<16xf32>
    %119 = vector.multi_reduction <add>, %118, %cst_55 [1] : vector<16x32xf32> to vector<16xf32>
    %120 = vector.shape_cast %119 : vector<16xf32> to vector<16x1xf32>
    %cst_56 = arith.constant 3.200000e+01 : f32
    %121 = vector.broadcast %cst_56 : f32 to vector<16x1xf32>
    %122 = arith.divf %120, %121 : vector<16x1xf32>
    %cst_57 = arith.constant 9.99999974E-6 : f32
    %123 = vector.broadcast %cst_57 : f32 to vector<16x1xf32>
    %124 = arith.addf %122, %123 : vector<16x1xf32>
    %125 = math.rsqrt %124 : vector<16x1xf32>
    %126 = vector.broadcast %125 : vector<16x1xf32> to vector<16x32xf32>
    %127 = arith.mulf %117, %126 : vector<16x32xf32>
    %128 = vector.broadcast %109 : vector<1x32xf32> to vector<16x32xf32>
    %129 = arith.mulf %127, %128 : vector<16x32xf32>
    %130 = vector.broadcast %111 : vector<1x32xf32> to vector<16x32xf32>
    %131 = arith.addf %129, %130 : vector<16x32xf32>
    %c0_58 = arith.constant 0 : index
    %c0_59 = arith.constant 0 : index
    %c0_60 = arith.constant 0 : index
    %132 = vector.load %arg7[%c0_58, %c0_59, %c0_60] : memref<2x32x64xf32, #tpu.memory_space<vmem>>, vector<1x32x64xf32>
    %133 = vector.shape_cast %132 : vector<1x32x64xf32> to vector<32x64xf32>
    %cst_61 = arith.constant dense<0.000000e+00> : vector<16x64xf32>
    %134 = tpu.matmul %131, %133, %cst_61 {dimension_numbers = #tpu.dot_dimension_numbers<[1], [0], [0], [1], [0, 0, 1, 1], [], []>} : vector<16x32xf32>, vector<32x64xf32>, vector<16x64xf32> -> vector<16x64xf32>
    %c0_62 = arith.constant 0 : index
    %c0_63 = arith.constant 0 : index
    %c0_64 = arith.constant 0 : index
    %135 = vector.load %arg8[%c0_62, %c0_63, %c0_64] : memref<2x1x64xf32, #tpu.memory_space<vmem>>, vector<1x1x64xf32>
    %136 = vector.shape_cast %135 : vector<1x1x64xf32> to vector<1x64xf32>
    %137 = vector.broadcast %136 : vector<1x64xf32> to vector<16x64xf32>
    %138 = arith.addf %134, %137 : vector<16x64xf32>
    %cst_65 = arith.constant 0.000000e+00 : f32
    %139 = vector.broadcast %cst_65 : f32 to vector<16x64xf32>
    %140 = arith.maximumf %138, %139 : vector<16x64xf32>
    %c0_66 = arith.constant 0 : index
    %c0_67 = arith.constant 0 : index
    %c0_68 = arith.constant 0 : index
    %141 = vector.load %arg9[%c0_66, %c0_67, %c0_68] : memref<2x64x32xf32, #tpu.memory_space<vmem>>, vector<1x64x32xf32>
    %142 = vector.shape_cast %141 : vector<1x64x32xf32> to vector<64x32xf32>
    %cst_69 = arith.constant dense<0.000000e+00> : vector<16x32xf32>
    %143 = tpu.matmul %140, %142, %cst_69 {dimension_numbers = #tpu.dot_dimension_numbers<[1], [0], [0], [1], [0, 0, 1, 1], [], []>} : vector<16x64xf32>, vector<64x32xf32>, vector<16x32xf32> -> vector<16x32xf32>
    %c0_70 = arith.constant 0 : index
    %c0_71 = arith.constant 0 : index
    %c0_72 = arith.constant 0 : index
    %144 = vector.load %arg10[%c0_70, %c0_71, %c0_72] : memref<2x1x32xf32, #tpu.memory_space<vmem>>, vector<1x1x32xf32>
    %145 = vector.shape_cast %144 : vector<1x1x32xf32> to vector<1x32xf32>
    %146 = vector.broadcast %145 : vector<1x32xf32> to vector<16x32xf32>
    %147 = arith.addf %143, %146 : vector<16x32xf32>
    %148 = arith.addf %131, %147 : vector<16x32xf32>
    %c0_73 = arith.constant 0 : index
    %c0_74 = arith.constant 0 : index
    %c0_75 = arith.constant 0 : index
    %149 = vector.load %arg11[%c0_73, %c0_74, %c0_75] : memref<2x1x32xf32, #tpu.memory_space<vmem>>, vector<1x1x32xf32>
    %150 = vector.shape_cast %149 : vector<1x1x32xf32> to vector<1x32xf32>
    %c0_76 = arith.constant 0 : index
    %c0_77 = arith.constant 0 : index
    %c0_78 = arith.constant 0 : index
    %151 = vector.load %arg12[%c0_76, %c0_77, %c0_78] : memref<2x1x32xf32, #tpu.memory_space<vmem>>, vector<1x1x32xf32>
    %152 = vector.shape_cast %151 : vector<1x1x32xf32> to vector<1x32xf32>
    %cst_79 = arith.constant dense<0.000000e+00> : vector<16xf32>
    %153 = vector.multi_reduction <add>, %148, %cst_79 [1] : vector<16x32xf32> to vector<16xf32>
    %154 = vector.shape_cast %153 : vector<16xf32> to vector<16x1xf32>
    %cst_80 = arith.constant 3.200000e+01 : f32
    %155 = vector.broadcast %cst_80 : f32 to vector<16x1xf32>
    %156 = arith.divf %154, %155 : vector<16x1xf32>
    %157 = vector.broadcast %156 : vector<16x1xf32> to vector<16x32xf32>
    %158 = arith.subf %148, %157 : vector<16x32xf32>
    %159 = arith.mulf %158, %158 : vector<16x32xf32>
    %cst_81 = arith.constant dense<0.000000e+00> : vector<16xf32>
    %160 = vector.multi_reduction <add>, %159, %cst_81 [1] : vector<16x32xf32> to vector<16xf32>
    %161 = vector.shape_cast %160 : vector<16xf32> to vector<16x1xf32>
    %cst_82 = arith.constant 3.200000e+01 : f32
    %162 = vector.broadcast %cst_82 : f32 to vector<16x1xf32>
    %163 = arith.divf %161, %162 : vector<16x1xf32>
    %cst_83 = arith.constant 9.99999974E-6 : f32
    %164 = vector.broadcast %cst_83 : f32 to vector<16x1xf32>
    %165 = arith.addf %163, %164 : vector<16x1xf32>
    %166 = math.rsqrt %165 : vector<16x1xf32>
    %167 = vector.broadcast %166 : vector<16x1xf32> to vector<16x32xf32>
    %168 = arith.mulf %158, %167 : vector<16x32xf32>
    %169 = vector.broadcast %150 : vector<1x32xf32> to vector<16x32xf32>
    %170 = arith.mulf %168, %169 : vector<16x32xf32>
    %171 = vector.broadcast %152 : vector<1x32xf32> to vector<16x32xf32>
    %172 = arith.addf %170, %171 : vector<16x32xf32>
    %c1_84 = arith.constant 1 : index
    %c0_85 = arith.constant 0 : index
    %c0_86 = arith.constant 0 : index
    %173 = vector.load %arg1[%c1_84, %c0_85, %c0_86] : memref<2x32x96xf32, #tpu.memory_space<vmem>>, vector<1x32x96xf32>
    %174 = vector.shape_cast %173 : vector<1x32x96xf32> to vector<32x96xf32>
    %cst_87 = arith.constant dense<0.000000e+00> : vector<16x96xf32>
    %175 = tpu.matmul %172, %174, %cst_87 {dimension_numbers = #tpu.dot_dimension_numbers<[1], [0], [0], [1], [0, 0, 1, 1], [], []>} : vector<16x32xf32>, vector<32x96xf32>, vector<16x96xf32> -> vector<16x96xf32>
    %c1_88 = arith.constant 1 : index
    %c0_89 = arith.constant 0 : index
    %c0_90 = arith.constant 0 : index
    %176 = vector.load %arg2[%c1_88, %c0_89, %c0_90] : memref<2x1x96xf32, #tpu.memory_space<vmem>>, vector<1x1x96xf32>
    %177 = vector.shape_cast %176 : vector<1x1x96xf32> to vector<1x96xf32>
    %178 = vector.broadcast %177 : vector<1x96xf32> to vector<16x96xf32>
    %179 = arith.addf %175, %178 : vector<16x96xf32>
    %180 = vector.extract_strided_slice %179 {offsets = [0, 0], sizes = [16, 32], strides = [1, 1]} : vector<16x96xf32> to vector<16x32xf32>
    %181 = vector.extract_strided_slice %179 {offsets = [0, 32], sizes = [16, 32], strides = [1, 1]} : vector<16x96xf32> to vector<16x32xf32>
    %182 = vector.extract_strided_slice %179 {offsets = [0, 64], sizes = [16, 32], strides = [1, 1]} : vector<16x96xf32> to vector<16x32xf32>
    %183 = vector.extract_strided_slice %180 {offsets = [0, 0], sizes = [16, 8], strides = [1, 1]} : vector<16x32xf32> to vector<16x8xf32>
    %184 = vector.shape_cast %183 : vector<16x8xf32> to vector<2x8x8xf32>
    %185 = vector.extract_strided_slice %181 {offsets = [0, 0], sizes = [16, 8], strides = [1, 1]} : vector<16x32xf32> to vector<16x8xf32>
    %186 = vector.shape_cast %185 : vector<16x8xf32> to vector<2x8x8xf32>
    %187 = vector.extract_strided_slice %182 {offsets = [0, 0], sizes = [16, 8], strides = [1, 1]} : vector<16x32xf32> to vector<16x8xf32>
    %188 = vector.shape_cast %187 : vector<16x8xf32> to vector<2x8x8xf32>
    "tpu.trace_start"() <{level = 10 : i32, message = "bqd,bkd->bqk"}> : () -> ()
    %cst_91 = arith.constant dense<0.000000e+00> : vector<2x8x8xf32>
    %189 = tpu.matmul %184, %186, %cst_91 {dimension_numbers = #tpu.dot_dimension_numbers<[2], [2], [1], [1], [0, 0, 0, 1, 1, 1], [0], [0]>} : vector<2x8x8xf32>, vector<2x8x8xf32>, vector<2x8x8xf32> -> vector<2x8x8xf32>
    "tpu.trace_stop"() : () -> ()
    %cst_92 = arith.constant dense<0xFF800000> : vector<2x8xf32>
    %190 = vector.multi_reduction <maximumf>, %189, %cst_92 [2] : vector<2x8x8xf32> to vector<2x8xf32>
    %191 = vector.shape_cast %190 : vector<2x8xf32> to vector<2x8x1xf32>
    %192 = vector.broadcast %191 : vector<2x8x1xf32> to vector<2x8x8xf32>
    %193 = arith.subf %189, %192 : vector<2x8x8xf32>
    %194 = math.exp %193 : vector<2x8x8xf32>
    %cst_93 = arith.constant dense<0.000000e+00> : vector<2x8xf32>
    %195 = vector.multi_reduction <add>, %194, %cst_93 [2] : vector<2x8x8xf32> to vector<2x8xf32>
    %196 = vector.shape_cast %195 : vector<2x8xf32> to vector<2x8x1xf32>
    %197 = tpu.reciprocal %196 : vector<2x8x1xf32> -> vector<2x8x1xf32>
    %198 = vector.broadcast %197 : vector<2x8x1xf32> to vector<2x8x8xf32>
    %199 = arith.mulf %194, %198 : vector<2x8x8xf32>
    %c1_94 = arith.constant 1 : index
    %c0_95 = arith.constant 0 : index
    %c0_96 = arith.constant 0 : index
    %c0_97 = arith.constant 0 : index
    %c0_98 = arith.constant 0 : index
    %200 = vector.load %arg14[%c1_94, %c0_95, %c0_96, %c0_97, %c0_98] : memref<2x4x2x8x8xf32, #tpu.memory_space<vmem>>, vector<1x1x2x8x8xf32>
    %201 = vector.shape_cast %200 : vector<1x1x2x8x8xf32> to vector<2x8x8xf32>
    %202 = vector.shape_cast %199 : vector<2x8x8xf32> to vector<1x1x2x8x8xf32>
    tpu.vector_store %arg14[%c1_94, %c0_95, %c0_96, %c0_97, %c0_98], %202 {strides = array<i32>} : memref<2x4x2x8x8xf32, #tpu.memory_space<vmem>>, vector<1x1x2x8x8xf32>,
    "tpu.trace_start"() <{level = 10 : i32, message = "bqk,bkd->bqd"}> : () -> ()
    %cst_99 = arith.constant dense<0.000000e+00> : vector<2x8x8xf32>
    %203 = tpu.matmul %199, %188, %cst_99 {dimension_numbers = #tpu.dot_dimension_numbers<[2], [1], [1], [2], [0, 0, 0, 1, 1, 2], [0], [0]>} : vector<2x8x8xf32>, vector<2x8x8xf32>, vector<2x8x8xf32> -> vector<2x8x8xf32>
    "tpu.trace_stop"() : () -> ()
    %204 = vector.shape_cast %203 : vector<2x8x8xf32> to vector<16x8xf32>
    %205 = vector.extract_strided_slice %180 {offsets = [0, 8], sizes = [16, 8], strides = [1, 1]} : vector<16x32xf32> to vector<16x8xf32>
    %206 = vector.shape_cast %205 : vector<16x8xf32> to vector<2x8x8xf32>
    %207 = vector.extract_strided_slice %181 {offsets = [0, 8], sizes = [16, 8], strides = [1, 1]} : vector<16x32xf32> to vector<16x8xf32>
    %208 = vector.shape_cast %207 : vector<16x8xf32> to vector<2x8x8xf32>
    %209 = vector.extract_strided_slice %182 {offsets = [0, 8], sizes = [16, 8], strides = [1, 1]} : vector<16x32xf32> to vector<16x8xf32>
    %210 = vector.shape_cast %209 : vector<16x8xf32> to vector<2x8x8xf32>
    "tpu.trace_start"() <{level = 10 : i32, message = "bqd,bkd->bqk"}> : () -> ()
    %cst_100 = arith.constant dense<0.000000e+00> : vector<2x8x8xf32>
    %211 = tpu.matmul %206, %208, %cst_100 {dimension_numbers = #tpu.dot_dimension_numbers<[2], [2], [1], [1], [0, 0, 0, 1, 1, 1], [0], [0]>} : vector<2x8x8xf32>, vector<2x8x8xf32>, vector<2x8x8xf32> -> vector<2x8x8xf32>
    "tpu.trace_stop"() : () -> ()
    %cst_101 = arith.constant dense<0xFF800000> : vector<2x8xf32>
    %212 = vector.multi_reduction <maximumf>, %211, %cst_101 [2] : vector<2x8x8xf32> to vector<2x8xf32>
    %213 = vector.shape_cast %212 : vector<2x8xf32> to vector<2x8x1xf32>
    %214 = vector.broadcast %213 : vector<2x8x1xf32> to vector<2x8x8xf32>
    %215 = arith.subf %211, %214 : vector<2x8x8xf32>
    %216 = math.exp %215 : vector<2x8x8xf32>
    %cst_102 = arith.constant dense<0.000000e+00> : vector<2x8xf32>
    %217 = vector.multi_reduction <add>, %216, %cst_102 [2] : vector<2x8x8xf32> to vector<2x8xf32>
    %218 = vector.shape_cast %217 : vector<2x8xf32> to vector<2x8x1xf32>
    %219 = tpu.reciprocal %218 : vector<2x8x1xf32> -> vector<2x8x1xf32>
    %220 = vector.broadcast %219 : vector<2x8x1xf32> to vector<2x8x8xf32>
    %221 = arith.mulf %216, %220 : vector<2x8x8xf32>
    %c1_103 = arith.constant 1 : index
    %c1_104 = arith.constant 1 : index
    %c0_105 = arith.constant 0 : index
    %c0_106 = arith.constant 0 : index
    %c0_107 = arith.constant 0 : index
    %222 = vector.load %arg14[%c1_103, %c1_104, %c0_105, %c0_106, %c0_107] : memref<2x4x2x8x8xf32, #tpu.memory_space<vmem>>, vector<1x1x2x8x8xf32>
    %223 = vector.shape_cast %222 : vector<1x1x2x8x8xf32> to vector<2x8x8xf32>
    %224 = vector.shape_cast %221 : vector<2x8x8xf32> to vector<1x1x2x8x8xf32>
    tpu.vector_store %arg14[%c1_103, %c1_104, %c0_105, %c0_106, %c0_107], %224 {strides = array<i32>} : memref<2x4x2x8x8xf32, #tpu.memory_space<vmem>>, vector<1x1x2x8x8xf32>,
    "tpu.trace_start"() <{level = 10 : i32, message = "bqk,bkd->bqd"}> : () -> ()
    %cst_108 = arith.constant dense<0.000000e+00> : vector<2x8x8xf32>
    %225 = tpu.matmul %221, %210, %cst_108 {dimension_numbers = #tpu.dot_dimension_numbers<[2], [1], [1], [2], [0, 0, 0, 1, 1, 2], [0], [0]>} : vector<2x8x8xf32>, vector<2x8x8xf32>, vector<2x8x8xf32> -> vector<2x8x8xf32>
    "tpu.trace_stop"() : () -> ()
    %226 = vector.shape_cast %225 : vector<2x8x8xf32> to vector<16x8xf32>
    %227 = vector.extract_strided_slice %180 {offsets = [0, 16], sizes = [16, 8], strides = [1, 1]} : vector<16x32xf32> to vector<16x8xf32>
    %228 = vector.shape_cast %227 : vector<16x8xf32> to vector<2x8x8xf32>
    %229 = vector.extract_strided_slice %181 {offsets = [0, 16], sizes = [16, 8], strides = [1, 1]} : vector<16x32xf32> to vector<16x8xf32>
    %230 = vector.shape_cast %229 : vector<16x8xf32> to vector<2x8x8xf32>
    %231 = vector.extract_strided_slice %182 {offsets = [0, 16], sizes = [16, 8], strides = [1, 1]} : vector<16x32xf32> to vector<16x8xf32>
    %232 = vector.shape_cast %231 : vector<16x8xf32> to vector<2x8x8xf32>
    "tpu.trace_start"() <{level = 10 : i32, message = "bqd,bkd->bqk"}> : () -> ()
    %cst_109 = arith.constant dense<0.000000e+00> : vector<2x8x8xf32>
    %233 = tpu.matmul %228, %230, %cst_109 {dimension_numbers = #tpu.dot_dimension_numbers<[2], [2], [1], [1], [0, 0, 0, 1, 1, 1], [0], [0]>} : vector<2x8x8xf32>, vector<2x8x8xf32>, vector<2x8x8xf32> -> vector<2x8x8xf32>
    "tpu.trace_stop"() : () -> ()
    %cst_110 = arith.constant dense<0xFF800000> : vector<2x8xf32>
    %234 = vector.multi_reduction <maximumf>, %233, %cst_110 [2] : vector<2x8x8xf32> to vector<2x8xf32>
    %235 = vector.shape_cast %234 : vector<2x8xf32> to vector<2x8x1xf32>
    %236 = vector.broadcast %235 : vector<2x8x1xf32> to vector<2x8x8xf32>
    %237 = arith.subf %233, %236 : vector<2x8x8xf32>
    %238 = math.exp %237 : vector<2x8x8xf32>
    %cst_111 = arith.constant dense<0.000000e+00> : vector<2x8xf32>
    %239 = vector.multi_reduction <add>, %238, %cst_111 [2] : vector<2x8x8xf32> to vector<2x8xf32>
    %240 = vector.shape_cast %239 : vector<2x8xf32> to vector<2x8x1xf32>
    %241 = tpu.reciprocal %240 : vector<2x8x1xf32> -> vector<2x8x1xf32>
    %242 = vector.broadcast %241 : vector<2x8x1xf32> to vector<2x8x8xf32>
    %243 = arith.mulf %238, %242 : vector<2x8x8xf32>
    %c1_112 = arith.constant 1 : index
    %c2_113 = arith.constant 2 : index
    %c0_114 = arith.constant 0 : index
    %c0_115 = arith.constant 0 : index
    %c0_116 = arith.constant 0 : index
    %244 = vector.load %arg14[%c1_112, %c2_113, %c0_114, %c0_115, %c0_116] : memref<2x4x2x8x8xf32, #tpu.memory_space<vmem>>, vector<1x1x2x8x8xf32>
    %245 = vector.shape_cast %244 : vector<1x1x2x8x8xf32> to vector<2x8x8xf32>
    %246 = vector.shape_cast %243 : vector<2x8x8xf32> to vector<1x1x2x8x8xf32>
    tpu.vector_store %arg14[%c1_112, %c2_113, %c0_114, %c0_115, %c0_116], %246 {strides = array<i32>} : memref<2x4x2x8x8xf32, #tpu.memory_space<vmem>>, vector<1x1x2x8x8xf32>,
    "tpu.trace_start"() <{level = 10 : i32, message = "bqk,bkd->bqd"}> : () -> ()
    %cst_117 = arith.constant dense<0.000000e+00> : vector<2x8x8xf32>
    %247 = tpu.matmul %243, %232, %cst_117 {dimension_numbers = #tpu.dot_dimension_numbers<[2], [1], [1], [2], [0, 0, 0, 1, 1, 2], [0], [0]>} : vector<2x8x8xf32>, vector<2x8x8xf32>, vector<2x8x8xf32> -> vector<2x8x8xf32>
    "tpu.trace_stop"() : () -> ()
    %248 = vector.shape_cast %247 : vector<2x8x8xf32> to vector<16x8xf32>
    %249 = vector.extract_strided_slice %180 {offsets = [0, 24], sizes = [16, 8], strides = [1, 1]} : vector<16x32xf32> to vector<16x8xf32>
    %250 = vector.shape_cast %249 : vector<16x8xf32> to vector<2x8x8xf32>
    %251 = vector.extract_strided_slice %181 {offsets = [0, 24], sizes = [16, 8], strides = [1, 1]} : vector<16x32xf32> to vector<16x8xf32>
    %252 = vector.shape_cast %251 : vector<16x8xf32> to vector<2x8x8xf32>
    %253 = vector.extract_strided_slice %182 {offsets = [0, 24], sizes = [16, 8], strides = [1, 1]} : vector<16x32xf32> to vector<16x8xf32>
    %254 = vector.shape_cast %253 : vector<16x8xf32> to vector<2x8x8xf32>
    "tpu.trace_start"() <{level = 10 : i32, message = "bqd,bkd->bqk"}> : () -> ()
    %cst_118 = arith.constant dense<0.000000e+00> : vector<2x8x8xf32>
    %255 = tpu.matmul %250, %252, %cst_118 {dimension_numbers = #tpu.dot_dimension_numbers<[2], [2], [1], [1], [0, 0, 0, 1, 1, 1], [0], [0]>} : vector<2x8x8xf32>, vector<2x8x8xf32>, vector<2x8x8xf32> -> vector<2x8x8xf32>
    "tpu.trace_stop"() : () -> ()
    %cst_119 = arith.constant dense<0xFF800000> : vector<2x8xf32>
    %256 = vector.multi_reduction <maximumf>, %255, %cst_119 [2] : vector<2x8x8xf32> to vector<2x8xf32>
    %257 = vector.shape_cast %256 : vector<2x8xf32> to vector<2x8x1xf32>
    %258 = vector.broadcast %257 : vector<2x8x1xf32> to vector<2x8x8xf32>
    %259 = arith.subf %255, %258 : vector<2x8x8xf32>
    %260 = math.exp %259 : vector<2x8x8xf32>
    %cst_120 = arith.constant dense<0.000000e+00> : vector<2x8xf32>
    %261 = vector.multi_reduction <add>, %260, %cst_120 [2] : vector<2x8x8xf32> to vector<2x8xf32>
    %262 = vector.shape_cast %261 : vector<2x8xf32> to vector<2x8x1xf32>
    %263 = tpu.reciprocal %262 : vector<2x8x1xf32> -> vector<2x8x1xf32>
    %264 = vector.broadcast %263 : vector<2x8x1xf32> to vector<2x8x8xf32>
    %265 = arith.mulf %260, %264 : vector<2x8x8xf32>
    %c1_121 = arith.constant 1 : index
    %c3_122 = arith.constant 3 : index
    %c0_123 = arith.constant 0 : index
    %c0_124 = arith.constant 0 : index
    %c0_125 = arith.constant 0 : index
    %266 = vector.load %arg14[%c1_121, %c3_122, %c0_123, %c0_124, %c0_125] : memref<2x4x2x8x8xf32, #tpu.memory_space<vmem>>, vector<1x1x2x8x8xf32>
    %267 = vector.shape_cast %266 : vector<1x1x2x8x8xf32> to vector<2x8x8xf32>
    %268 = vector.shape_cast %265 : vector<2x8x8xf32> to vector<1x1x2x8x8xf32>
    tpu.vector_store %arg14[%c1_121, %c3_122, %c0_123, %c0_124, %c0_125], %268 {strides = array<i32>} : memref<2x4x2x8x8xf32, #tpu.memory_space<vmem>>, vector<1x1x2x8x8xf32>,
    "tpu.trace_start"() <{level = 10 : i32, message = "bqk,bkd->bqd"}> : () -> ()
    %cst_126 = arith.constant dense<0.000000e+00> : vector<2x8x8xf32>
    %269 = tpu.matmul %265, %254, %cst_126 {dimension_numbers = #tpu.dot_dimension_numbers<[2], [1], [1], [2], [0, 0, 0, 1, 1, 2], [0], [0]>} : vector<2x8x8xf32>, vector<2x8x8xf32>, vector<2x8x8xf32> -> vector<2x8x8xf32>
    "tpu.trace_stop"() : () -> ()
    %270 = vector.shape_cast %269 : vector<2x8x8xf32> to vector<16x8xf32>
    %271 = tpu.concatenate %204, %226, %248, %270 in 1 : vector<16x8xf32>, vector<16x8xf32>, vector<16x8xf32>, vector<16x8xf32> -> vector<16x32xf32>
    %c1_127 = arith.constant 1 : index
    %c0_128 = arith.constant 0 : index
    %c0_129 = arith.constant 0 : index
    %272 = vector.load %arg3[%c1_127, %c0_128, %c0_129] : memref<2x32x32xf32, #tpu.memory_space<vmem>>, vector<1x32x32xf32>
    %273 = vector.shape_cast %272 : vector<1x32x32xf32> to vector<32x32xf32>
    %cst_130 = arith.constant dense<0.000000e+00> : vector<16x32xf32>
    %274 = tpu.matmul %271, %273, %cst_130 {dimension_numbers = #tpu.dot_dimension_numbers<[1], [0], [0], [1], [0, 0, 1, 1], [], []>} : vector<16x32xf32>, vector<32x32xf32>, vector<16x32xf32> -> vector<16x32xf32>
    %c1_131 = arith.constant 1 : index
    %c0_132 = arith.constant 0 : index
    %c0_133 = arith.constant 0 : index
    %275 = vector.load %arg4[%c1_131, %c0_132, %c0_133] : memref<2x1x32xf32, #tpu.memory_space<vmem>>, vector<1x1x32xf32>
    %276 = vector.shape_cast %275 : vector<1x1x32xf32> to vector<1x32xf32>
    %277 = vector.broadcast %276 : vector<1x32xf32> to vector<16x32xf32>
    %278 = arith.addf %274, %277 : vector<16x32xf32>
    %279 = arith.addf %172, %278 : vector<16x32xf32>
    %c1_134 = arith.constant 1 : index
    %c0_135 = arith.constant 0 : index
    %c0_136 = arith.constant 0 : index
    %280 = vector.load %arg5[%c1_134, %c0_135, %c0_136] : memref<2x1x32xf32, #tpu.memory_space<vmem>>, vector<1x1x32xf32>
    %281 = vector.shape_cast %280 : vector<1x1x32xf32> to vector<1x32xf32>
    %c1_137 = arith.constant 1 : index
    %c0_138 = arith.constant 0 : index
    %c0_139 = arith.constant 0 : index
    %282 = vector.load %arg6[%c1_137, %c0_138, %c0_139] : memref<2x1x32xf32, #tpu.memory_space<vmem>>, vector<1x1x32xf32>
    %283 = vector.shape_cast %282 : vector<1x1x32xf32> to vector<1x32xf32>
    %cst_140 = arith.constant dense<0.000000e+00> : vector<16xf32>
    %284 = vector.multi_reduction <add>, %279, %cst_140 [1] : vector<16x32xf32> to vector<16xf32>
    %285 = vector.shape_cast %284 : vector<16xf32> to vector<16x1xf32>
    %cst_141 = arith.constant 3.200000e+01 : f32
    %286 = vector.broadcast %cst_141 : f32 to vector<16x1xf32>
    %287 = arith.divf %285, %286 : vector<16x1xf32>
    %288 = vector.broadcast %287 : vector<16x1xf32> to vector<16x32xf32>
    %289 = arith.subf %279, %288 : vector<16x32xf32>
    %290 = arith.mulf %289, %289 : vector<16x32xf32>
    %cst_142 = arith.constant dense<0.000000e+00> : vector<16xf32>
    %291 = vector.multi_reduction <add>, %290, %cst_142 [1] : vector<16x32xf32> to vector<16xf32>
    %292 = vector.shape_cast %291 : vector<16xf32> to vector<16x1xf32>
    %cst_143 = arith.constant 3.200000e+01 : f32
    %293 = vector.broadcast %cst_143 : f32 to vector<16x1xf32>
    %294 = arith.divf %292, %293 : vector<16x1xf32>
    %cst_144 = arith.constant 9.99999974E-6 : f32
    %295 = vector.broadcast %cst_144 : f32 to vector<16x1xf32>
    %296 = arith.addf %294, %295 : vector<16x1xf32>
    %297 = math.rsqrt %296 : vector<16x1xf32>
    %298 = vector.broadcast %297 : vector<16x1xf32> to vector<16x32xf32>
    %299 = arith.mulf %289, %298 : vector<16x32xf32>
    %300 = vector.broadcast %281 : vector<1x32xf32> to vector<16x32xf32>
    %301 = arith.mulf %299, %300 : vector<16x32xf32>
    %302 = vector.broadcast %283 : vector<1x32xf32> to vector<16x32xf32>
    %303 = arith.addf %301, %302 : vector<16x32xf32>
    %c1_145 = arith.constant 1 : index
    %c0_146 = arith.constant 0 : index
    %c0_147 = arith.constant 0 : index
    %304 = vector.load %arg7[%c1_145, %c0_146, %c0_147] : memref<2x32x64xf32, #tpu.memory_space<vmem>>, vector<1x32x64xf32>
    %305 = vector.shape_cast %304 : vector<1x32x64xf32> to vector<32x64xf32>
    %cst_148 = arith.constant dense<0.000000e+00> : vector<16x64xf32>
    %306 = tpu.matmul %303, %305, %cst_148 {dimension_numbers = #tpu.dot_dimension_numbers<[1], [0], [0], [1], [0, 0, 1, 1], [], []>} : vector<16x32xf32>, vector<32x64xf32>, vector<16x64xf32> -> vector<16x64xf32>
    %c1_149 = arith.constant 1 : index
    %c0_150 = arith.constant 0 : index
    %c0_151 = arith.constant 0 : index
    %307 = vector.load %arg8[%c1_149, %c0_150, %c0_151] : memref<2x1x64xf32, #tpu.memory_space<vmem>>, vector<1x1x64xf32>
    %308 = vector.shape_cast %307 : vector<1x1x64xf32> to vector<1x64xf32>
    %309 = vector.broadcast %308 : vector<1x64xf32> to vector<16x64xf32>
    %310 = arith.addf %306, %309 : vector<16x64xf32>
    %cst_152 = arith.constant 0.000000e+00 : f32
    %311 = vector.broadcast %cst_152 : f32 to vector<16x64xf32>
    %312 = arith.maximumf %310, %311 : vector<16x64xf32>
    %c1_153 = arith.constant 1 : index
    %c0_154 = arith.constant 0 : index
    %c0_155 = arith.constant 0 : index
    %313 = vector.load %arg9[%c1_153, %c0_154, %c0_155] : memref<2x64x32xf32, #tpu.memory_space<vmem>>, vector<1x64x32xf32>
    %314 = vector.shape_cast %313 : vector<1x64x32xf32> to vector<64x32xf32>
    %cst_156 = arith.constant dense<0.000000e+00> : vector<16x32xf32>
    %315 = tpu.matmul %312, %314, %cst_156 {dimension_numbers = #tpu.dot_dimension_numbers<[1], [0], [0], [1], [0, 0, 1, 1], [], []>} : vector<16x64xf32>, vector<64x32xf32>, vector<16x32xf32> -> vector<16x32xf32>
    %c1_157 = arith.constant 1 : index
    %c0_158 = arith.constant 0 : index
    %c0_159 = arith.constant 0 : index
    %316 = vector.load %arg10[%c1_157, %c0_158, %c0_159] : memref<2x1x32xf32, #tpu.memory_space<vmem>>, vector<1x1x32xf32>
    %317 = vector.shape_cast %316 : vector<1x1x32xf32> to vector<1x32xf32>
    %318 = vector.broadcast %317 : vector<1x32xf32> to vector<16x32xf32>
    %319 = arith.addf %315, %318 : vector<16x32xf32>
    %320 = arith.addf %303, %319 : vector<16x32xf32>
    %c1_160 = arith.constant 1 : index
    %c0_161 = arith.constant 0 : index
    %c0_162 = arith.constant 0 : index
    %321 = vector.load %arg11[%c1_160, %c0_161, %c0_162] : memref<2x1x32xf32, #tpu.memory_space<vmem>>, vector<1x1x32xf32>
    %322 = vector.shape_cast %321 : vector<1x1x32xf32> to vector<1x32xf32>
    %c1_163 = arith.constant 1 : index
    %c0_164 = arith.constant 0 : index
    %c0_165 = arith.constant 0 : index
    %323 = vector.load %arg12[%c1_163, %c0_164, %c0_165] : memref<2x1x32xf32, #tpu.memory_space<vmem>>, vector<1x1x32xf32>
    %324 = vector.shape_cast %323 : vector<1x1x32xf32> to vector<1x32xf32>
    %cst_166 = arith.constant dense<0.000000e+00> : vector<16xf32>
    %325 = vector.multi_reduction <add>, %320, %cst_166 [1] : vector<16x32xf32> to vector<16xf32>
    %326 = vector.shape_cast %325 : vector<16xf32> to vector<16x1xf32>
    %cst_167 = arith.constant 3.200000e+01 : f32
    %327 = vector.broadcast %cst_167 : f32 to vector<16x1xf32>
    %328 = arith.divf %326, %327 : vector<16x1xf32>
    %329 = vector.broadcast %328 : vector<16x1xf32> to vector<16x32xf32>
    %330 = arith.subf %320, %329 : vector<16x32xf32>
    %331 = arith.mulf %330, %330 : vector<16x32xf32>
    %cst_168 = arith.constant dense<0.000000e+00> : vector<16xf32>
    %332 = vector.multi_reduction <add>, %331, %cst_168 [1] : vector<16x32xf32> to vector<16xf32>
    %333 = vector.shape_cast %332 : vector<16xf32> to vector<16x1xf32>
    %cst_169 = arith.constant 3.200000e+01 : f32
    %334 = vector.broadcast %cst_169 : f32 to vector<16x1xf32>
    %335 = arith.divf %333, %334 : vector<16x1xf32>
    %cst_170 = arith.constant 9.99999974E-6 : f32
    %336 = vector.broadcast %cst_170 : f32 to vector<16x1xf32>
    %337 = arith.addf %335, %336 : vector<16x1xf32>
    %338 = math.rsqrt %337 : vector<16x1xf32>
    %339 = vector.broadcast %338 : vector<16x1xf32> to vector<16x32xf32>
    %340 = arith.mulf %330, %339 : vector<16x32xf32>
    %341 = vector.broadcast %322 : vector<1x32xf32> to vector<16x32xf32>
    %342 = arith.mulf %340, %341 : vector<16x32xf32>
    %343 = vector.broadcast %324 : vector<1x32xf32> to vector<16x32xf32>
    %344 = arith.addf %342, %343 : vector<16x32xf32>
    %c0_171 = arith.constant 0 : index
    %c0_172 = arith.constant 0 : index
    %345 = vector.load %arg13[%c0_171, %c0_172] : memref<16x32xf32, #tpu.memory_space<vmem>>, vector<16x32xf32>
    tpu.vector_store %arg13[%c0_171, %c0_172], %344 {strides = array<i32>} : memref<16x32xf32, #tpu.memory_space<vmem>>, vector<16x32xf32>,
    return
  }
}

</mosaic_0001>

<llo_original>
// kernel: _lambda_.1
$region0: #{_lambda_.1}
  #allocation0 [shape = 'u32[]', space=smem, size = 0x4, offset = 0x4, fixed_abs, tag = 'smem constant byte address 0x4 - core index']
  #allocation1 [shape = 'u32[144,128]{1,0:T(1,128)}', space=vmem, size = 0x12000, scoped, tag = 'internal scratch']
  %s0 = inlined_call_operand.hbm [shape: f32[16,32], index: 0, kind: input, shape index: {}]
  %s1 = inlined_call_operand.hbm [shape: f32[2,32,96], index: 1, kind: input, shape index: {}]
  %s2 = inlined_call_operand.vmem [shape: f32[2,1,96], index: 2, kind: input, shape index: {}]
  %s3 = inlined_call_operand.hbm [shape: f32[2,32,32], index: 3, kind: input, shape index: {}]
  %s4 = inlined_call_operand.vmem [shape: f32[2,1,32], index: 4, kind: input, shape index: {}]
  %s5 = inlined_call_operand.vmem [shape: f32[2,1,32], index: 5, kind: input, shape index: {}, may-alias: {5,11}]
  %s6 = inlined_call_operand.vmem [shape: f32[2,1,32], index: 6, kind: input, shape index: {}, may-alias: {6,12}]
  %s7 = inlined_call_operand.hbm [shape: f32[2,32,64], index: 7, kind: input, shape index: {}]
  %s8 = inlined_call_operand.vmem [shape: f32[2,1,64], index: 8, kind: input, shape index: {}]
  %s9 = inlined_call_operand.hbm [shape: f32[2,64,32], index: 9, kind: input, shape index: {}]
  %s10 = inlined_call_operand.vmem [shape: f32[2,1,32], index: 10, kind: input, shape index: {}]
  %s11 = inlined_call_operand.vmem [shape: f32[2,1,32], index: 11, kind: input, shape index: {}, may-alias: {5,11}]
  %s12 = inlined_call_operand.vmem [shape: f32[2,1,32], index: 12, kind: input, shape index: {}, may-alias: {6,12}]
  %s13 = inlined_call_operand.hbm [shape: f32[16,32], index: 13, kind: output, shape index: {0}]
  %s14 = inlined_call_operand.vmem [shape: f32[2,4,2,8,8], index: 14, kind: output, shape index: {1}]
  %15 = xla_tuple %s13, %s14
  %s16 = sld [smem:[#allocation0]]
  $region90: #{_lambda_.1} parent=0
    _
  %s18 = ssub.s32 1, %s16
  %s19 = scalar_select 0, %s18, %s16
  $region1: #{_lambda_.1} parent=0
    #allocation2 [shape = 'u8[8192]{0}', space=vmem, size = 0x2000, scoped, tag = 'input window, operand 0, single buffered']
    #allocation3 [shape = 's32[1]{0}', space=sflag, size = 0x4, scoped, tag = 'scoped memory for _lambda_.1']
    #allocation4 [shape = 's32[1]{0}', space=sflag, size = 0x4, scoped, tag = 'scoped memory for _lambda_.1']
    #allocation5 [shape = 'u8[32768]{0}', space=vmem, size = 0x8000, scoped, tag = 'input window, operand 1, single buffered']
    #allocation6 [shape = 's32[1]{0}', space=sflag, size = 0x4, scoped, tag = 'scoped memory for _lambda_.1']
    #allocation7 [shape = 'u8[32768]{0}', space=vmem, size = 0x8000, scoped, tag = 'input window, operand 3, single buffered']
    #allocation8 [shape = 'u8[32768]{0}', space=vmem, size = 0x8000, scoped, tag = 'input window, operand 7, single buffered']
    #allocation9 [shape = 's32[1]{0}', space=sflag, size = 0x4, scoped, tag = 'scoped memory for _lambda_.1']
    #allocation10 [shape = 'u8[65536]{0}', space=vmem, size = 0x10000, scoped, tag = 'input window, operand 9, single buffered']
    #allocation11 [shape = 'u8[8192]{0}', space=vmem, size = 0x2000, scoped, tag = 'output window, operand 0, single buffered']
    %20 = vsyncpa [#allocation3], 0
    %21 = vsyncpa [#allocation6], 0
    %22 = vsyncpa [#allocation9], 0
    %23 = vsyncpa [#allocation4], 0
    // Predicated region
    $region2: #{_lambda_.1} parent=1 // pred_check
      _
    $region3: #{_lambda_.1} parent=1 // pred_check_branch
      %25 = sbr.rel (0) target = $region5
    $region4: #{_lambda_.1} parent=1 // pred_region
      %s27 = ssub.s32 256, 256
      %28 = vsyncadd [#allocation3], %s27
      %s29 = sshll.u32 [#allocation2], 4
      %s30 = int_to_ptr.vmem [resolvable:$true] %s29
      %35 = dma.hbm_to_vmem [thread:$0]  %s0, 256, %s30, [#allocation3], 128, 128, 8
    $region5: #{_lambda_.1} parent=1 // pred_fallthru
      _
    // Predicated region
    $region6: #{_lambda_.1} parent=1 // pred_check
      _
    $region7: #{_lambda_.1} parent=1 // pred_check_branch
      %37 = sbr.rel (0) target = $region9
    $region8: #{_lambda_.1} parent=1 // pred_region
      %s39 = ssub.s32 1024, 1024
      %40 = vsyncadd [#allocation6], %s39
      %s41 = sshll.u32 [#allocation5], 4
      %s42 = int_to_ptr.vmem [resolvable:$true] %s41
      %47 = dma.hbm_to_vmem [thread:$0]  %s1, 1024, %s42, [#allocation6], 128, 128, 8
    $region9: #{_lambda_.1} parent=1 // pred_fallthru
      _
    // Predicated region
    $region10: #{_lambda_.1} parent=1 // pred_check
      _
    $region11: #{_lambda_.1} parent=1 // pred_check_branch
      %49 = sbr.rel (0) target = $region13
    $region12: #{_lambda_.1} parent=1 // pred_region
      _
    $region13: #{_lambda_.1} parent=1 // pred_fallthru
      _
    // Predicated region
    $region14: #{_lambda_.1} parent=1 // pred_check
      _
    $region15: #{_lambda_.1} parent=1 // pred_check_branch
      %51 = sbr.rel (0) target = $region17
    $region16: #{_lambda_.1} parent=1 // pred_region
      %s53 = ssub.s32 1024, 1024
      %54 = vsyncadd [#allocation6], %s53
      %s55 = sshll.u32 [#allocation7], 4
      %s56 = int_to_ptr.vmem [resolvable:$true] %s55
      %61 = dma.hbm_to_vmem [thread:$0]  %s3, 1024, %s56, [#allocation6], 128, 128, 8
    $region17: #{_lambda_.1} parent=1 // pred_fallthru
      _
    // Predicated region
    $region18: #{_lambda_.1} parent=1 // pred_check
      _
    $region19: #{_lambda_.1} parent=1 // pred_check_branch
      %63 = sbr.rel (0) target = $region21
    $region20: #{_lambda_.1} parent=1 // pred_region
      _
    $region21: #{_lambda_.1} parent=1 // pred_fallthru
      _
    // Predicated region
    $region22: #{_lambda_.1} parent=1 // pred_check
      _
    $region23: #{_lambda_.1} parent=1 // pred_check_branch
      %65 = sbr.rel (0) target = $region25
    $region24: #{_lambda_.1} parent=1 // pred_region
      _
    $region25: #{_lambda_.1} parent=1 // pred_fallthru
      _
    // Predicated region
    $region26: #{_lambda_.1} parent=1 // pred_check
      _
    $region27: #{_lambda_.1} parent=1 // pred_check_branch
      %67 = sbr.rel (0) target = $region29
    $region28: #{_lambda_.1} parent=1 // pred_region
      _
    $region29: #{_lambda_.1} parent=1 // pred_fallthru
      _
    // Predicated region
    $region30: #{_lambda_.1} parent=1 // pred_check
      _
    $region31: #{_lambda_.1} parent=1 // pred_check_branch
      %69 = sbr.rel (0) target = $region33
    $region32: #{_lambda_.1} parent=1 // pred_region
      %s71 = ssub.s32 1024, 1024
      %72 = vsyncadd [#allocation9], %s71
      %s73 = sshll.u32 [#allocation8], 4
      %s74 = int_to_ptr.vmem [resolvable:$true] %s73
      %79 = dma.hbm_to_vmem [thread:$0]  %s7, 1024, %s74, [#allocation9], 128, 128, 8
    $region33: #{_lambda_.1} parent=1 // pred_fallthru
      _
    // Predicated region
    $region34: #{_lambda_.1} parent=1 // pred_check
      _
    $region35: #{_lambda_.1} parent=1 // pred_check_branch
      %81 = sbr.rel (0) target = $region37
    $region36: #{_lambda_.1} parent=1 // pred_region
      _
    $region37: #{_lambda_.1} parent=1 // pred_fallthru
      _
    // Predicated region
    $region38: #{_lambda_.1} parent=1 // pred_check
      _
    $region39: #{_lambda_.1} parent=1 // pred_check_branch
      %83 = sbr.rel (0) target = $region41
    $region40: #{_lambda_.1} parent=1 // pred_region
      %s85 = ssub.s32 2048, 2048
      %86 = vsyncadd [#allocation9], %s85
      %s87 = sshll.u32 [#allocation10], 4
      %s88 = int_to_ptr.vmem [resolvable:$true] %s87
      %93 = dma.hbm_to_vmem [thread:$0]  %s9, 2048, %s88, [#allocation9], 128, 128, 8
    $region41: #{_lambda_.1} parent=1 // pred_fallthru
      _
    // Predicated region
    $region42: #{_lambda_.1} parent=1 // pred_check
      _
    $region43: #{_lambda_.1} parent=1 // pred_check_branch
      %95 = sbr.rel (0) target = $region45
    $region44: #{_lambda_.1} parent=1 // pred_region
      _
    $region45: #{_lambda_.1} parent=1 // pred_fallthru
      _
    // Predicated region
    $region46: #{_lambda_.1} parent=1 // pred_check
      _
    $region47: #{_lambda_.1} parent=1 // pred_check_branch
      %97 = sbr.rel (0) target = $region49
    $region48: #{_lambda_.1} parent=1 // pred_region
      _
    $region49: #{_lambda_.1} parent=1 // pred_fallthru
      _
    // Predicated region
    $region50: #{_lambda_.1} parent=1 // pred_check
      _
    $region51: #{_lambda_.1} parent=1 // pred_check_branch
      %99 = sbr.rel (0) target = $region53
    $region52: #{_lambda_.1} parent=1 // pred_region
      _
    $region53: #{_lambda_.1} parent=1 // pred_fallthru
      _
    // Predicated region
    $region54: #{_lambda_.1} parent=1 // pred_check
      _
    $region55: #{_lambda_.1} parent=1 // pred_check_branch
      %101 = sbr.rel (0) target = $region57
    $region56: #{_lambda_.1} parent=1 // pred_region
      %102 = dma.done [#allocation3], 256
    $region57: #{_lambda_.1} parent=1 // pred_fallthru
      _
    // Predicated region
    $region58: #{_lambda_.1} parent=1 // pred_check
      _
    $region59: #{_lambda_.1} parent=1 // pred_check_branch
      %104 = sbr.rel (0) target = $region61
    $region60: #{_lambda_.1} parent=1 // pred_region
      %105 = dma.done [#allocation6], 1024
    $region61: #{_lambda_.1} parent=1 // pred_fallthru
      _
    // Predicated region
    $region62: #{_lambda_.1} parent=1 // pred_check
      _
    $region63: #{_lambda_.1} parent=1 // pred_check_branch
      %107 = sbr.rel (0) target = $region65
    $region64: #{_lambda_.1} parent=1 // pred_region
      %108 = dma.done [#allocation6], 1024
    $region65: #{_lambda_.1} parent=1 // pred_fallthru
      _
    // Predicated region
    $region66: #{_lambda_.1} parent=1 // pred_check
      _
    $region67: #{_lambda_.1} parent=1 // pred_check_branch
      %110 = sbr.rel (0) target = $region69
    $region68: #{_lambda_.1} parent=1 // pred_region
      %111 = dma.done [#allocation9], 1024
    $region69: #{_lambda_.1} parent=1 // pred_fallthru
      _
    // Predicated region
    $region70: #{_lambda_.1} parent=1 // pred_check
      _
    $region71: #{_lambda_.1} parent=1 // pred_check_branch
      %113 = sbr.rel (0) target = $region73
    $region72: #{_lambda_.1} parent=1 // pred_region
      %114 = dma.done [#allocation9], 2048
    $region73: #{_lambda_.1} parent=1 // pred_fallthru
      _
    %v115 = vld [vmem:[#allocation2] sm:$0xff]
    %v116 = vld [vmem:[#allocation2 + $0x8] sm:$0xff]
    %v117 = vld [vmem:[#allocation5] sm:$0xff]
    %v118 = vld [vmem:[#allocation5 + $0x8] sm:$0xff]
    %v119 = vld [vmem:[#allocation5 + $0x10] sm:$0xff]
    %v120 = vld [vmem:[#allocation5 + $0x18] sm:$0xff]
    %v121 = vld [vmem:[%s2] sm:$0x1]
    %v123 = vlaneseq
    %v124 = vshrl.u32 %v123, 7
    %v125 = vsub.s32 0, %v124
    %v126 = vrot.slane %v121, %v125
    %vm128 = vcmask 261120
    %v130 = vsel %vm128, %v115, 0
    %v133 = vsel %vm128, %v116, 0
    %135 = vmatprep.subr.mxu0 0.0
    %136 = vmatpush1.msra.mxu0 %v117
    %137 = vmatprep.subr.mxu0 0.0
    %138 = vmatpush1.msra.mxu0 %v118
    %139 = vmatprep.subr.mxu0 0.0
    %140 = vmatpush1.msra.mxu0 %v119
    %141 = vmatprep.subr.mxu0 0.0
    %142 = vmatpush1.msra.mxu0 %v120
    %143 = vmatprep.subr.mxu0 0.0
    %144 = vmatpush1.msra.mxu0 0.0
    %145 = vmatprep.subr.mxu0 0.0
    %146 = vmatpush1.msra.mxu0 0.0
    %147 = vmatprep.subr.mxu0 0.0
    %148 = vmatpush1.msra.mxu0 0.0
    %149 = vmatprep.subr.mxu0 0.0
    %150 = vmatpush1.msra.mxu0 0.0
    %151 = vmatprep.subr.mxu0 0.0
    %152 = vmatpush1.msra.mxu0 0.0
    %153 = vmatprep.subr.mxu0 0.0
    %154 = vmatpush1.msra.mxu0 0.0
    %155 = vmatprep.subr.mxu0 0.0
    %156 = vmatpush1.msra.mxu0 0.0
    %157 = vmatprep.subr.mxu0 0.0
    %158 = vmatpush1.msra.mxu0 0.0
    %159 = vmatprep.subr.mxu0 0.0
    %160 = vmatpush1.msra.mxu0 0.0
    %161 = vmatprep.subr.mxu0 0.0
    %162 = vmatpush1.msra.mxu0 0.0
    %163 = vmatprep.subr.mxu0 0.0
    %164 = vmatpush1.msra.mxu0 0.0
    %165 = vmatprep.subr.mxu0 0.0
    %166 = vmatpush1.msra.mxu0 0.0
    %167 = vmatprep.subr.mxu0 0.0
    %168 = vmatpush1.msra.mxu0 0.0
    %169 = vmatprep.subr.mxu0 0.0
    %170 = vmatpush1.msra.mxu0 0.0
    %171 = vmatprep.subr.mxu0 0.0
    %172 = vmatpush1.msra.mxu0 0.0
    %173 = vmatprep.subr.mxu0 0.0
    %174 = vmatpush1.msra.mxu0 0.0
    %175 = vmatprep.subr.mxu0 0.0
    %176 = vmatpush1.msra.mxu0 0.0
    %177 = vmatprep.subr.mxu0 0.0
    %178 = vmatpush1.msra.mxu0 0.0
    %179 = vmatprep.subr.mxu0 0.0
    %180 = vmatpush1.msra.mxu0 0.0
    %181 = vmatprep.subr.mxu0 0.0
    %182 = vmatpush1.msra.mxu0 0.0
    %183 = vmatprep.subr.mxu0 0.0
    %184 = vmatpush1.msra.mxu0 0.0
    %185 = vmatprep.subr.mxu0 0.0
    %186 = vmatpush1.msra.mxu0 0.0
    %187 = vmatprep.subr.mxu0 0.0
    %188 = vmatpush1.msra.mxu0 0.0
    %189 = vmatprep.subr.mxu0 0.0
    %190 = vmatpush1.msra.mxu0 0.0
    %191 = vmatprep.subr.mxu0 0.0
    %192 = vmatpush1.msra.mxu0 0.0
    %193 = vmatprep.subr.mxu0 0.0
    %194 = vmatpush1.msra.mxu0 0.0
    %195 = vmatprep.subr.mxu0 0.0
    %196 = vmatpush1.msra.mxu0 0.0
    %197 = vmatprep.subr.mxu0 0.0
    %198 = vmatpush1.msra.mxu0 0.0
    %199 = vmatprep.mubr.f32.mxu0 0.0
    %200 = vmatmul.mubr.f32.gmra.mrb[0].mxu0 %v130
    %v201 = vpop.f32.mrb[0].mxu0
    %v202 = vadd.f32 %v126, %v201
    %v203 = vpop.f32.mrb[0].mxu0
    %204 = vmatprep.mubr.f32.mxu0 0.0
    %205 = vmatmul.mubr.f32.gmra.mrb[0].mxu0 %v133
    %v206 = vpop.f32.mrb[0].mxu0
    %v207 = vadd.f32 %v126, %v206
    %v208 = vpop.f32.mrb[0].mxu0
    %209 = vdwg.mxu0
    %211 = vrot.lane.b32.xlu0 %v202, 96
    %v212 = vpop.permute.xlu0 %211
    %vm213 = vcmask 64512
    %v214 = vsel %vm213, %v202, 0
    %v216 = vsel %vm213, %v212, 0
    %218 = vmatprep.subr.mxu0 0.0
    %219 = vmatpush1.xpose.msra.mxu0 %v216
    %220 = vmatprep.subr.mxu0 0.0
    %221 = vmatpush1.xpose.msra.mxu0 0.0
    %222 = vmatprep.subr.mxu0 0.0
    %223 = vmatpush1.xpose.msra.mxu0 0.0
    %224 = vmatprep.subr.mxu0 0.0
    %225 = vmatpush1.xpose.msra.mxu0 0.0
    %226 = vmatprep.subr.mxu0 0.0
    %227 = vmatpush1.xpose.msra.mxu0 0.0
    %228 = vmatprep.subr.mxu0 0.0
    %229 = vmatpush1.xpose.msra.mxu0 0.0
    %230 = vmatprep.subr.mxu0 0.0
    %231 = vmatpush1.xpose.msra.mxu0 0.0
    %232 = vmatprep.subr.mxu0 0.0
    %233 = vmatpush1.xpose.msra.mxu0 0.0
    %234 = vmatprep.subr.mxu0 0.0
    %235 = vmatpush1.xpose.msra.mxu0 0.0
    %236 = vmatprep.subr.mxu0 0.0
    %237 = vmatpush1.xpose.msra.mxu0 0.0
    %238 = vmatprep.subr.mxu0 0.0
    %239 = vmatpush1.xpose.msra.mxu0 0.0
    %240 = vmatprep.subr.mxu0 0.0
    %241 = vmatpush1.xpose.msra.mxu0 0.0
    %242 = vmatprep.subr.mxu0 0.0
    %243 = vmatpush1.xpose.msra.mxu0 0.0
    %244 = vmatprep.subr.mxu0 0.0
    %245 = vmatpush1.xpose.msra.mxu0 0.0
    %246 = vmatprep.subr.mxu0 0.0
    %247 = vmatpush1.xpose.msra.mxu0 0.0
    %248 = vmatprep.subr.mxu0 0.0
    %249 = vmatpush1.xpose.msra.mxu0 0.0
    %250 = vmatprep.subr.mxu0 0.0
    %251 = vmatpush1.xpose.msra.mxu0 0.0
    %252 = vmatprep.subr.mxu0 0.0
    %253 = vmatpush1.xpose.msra.mxu0 0.0
    %254 = vmatprep.subr.mxu0 0.0
    %255 = vmatpush1.xpose.msra.mxu0 0.0
    %256 = vmatprep.subr.mxu0 0.0
    %257 = vmatpush1.xpose.msra.mxu0 0.0
    %258 = vmatprep.subr.mxu0 0.0
    %259 = vmatpush1.xpose.msra.mxu0 0.0
    %260 = vmatprep.subr.mxu0 0.0
    %261 = vmatpush1.xpose.msra.mxu0 0.0
    %262 = vmatprep.subr.mxu0 0.0
    %263 = vmatpush1.xpose.msra.mxu0 0.0
    %264 = vmatprep.subr.mxu0 0.0
    %265 = vmatpush1.xpose.msra.mxu0 0.0
    %266 = vmatprep.subr.mxu0 0.0
    %267 = vmatpush1.xpose.msra.mxu0 0.0
    %268 = vmatprep.subr.mxu0 0.0
    %269 = vmatpush1.xpose.msra.mxu0 0.0
    %270 = vmatprep.subr.mxu0 0.0
    %271 = vmatpush1.xpose.msra.mxu0 0.0
    %272 = vmatprep.subr.mxu0 0.0
    %273 = vmatpush1.xpose.msra.mxu0 0.0
    %274 = vmatprep.subr.mxu0 0.0
    %275 = vmatpush1.xpose.msra.mxu0 0.0
    %276 = vmatprep.subr.mxu0 0.0
    %277 = vmatpush1.xpose.msra.mxu0 0.0
    %278 = vmatprep.subr.mxu0 0.0
    %279 = vmatpush1.xpose.msra.mxu0 0.0
    %280 = vmatprep.subr.mxu0 0.0
    %281 = vmatpush1.xpose.msra.mxu0 0.0
    %282 = vmatprep.mubr.f32.mxu0 0.0
    %283 = vmatmul.mubr.f32.gmra.mrb[0].mxu0 %v214
    %v284 = vpop.f32.mrb[0].mxu0
    %v285 = vadd.f32 0.0, %v284
    %v286 = vpop.f32.mrb[0].mxu0
    %287 = vdwg.mxu0
    %289 = vrot.lane.b32.xlu0 %v207, 96
    %v290 = vpop.permute.xlu0 %289
    %v291 = vsel %vm213, %v207, 0
    %v293 = vsel %vm213, %v290, 0
    %295 = vmatprep.subr.mxu0 0.0
    %296 = vmatpush1.xpose.msra.mxu0 %v293
    %297 = vmatprep.subr.mxu0 0.0
    %298 = vmatpush1.xpose.msra.mxu0 0.0
    %299 = vmatprep.subr.mxu0 0.0
    %300 = vmatpush1.xpose.msra.mxu0 0.0
    %301 = vmatprep.subr.mxu0 0.0
    %302 = vmatpush1.xpose.msra.mxu0 0.0
    %303 = vmatprep.subr.mxu0 0.0
    %304 = vmatpush1.xpose.msra.mxu0 0.0
    %305 = vmatprep.subr.mxu0 0.0
    %306 = vmatpush1.xpose.msra.mxu0 0.0
    %307 = vmatprep.subr.mxu0 0.0
    %308 = vmatpush1.xpose.msra.mxu0 0.0
    %309 = vmatprep.subr.mxu0 0.0
    %310 = vmatpush1.xpose.msra.mxu0 0.0
    %311 = vmatprep.subr.mxu0 0.0
    %312 = vmatpush1.xpose.msra.mxu0 0.0
    %313 = vmatprep.subr.mxu0 0.0
    %314 = vmatpush1.xpose.msra.mxu0 0.0
    %315 = vmatprep.subr.mxu0 0.0
    %316 = vmatpush1.xpose.msra.mxu0 0.0
    %317 = vmatprep.subr.mxu0 0.0
    %318 = vmatpush1.xpose.msra.mxu0 0.0
    %319 = vmatprep.subr.mxu0 0.0
    %320 = vmatpush1.xpose.msra.mxu0 0.0
    %321 = vmatprep.subr.mxu0 0.0
    %322 = vmatpush1.xpose.msra.mxu0 0.0
    %323 = vmatprep.subr.mxu0 0.0
    %324 = vmatpush1.xpose.msra.mxu0 0.0
    %325 = vmatprep.subr.mxu0 0.0
    %326 = vmatpush1.xpose.msra.mxu0 0.0
    %327 = vmatprep.subr.mxu0 0.0
    %328 = vmatpush1.xpose.msra.mxu0 0.0
    %329 = vmatprep.subr.mxu0 0.0
    %330 = vmatpush1.xpose.msra.mxu0 0.0
    %331 = vmatprep.subr.mxu0 0.0
    %332 = vmatpush1.xpose.msra.mxu0 0.0
    %333 = vmatprep.subr.mxu0 0.0
    %334 = vmatpush1.xpose.msra.mxu0 0.0
    %335 = vmatprep.subr.mxu0 0.0
    %336 = vmatpush1.xpose.msra.mxu0 0.0
    %337 = vmatprep.subr.mxu0 0.0
    %338 = vmatpush1.xpose.msra.mxu0 0.0
    %339 = vmatprep.subr.mxu0 0.0
    %340 = vmatpush1.xpose.msra.mxu0 0.0
    %341 = vmatprep.subr.mxu0 0.0
    %342 = vmatpush1.xpose.msra.mxu0 0.0
    %343 = vmatprep.subr.mxu0 0.0
    %344 = vmatpush1.xpose.msra.mxu0 0.0
    %345 = vmatprep.subr.mxu0 0.0
    %346 = vmatpush1.xpose.msra.mxu0 0.0
    %347 = vmatprep.subr.mxu0 0.0
    %348 = vmatpush1.xpose.msra.mxu0 0.0
    %349 = vmatprep.subr.mxu0 0.0
    %350 = vmatpush1.xpose.msra.mxu0 0.0
    %351 = vmatprep.subr.mxu0 0.0
    %352 = vmatpush1.xpose.msra.mxu0 0.0
    %353 = vmatprep.subr.mxu0 0.0
    %354 = vmatpush1.xpose.msra.mxu0 0.0
    %355 = vmatprep.subr.mxu0 0.0
    %356 = vmatpush1.xpose.msra.mxu0 0.0
    %357 = vmatprep.subr.mxu0 0.0
    %358 = vmatpush1.xpose.msra.mxu0 0.0
    %359 = vmatprep.mubr.f32.mxu0 0.0
    %360 = vmatmul.mubr.f32.gmra.mrb[0].mxu0 %v291
    %v361 = vpop.f32.mrb[0].mxu0
    %v362 = vadd.f32 0.0, %v361
    %v363 = vpop.f32.mrb[0].mxu0
    %364 = vdwg.mxu0
    %v365 = vsel %vm213, %v285, -inf
    %366 = vmax.xlane.f32.xlu0 %v365
    %v367 = vpop.xlane.xlu0 %366
    %v368 = vsel %vm213, %v362, -inf
    %369 = vmax.xlane.f32.xlu0 %v368
    %v370 = vpop.xlane.xlu0 %369
    %v371 = vsub.f32 %v285, %v367
    %v372 = vsub.f32 %v362, %v370
    %v373 = vmul.f32 %v371, 1.442695
    %v374 = vpow.pop %v373
    %v375 = vmul.f32 %v372, 1.442695
    %v376 = vpow.pop %v375
    %v377 = vsel %vm213, %v374, 0.0
    %378 = vadd.xlane.f32.xlu0 %v377
    %v379 = vpop.xlane.xlu0 %378
    %v380 = vsel %vm213, %v376, 0.0
    %381 = vadd.xlane.f32.xlu0 %v380
    %v382 = vpop.xlane.xlu0 %381
    %v383 = vrcp.pop %v379
    %v384 = vrcp.pop %v382
    %v385 = vmul.f32 %v374, %v383
    %v386 = vmul.f32 %v376, %v384
    %387 = vst.msk [vmem:[%s14] sm:$0xff] %vm213, %v385
    %388 = vst.msk [vmem:[%s14 + $0x8] sm:$0xff] %vm213, %v386
    %389 = vrot.lane.b32.xlu0 %v202, 64
    %v390 = vpop.permute.xlu0 %389
    %v393 = vsel %vm213, %v385, 0
    %395 = vmatprep.subr.mxu0 0.0
    %396 = vmatpush1.msra.mxu0 %v390
    %397 = vmatprep.subr.mxu0 0.0
    %398 = vmatpush1.msra.mxu0 0.0
    %399 = vmatprep.subr.mxu0 0.0
    %400 = vmatpush1.msra.mxu0 0.0
    %401 = vmatprep.subr.mxu0 0.0
    %402 = vmatpush1.msra.mxu0 0.0
    %403 = vmatprep.subr.mxu0 0.0
    %404 = vmatpush1.msra.mxu0 0.0
    %405 = vmatprep.subr.mxu0 0.0
    %406 = vmatpush1.msra.mxu0 0.0
    %407 = vmatprep.subr.mxu0 0.0
    %408 = vmatpush1.msra.mxu0 0.0
    %409 = vmatprep.subr.mxu0 0.0
    %410 = vmatpush1.msra.mxu0 0.0
    %411 = vmatprep.subr.mxu0 0.0
    %412 = vmatpush1.msra.mxu0 0.0
    %413 = vmatprep.subr.mxu0 0.0
    %414 = vmatpush1.msra.mxu0 0.0
    %415 = vmatprep.subr.mxu0 0.0
    %416 = vmatpush1.msra.mxu0 0.0
    %417 = vmatprep.subr.mxu0 0.0
    %418 = vmatpush1.msra.mxu0 0.0
    %419 = vmatprep.subr.mxu0 0.0
    %420 = vmatpush1.msra.mxu0 0.0
    %421 = vmatprep.subr.mxu0 0.0
    %422 = vmatpush1.msra.mxu0 0.0
    %423 = vmatprep.subr.mxu0 0.0
    %424 = vmatpush1.msra.mxu0 0.0
    %425 = vmatprep.subr.mxu0 0.0
    %426 = vmatpush1.msra.mxu0 0.0
    %427 = vmatprep.subr.mxu0 0.0
    %428 = vmatpush1.msra.mxu0 0.0
    %429 = vmatprep.subr.mxu0 0.0
    %430 = vmatpush1.msra.mxu0 0.0
    %431 = vmatprep.subr.mxu0 0.0
    %432 = vmatpush1.msra.mxu0 0.0
    %433 = vmatprep.subr.mxu0 0.0
    %434 = vmatpush1.msra.mxu0 0.0
    %435 = vmatprep.subr.mxu0 0.0
    %436 = vmatpush1.msra.mxu0 0.0
    %437 = vmatprep.subr.mxu0 0.0
    %438 = vmatpush1.msra.mxu0 0.0
    %439 = vmatprep.subr.mxu0 0.0
    %440 = vmatpush1.msra.mxu0 0.0
    %441 = vmatprep.subr.mxu0 0.0
    %442 = vmatpush1.msra.mxu0 0.0
    %443 = vmatprep.subr.mxu0 0.0
    %444 = vmatpush1.msra.mxu0 0.0
    %445 = vmatprep.subr.mxu0 0.0
    %446 = vmatpush1.msra.mxu0 0.0
    %447 = vmatprep.subr.mxu0 0.0
    %448 = vmatpush1.msra.mxu0 0.0
    %449 = vmatprep.subr.mxu0 0.0
    %450 = vmatpush1.msra.mxu0 0.0
    %451 = vmatprep.subr.mxu0 0.0
    %452 = vmatpush1.msra.mxu0 0.0
    %453 = vmatprep.subr.mxu0 0.0
    %454 = vmatpush1.msra.mxu0 0.0
    %455 = vmatprep.subr.mxu0 0.0
    %456 = vmatpush1.msra.mxu0 0.0
    %457 = vmatprep.subr.mxu0 0.0
    %458 = vmatpush1.msra.mxu0 0.0
    %459 = vmatprep.mubr.f32.mxu0 0.0
    %460 = vmatmul.mubr.f32.gmra.mrb[0].mxu0 %v393
    %v461 = vpop.f32.mrb[0].mxu0
    %v462 = vadd.f32 0.0, %v461
    %v463 = vpop.f32.mrb[0].mxu0
    %464 = vdwg.mxu0
    %465 = vrot.lane.b32.xlu0 %v207, 64
    %v466 = vpop.permute.xlu0 %465
    %v469 = vsel %vm213, %v386, 0
    %471 = vmatprep.subr.mxu0 0.0
    %472 = vmatpush1.msra.mxu0 %v466
    %473 = vmatprep.subr.mxu0 0.0
    %474 = vmatpush1.msra.mxu0 0.0
    %475 = vmatprep.subr.mxu0 0.0
    %476 = vmatpush1.msra.mxu0 0.0
    %477 = vmatprep.subr.mxu0 0.0
    %478 = vmatpush1.msra.mxu0 0.0
    %479 = vmatprep.subr.mxu0 0.0
    %480 = vmatpush1.msra.mxu0 0.0
    %481 = vmatprep.subr.mxu0 0.0
    %482 = vmatpush1.msra.mxu0 0.0
    %483 = vmatprep.subr.mxu0 0.0
    %484 = vmatpush1.msra.mxu0 0.0
    %485 = vmatprep.subr.mxu0 0.0
    %486 = vmatpush1.msra.mxu0 0.0
    %487 = vmatprep.subr.mxu0 0.0
    %488 = vmatpush1.msra.mxu0 0.0
    %489 = vmatprep.subr.mxu0 0.0
    %490 = vmatpush1.msra.mxu0 0.0
    %491 = vmatprep.subr.mxu0 0.0
    %492 = vmatpush1.msra.mxu0 0.0
    %493 = vmatprep.subr.mxu0 0.0
    %494 = vmatpush1.msra.mxu0 0.0
    %495 = vmatprep.subr.mxu0 0.0
    %496 = vmatpush1.msra.mxu0 0.0
    %497 = vmatprep.subr.mxu0 0.0
    %498 = vmatpush1.msra.mxu0 0.0
    %499 = vmatprep.subr.mxu0 0.0
    %500 = vmatpush1.msra.mxu0 0.0
    %501 = vmatprep.subr.mxu0 0.0
    %502 = vmatpush1.msra.mxu0 0.0
    %503 = vmatprep.subr.mxu0 0.0
    %504 = vmatpush1.msra.mxu0 0.0
    %505 = vmatprep.subr.mxu0 0.0
    %506 = vmatpush1.msra.mxu0 0.0
    %507 = vmatprep.subr.mxu0 0.0
    %508 = vmatpush1.msra.mxu0 0.0
    %509 = vmatprep.subr.mxu0 0.0
    %510 = vmatpush1.msra.mxu0 0.0
    %511 = vmatprep.subr.mxu0 0.0
    %512 = vmatpush1.msra.mxu0 0.0
    %513 = vmatprep.subr.mxu0 0.0
    %514 = vmatpush1.msra.mxu0 0.0
    %515 = vmatprep.subr.mxu0 0.0
    %516 = vmatpush1.msra.mxu0 0.0
    %517 = vmatprep.subr.mxu0 0.0
    %518 = vmatpush1.msra.mxu0 0.0
    %519 = vmatprep.subr.mxu0 0.0
    %520 = vmatpush1.msra.mxu0 0.0
    %521 = vmatprep.subr.mxu0 0.0
    %522 = vmatpush1.msra.mxu0 0.0
    %523 = vmatprep.subr.mxu0 0.0
    %524 = vmatpush1.msra.mxu0 0.0
    %525 = vmatprep.subr.mxu0 0.0
    %526 = vmatpush1.msra.mxu0 0.0
    %527 = vmatprep.subr.mxu0 0.0
    %528 = vmatpush1.msra.mxu0 0.0
    %529 = vmatprep.subr.mxu0 0.0
    %530 = vmatpush1.msra.mxu0 0.0
    %531 = vmatprep.subr.mxu0 0.0
    %532 = vmatpush1.msra.mxu0 0.0
    %533 = vmatprep.subr.mxu0 0.0
    %534 = vmatpush1.msra.mxu0 0.0
    %535 = vmatprep.mubr.f32.mxu0 0.0
    %536 = vmatmul.mubr.f32.gmra.mrb[0].mxu0 %v469
    %v537 = vpop.f32.mrb[0].mxu0
    %v538 = vadd.f32 0.0, %v537
    %v539 = vpop.f32.mrb[0].mxu0
    %540 = vdwg.mxu0
    %541 = vrot.lane.b32.xlu0 %v202, 120
    %v542 = vpop.permute.xlu0 %541
    %543 = vrot.lane.b32.xlu0 %v202, 88
    %v544 = vpop.permute.xlu0 %543
    %v545 = vsel %vm213, %v542, 0
    %v547 = vsel %vm213, %v544, 0
    %549 = vmatprep.subr.mxu0 0.0
    %550 = vmatpush1.xpose.msra.mxu0 %v547
    %551 = vmatprep.subr.mxu0 0.0
    %552 = vmatpush1.xpose.msra.mxu0 0.0
    %553 = vmatprep.subr.mxu0 0.0
    %554 = vmatpush1.xpose.msra.mxu0 0.0
    %555 = vmatprep.subr.mxu0 0.0
    %556 = vmatpush1.xpose.msra.mxu0 0.0
    %557 = vmatprep.subr.mxu0 0.0
    %558 = vmatpush1.xpose.msra.mxu0 0.0
    %559 = vmatprep.subr.mxu0 0.0
    %560 = vmatpush1.xpose.msra.mxu0 0.0
    %561 = vmatprep.subr.mxu0 0.0
    %562 = vmatpush1.xpose.msra.mxu0 0.0
    %563 = vmatprep.subr.mxu0 0.0
    %564 = vmatpush1.xpose.msra.mxu0 0.0
    %565 = vmatprep.subr.mxu0 0.0
    %566 = vmatpush1.xpose.msra.mxu0 0.0
    %567 = vmatprep.subr.mxu0 0.0
    %568 = vmatpush1.xpose.msra.mxu0 0.0
    %569 = vmatprep.subr.mxu0 0.0
    %570 = vmatpush1.xpose.msra.mxu0 0.0
    %571 = vmatprep.subr.mxu0 0.0
    %572 = vmatpush1.xpose.msra.mxu0 0.0
    %573 = vmatprep.subr.mxu0 0.0
    %574 = vmatpush1.xpose.msra.mxu0 0.0
    %575 = vmatprep.subr.mxu0 0.0
    %576 = vmatpush1.xpose.msra.mxu0 0.0
    %577 = vmatprep.subr.mxu0 0.0
    %578 = vmatpush1.xpose.msra.mxu0 0.0
    %579 = vmatprep.subr.mxu0 0.0
    %580 = vmatpush1.xpose.msra.mxu0 0.0
    %581 = vmatprep.subr.mxu0 0.0
    %582 = vmatpush1.xpose.msra.mxu0 0.0
    %583 = vmatprep.subr.mxu0 0.0
    %584 = vmatpush1.xpose.msra.mxu0 0.0
    %585 = vmatprep.subr.mxu0 0.0
    %586 = vmatpush1.xpose.msra.mxu0 0.0
    %587 = vmatprep.subr.mxu0 0.0
    %588 = vmatpush1.xpose.msra.mxu0 0.0
    %589 = vmatprep.subr.mxu0 0.0
    %590 = vmatpush1.xpose.msra.mxu0 0.0
    %591 = vmatprep.subr.mxu0 0.0
    %592 = vmatpush1.xpose.msra.mxu0 0.0
    %593 = vmatprep.subr.mxu0 0.0
    %594 = vmatpush1.xpose.msra.mxu0 0.0
    %595 = vmatprep.subr.mxu0 0.0
    %596 = vmatpush1.xpose.msra.mxu0 0.0
    %597 = vmatprep.subr.mxu0 0.0
    %598 = vmatpush1.xpose.msra.mxu0 0.0
    %599 = vmatprep.subr.mxu0 0.0
    %600 = vmatpush1.xpose.msra.mxu0 0.0
    %601 = vmatprep.subr.mxu0 0.0
    %602 = vmatpush1.xpose.msra.mxu0 0.0
    %603 = vmatprep.subr.mxu0 0.0
    %604 = vmatpush1.xpose.msra.mxu0 0.0
    %605 = vmatprep.subr.mxu0 0.0
    %606 = vmatpush1.xpose.msra.mxu0 0.0
    %607 = vmatprep.subr.mxu0 0.0
    %608 = vmatpush1.xpose.msra.mxu0 0.0
    %609 = vmatprep.subr.mxu0 0.0
    %610 = vmatpush1.xpose.msra.mxu0 0.0
    %611 = vmatprep.subr.mxu0 0.0
    %612 = vmatpush1.xpose.msra.mxu0 0.0
    %613 = vmatprep.mubr.f32.mxu0 0.0
    %614 = vmatmul.mubr.f32.gmra.mrb[0].mxu0 %v545
    %v615 = vpop.f32.mrb[0].mxu0
    %v616 = vadd.f32 0.0, %v615
    %v617 = vpop.f32.mrb[0].mxu0
    %618 = vdwg.mxu0
    %619 = vrot.lane.b32.xlu0 %v207, 120
    %v620 = vpop.permute.xlu0 %619
    %621 = vrot.lane.b32.xlu0 %v207, 88
    %v622 = vpop.permute.xlu0 %621
    %v623 = vsel %vm213, %v620, 0
    %v625 = vsel %vm213, %v622, 0
    %627 = vmatprep.subr.mxu0 0.0
    %628 = vmatpush1.xpose.msra.mxu0 %v625
    %629 = vmatprep.subr.mxu0 0.0
    %630 = vmatpush1.xpose.msra.mxu0 0.0
    %631 = vmatprep.subr.mxu0 0.0
    %632 = vmatpush1.xpose.msra.mxu0 0.0
    %633 = vmatprep.subr.mxu0 0.0
    %634 = vmatpush1.xpose.msra.mxu0 0.0
    %635 = vmatprep.subr.mxu0 0.0
    %636 = vmatpush1.xpose.msra.mxu0 0.0
    %637 = vmatprep.subr.mxu0 0.0
    %638 = vmatpush1.xpose.msra.mxu0 0.0
    %639 = vmatprep.subr.mxu0 0.0
    %640 = vmatpush1.xpose.msra.mxu0 0.0
    %641 = vmatprep.subr.mxu0 0.0
    %642 = vmatpush1.xpose.msra.mxu0 0.0
    %643 = vmatprep.subr.mxu0 0.0
    %644 = vmatpush1.xpose.msra.mxu0 0.0
    %645 = vmatprep.subr.mxu0 0.0
    %646 = vmatpush1.xpose.msra.mxu0 0.0
    %647 = vmatprep.subr.mxu0 0.0
    %648 = vmatpush1.xpose.msra.mxu0 0.0
    %649 = vmatprep.subr.mxu0 0.0
    %650 = vmatpush1.xpose.msra.mxu0 0.0
    %651 = vmatprep.subr.mxu0 0.0
    %652 = vmatpush1.xpose.msra.mxu0 0.0
    %653 = vmatprep.subr.mxu0 0.0
    %654 = vmatpush1.xpose.msra.mxu0 0.0
    %655 = vmatprep.subr.mxu0 0.0
    %656 = vmatpush1.xpose.msra.mxu0 0.0
    %657 = vmatprep.subr.mxu0 0.0
    %658 = vmatpush1.xpose.msra.mxu0 0.0
    %659 = vmatprep.subr.mxu0 0.0
    %660 = vmatpush1.xpose.msra.mxu0 0.0
    %661 = vmatprep.subr.mxu0 0.0
    %662 = vmatpush1.xpose.msra.mxu0 0.0
    %663 = vmatprep.subr.mxu0 0.0
    %664 = vmatpush1.xpose.msra.mxu0 0.0
    %665 = vmatprep.subr.mxu0 0.0
    %666 = vmatpush1.xpose.msra.mxu0 0.0
    %667 = vmatprep.subr.mxu0 0.0
    %668 = vmatpush1.xpose.msra.mxu0 0.0
    %669 = vmatprep.subr.mxu0 0.0
    %670 = vmatpush1.xpose.msra.mxu0 0.0
    %671 = vmatprep.subr.mxu0 0.0
    %672 = vmatpush1.xpose.msra.mxu0 0.0
    %673 = vmatprep.subr.mxu0 0.0
    %674 = vmatpush1.xpose.msra.mxu0 0.0
    %675 = vmatprep.subr.mxu0 0.0
    %676 = vmatpush1.xpose.msra.mxu0 0.0
    %677 = vmatprep.subr.mxu0 0.0
    %678 = vmatpush1.xpose.msra.mxu0 0.0
    %679 = vmatprep.subr.mxu0 0.0
    %680 = vmatpush1.xpose.msra.mxu0 0.0
    %681 = vmatprep.subr.mxu0 0.0
    %682 = vmatpush1.xpose.msra.mxu0 0.0
    %683 = vmatprep.subr.mxu0 0.0
    %684 = vmatpush1.xpose.msra.mxu0 0.0
    %685 = vmatprep.subr.mxu0 0.0
    %686 = vmatpush1.xpose.msra.mxu0 0.0
    %687 = vmatprep.subr.mxu0 0.0
    %688 = vmatpush1.xpose.msra.mxu0 0.0
    %689 = vmatprep.subr.mxu0 0.0
    %690 = vmatpush1.xpose.msra.mxu0 0.0
    %691 = vmatprep.mubr.f32.mxu0 0.0
    %692 = vmatmul.mubr.f32.gmra.mrb[0].mxu0 %v623
    %v693 = vpop.f32.mrb[0].mxu0
    %v694 = vadd.f32 0.0, %v693
    %v695 = vpop.f32.mrb[0].mxu0
    %696 = vdwg.mxu0
    %v697 = vsel %vm213, %v616, -inf
    %698 = vmax.xlane.f32.xlu0 %v697
    %v699 = vpop.xlane.xlu0 %698
    %v700 = vsel %vm213, %v694, -inf
    %701 = vmax.xlane.f32.xlu0 %v700
    %v702 = vpop.xlane.xlu0 %701
    %v703 = vsub.f32 %v616, %v699
    %v704 = vsub.f32 %v694, %v702
    %v705 = vmul.f32 %v703, 1.442695
    %v706 = vpow.pop %v705
    %v707 = vmul.f32 %v704, 1.442695
    %v708 = vpow.pop %v707
    %v709 = vsel %vm213, %v706, 0.0
    %710 = vadd.xlane.f32.xlu0 %v709
    %v711 = vpop.xlane.xlu0 %710
    %v712 = vsel %vm213, %v708, 0.0
    %713 = vadd.xlane.f32.xlu0 %v712
    %v714 = vpop.xlane.xlu0 %713
    %v715 = vrcp.pop %v711
    %v716 = vrcp.pop %v714
    %v717 = vmul.f32 %v706, %v715
    %v718 = vmul.f32 %v708, %v716
    %s719 = scalar_lea.vmem %s14, 16
    %720 = vst.msk [vmem:[%s719] sm:$0xff] %vm213, %v717
    %721 = vst.msk [vmem:[%s719 + $0x8] sm:$0xff] %vm213, %v718
    %722 = vrot.lane.b32.xlu0 %v202, 56
    %v723 = vpop.permute.xlu0 %722
    %v726 = vsel %vm213, %v717, 0
    %728 = vmatprep.subr.mxu0 0.0
    %729 = vmatpush1.msra.mxu0 %v723
    %730 = vmatprep.subr.mxu0 0.0
    %731 = vmatpush1.msra.mxu0 0.0
    %732 = vmatprep.subr.mxu0 0.0
    %733 = vmatpush1.msra.mxu0 0.0
    %734 = vmatprep.subr.mxu0 0.0
    %735 = vmatpush1.msra.mxu0 0.0
    %736 = vmatprep.subr.mxu0 0.0
    %737 = vmatpush1.msra.mxu0 0.0
    %738 = vmatprep.subr.mxu0 0.0
    %739 = vmatpush1.msra.mxu0 0.0
    %740 = vmatprep.subr.mxu0 0.0
    %741 = vmatpush1.msra.mxu0 0.0
    %742 = vmatprep.subr.mxu0 0.0
    %743 = vmatpush1.msra.mxu0 0.0
    %744 = vmatprep.subr.mxu0 0.0
    %745 = vmatpush1.msra.mxu0 0.0
    %746 = vmatprep.subr.mxu0 0.0
    %747 = vmatpush1.msra.mxu0 0.0
    %748 = vmatprep.subr.mxu0 0.0
    %749 = vmatpush1.msra.mxu0 0.0
    %750 = vmatprep.subr.mxu0 0.0
    %751 = vmatpush1.msra.mxu0 0.0
    %752 = vmatprep.subr.mxu0 0.0
    %753 = vmatpush1.msra.mxu0 0.0
    %754 = vmatprep.subr.mxu0 0.0
    %755 = vmatpush1.msra.mxu0 0.0
    %756 = vmatprep.subr.mxu0 0.0
    %757 = vmatpush1.msra.mxu0 0.0
    %758 = vmatprep.subr.mxu0 0.0
    %759 = vmatpush1.msra.mxu0 0.0
    %760 = vmatprep.subr.mxu0 0.0
    %761 = vmatpush1.msra.mxu0 0.0
    %762 = vmatprep.subr.mxu0 0.0
    %763 = vmatpush1.msra.mxu0 0.0
    %764 = vmatprep.subr.mxu0 0.0
    %765 = vmatpush1.msra.mxu0 0.0
    %766 = vmatprep.subr.mxu0 0.0
    %767 = vmatpush1.msra.mxu0 0.0
    %768 = vmatprep.subr.mxu0 0.0
    %769 = vmatpush1.msra.mxu0 0.0
    %770 = vmatprep.subr.mxu0 0.0
    %771 = vmatpush1.msra.mxu0 0.0
    %772 = vmatprep.subr.mxu0 0.0
    %773 = vmatpush1.msra.mxu0 0.0
    %774 = vmatprep.subr.mxu0 0.0
    %775 = vmatpush1.msra.mxu0 0.0
    %776 = vmatprep.subr.mxu0 0.0
    %777 = vmatpush1.msra.mxu0 0.0
    %778 = vmatprep.subr.mxu0 0.0
    %779 = vmatpush1.msra.mxu0 0.0
    %780 = vmatprep.subr.mxu0 0.0
    %781 = vmatpush1.msra.mxu0 0.0
    %782 = vmatprep.subr.mxu0 0.0
    %783 = vmatpush1.msra.mxu0 0.0
    %784 = vmatprep.subr.mxu0 0.0
    %785 = vmatpush1.msra.mxu0 0.0
    %786 = vmatprep.subr.mxu0 0.0
    %787 = vmatpush1.msra.mxu0 0.0
    %788 = vmatprep.subr.mxu0 0.0
    %789 = vmatpush1.msra.mxu0 0.0
    %790 = vmatprep.subr.mxu0 0.0
    %791 = vmatpush1.msra.mxu0 0.0
    %792 = vmatprep.mubr.f32.mxu0 0.0
    %793 = vmatmul.mubr.f32.gmra.mrb[0].mxu0 %v726
    %v794 = vpop.f32.mrb[0].mxu0
    %v795 = vadd.f32 0.0, %v794
    %v796 = vpop.f32.mrb[0].mxu0
    %797 = vdwg.mxu0
    %798 = vrot.lane.b32.xlu0 %v207, 56
    %v799 = vpop.permute.xlu0 %798
    %v802 = vsel %vm213, %v718, 0
    %804 = vmatprep.subr.mxu0 0.0
    %805 = vmatpush1.msra.mxu0 %v799
    %806 = vmatprep.subr.mxu0 0.0
    %807 = vmatpush1.msra.mxu0 0.0
    %808 = vmatprep.subr.mxu0 0.0
    %809 = vmatpush1.msra.mxu0 0.0
    %810 = vmatprep.subr.mxu0 0.0
    %811 = vmatpush1.msra.mxu0 0.0
    %812 = vmatprep.subr.mxu0 0.0
    %813 = vmatpush1.msra.mxu0 0.0
    %814 = vmatprep.subr.mxu0 0.0
    %815 = vmatpush1.msra.mxu0 0.0
    %816 = vmatprep.subr.mxu0 0.0
    %817 = vmatpush1.msra.mxu0 0.0
    %818 = vmatprep.subr.mxu0 0.0
    %819 = vmatpush1.msra.mxu0 0.0
    %820 = vmatprep.subr.mxu0 0.0
    %821 = vmatpush1.msra.mxu0 0.0
    %822 = vmatprep.subr.mxu0 0.0
    %823 = vmatpush1.msra.mxu0 0.0
    %824 = vmatprep.subr.mxu0 0.0
    %825 = vmatpush1.msra.mxu0 0.0
    %826 = vmatprep.subr.mxu0 0.0
    %827 = vmatpush1.msra.mxu0 0.0
    %828 = vmatprep.subr.mxu0 0.0
    %829 = vmatpush1.msra.mxu0 0.0
    %830 = vmatprep.subr.mxu0 0.0
    %831 = vmatpush1.msra.mxu0 0.0
    %832 = vmatprep.subr.mxu0 0.0
    %833 = vmatpush1.msra.mxu0 0.0
    %834 = vmatprep.subr.mxu0 0.0
    %835 = vmatpush1.msra.mxu0 0.0
    %836 = vmatprep.subr.mxu0 0.0
    %837 = vmatpush1.msra.mxu0 0.0
    %838 = vmatprep.subr.mxu0 0.0
    %839 = vmatpush1.msra.mxu0 0.0
    %840 = vmatprep.subr.mxu0 0.0
    %841 = vmatpush1.msra.mxu0 0.0
    %842 = vmatprep.subr.mxu0 0.0
    %843 = vmatpush1.msra.mxu0 0.0
    %844 = vmatprep.subr.mxu0 0.0
    %845 = vmatpush1.msra.mxu0 0.0
    %846 = vmatprep.subr.mxu0 0.0
    %847 = vmatpush1.msra.mxu0 0.0
    %848 = vmatprep.subr.mxu0 0.0
    %849 = vmatpush1.msra.mxu0 0.0
    %850 = vmatprep.subr.mxu0 0.0
    %851 = vmatpush1.msra.mxu0 0.0
    %852 = vmatprep.subr.mxu0 0.0
    %853 = vmatpush1.msra.mxu0 0.0
    %854 = vmatprep.subr.mxu0 0.0
    %855 = vmatpush1.msra.mxu0 0.0
    %856 = vmatprep.subr.mxu0 0.0
    %857 = vmatpush1.msra.mxu0 0.0
    %858 = vmatprep.subr.mxu0 0.0
    %859 = vmatpush1.msra.mxu0 0.0
    %860 = vmatprep.subr.mxu0 0.0
    %861 = vmatpush1.msra.mxu0 0.0
    %862 = vmatprep.subr.mxu0 0.0
    %863 = vmatpush1.msra.mxu0 0.0
    %864 = vmatprep.subr.mxu0 0.0
    %865 = vmatpush1.msra.mxu0 0.0
    %866 = vmatprep.subr.mxu0 0.0
    %867 = vmatpush1.msra.mxu0 0.0
    %868 = vmatprep.mubr.f32.mxu0 0.0
    %869 = vmatmul.mubr.f32.gmra.mrb[0].mxu0 %v802
    %v870 = vpop.f32.mrb[0].mxu0
    %v871 = vadd.f32 0.0, %v870
    %v872 = vpop.f32.mrb[0].mxu0
    %873 = vdwg.mxu0
    %874 = vrot.lane.b32.xlu0 %v202, 112
    %v875 = vpop.permute.xlu0 %874
    %876 = vrot.lane.b32.xlu0 %v202, 80
    %v877 = vpop.permute.xlu0 %876
    %v878 = vsel %vm213, %v875, 0
    %v880 = vsel %vm213, %v877, 0
    %882 = vmatprep.subr.mxu0 0.0
    %883 = vmatpush1.xpose.msra.mxu0 %v880
    %884 = vmatprep.subr.mxu0 0.0
    %885 = vmatpush1.xpose.msra.mxu0 0.0
    %886 = vmatprep.subr.mxu0 0.0
    %887 = vmatpush1.xpose.msra.mxu0 0.0
    %888 = vmatprep.subr.mxu0 0.0
    %889 = vmatpush1.xpose.msra.mxu0 0.0
    %890 = vmatprep.subr.mxu0 0.0
    %891 = vmatpush1.xpose.msra.mxu0 0.0
    %892 = vmatprep.subr.mxu0 0.0
    %893 = vmatpush1.xpose.msra.mxu0 0.0
    %894 = vmatprep.subr.mxu0 0.0
    %895 = vmatpush1.xpose.msra.mxu0 0.0
    %896 = vmatprep.subr.mxu0 0.0
    %897 = vmatpush1.xpose.msra.mxu0 0.0
    %898 = vmatprep.subr.mxu0 0.0
    %899 = vmatpush1.xpose.msra.mxu0 0.0
    %900 = vmatprep.subr.mxu0 0.0
    %901 = vmatpush1.xpose.msra.mxu0 0.0
    %902 = vmatprep.subr.mxu0 0.0
    %903 = vmatpush1.xpose.msra.mxu0 0.0
    %904 = vmatprep.subr.mxu0 0.0
    %905 = vmatpush1.xpose.msra.mxu0 0.0
    %906 = vmatprep.subr.mxu0 0.0
    %907 = vmatpush1.xpose.msra.mxu0 0.0
    %908 = vmatprep.subr.mxu0 0.0
    %909 = vmatpush1.xpose.msra.mxu0 0.0
    %910 = vmatprep.subr.mxu0 0.0
    %911 = vmatpush1.xpose.msra.mxu0 0.0
    %912 = vmatprep.subr.mxu0 0.0
    %913 = vmatpush1.xpose.msra.mxu0 0.0
    %914 = vmatprep.subr.mxu0 0.0
    %915 = vmatpush1.xpose.msra.mxu0 0.0
    %916 = vmatprep.subr.mxu0 0.0
    %917 = vmatpush1.xpose.msra.mxu0 0.0
    %918 = vmatprep.subr.mxu0 0.0
    %919 = vmatpush1.xpose.msra.mxu0 0.0
    %920 = vmatprep.subr.mxu0 0.0
    %921 = vmatpush1.xpose.msra.mxu0 0.0
    %922 = vmatprep.subr.mxu0 0.0
    %923 = vmatpush1.xpose.msra.mxu0 0.0
    %924 = vmatprep.subr.mxu0 0.0
    %925 = vmatpush1.xpose.msra.mxu0 0.0
    %926 = vmatprep.subr.mxu0 0.0
    %927 = vmatpush1.xpose.msra.mxu0 0.0
    %928 = vmatprep.subr.mxu0 0.0
    %929 = vmatpush1.xpose.msra.mxu0 0.0
    %930 = vmatprep.subr.mxu0 0.0
    %931 = vmatpush1.xpose.msra.mxu0 0.0
    %932 = vmatprep.subr.mxu0 0.0
    %933 = vmatpush1.xpose.msra.mxu0 0.0
    %934 = vmatprep.subr.mxu0 0.0
    %935 = vmatpush1.xpose.msra.mxu0 0.0
    %936 = vmatprep.subr.mxu0 0.0
    %937 = vmatpush1.xpose.msra.mxu0 0.0
    %938 = vmatprep.subr.mxu0 0.0
    %939 = vmatpush1.xpose.msra.mxu0 0.0
    %940 = vmatprep.subr.mxu0 0.0
    %941 = vmatpush1.xpose.msra.mxu0 0.0
    %942 = vmatprep.subr.mxu0 0.0
    %943 = vmatpush1.xpose.msra.mxu0 0.0
    %944 = vmatprep.subr.mxu0 0.0
    %945 = vmatpush1.xpose.msra.mxu0 0.0
    %946 = vmatprep.mubr.f32.mxu0 0.0
    %947 = vmatmul.mubr.f32.gmra.mrb[0].mxu0 %v878
    %v948 = vpop.f32.mrb[0].mxu0
    %v949 = vadd.f32 0.0, %v948
    %v950 = vpop.f32.mrb[0].mxu0
    %951 = vdwg.mxu0
    %952 = vrot.lane.b32.xlu0 %v207, 112
    %v953 = vpop.permute.xlu0 %952
    %954 = vrot.lane.b32.xlu0 %v207, 80
    %v955 = vpop.permute.xlu0 %954
    %v956 = vsel %vm213, %v953, 0
    %v958 = vsel %vm213, %v955, 0
    %960 = vmatprep.subr.mxu0 0.0
    %961 = vmatpush1.xpose.msra.mxu0 %v958
    %962 = vmatprep.subr.mxu0 0.0
    %963 = vmatpush1.xpose.msra.mxu0 0.0
    %964 = vmatprep.subr.mxu0 0.0
    %965 = vmatpush1.xpose.msra.mxu0 0.0
    %966 = vmatprep.subr.mxu0 0.0
    %967 = vmatpush1.xpose.msra.mxu0 0.0
    %968 = vmatprep.subr.mxu0 0.0
    %969 = vmatpush1.xpose.msra.mxu0 0.0
    %970 = vmatprep.subr.mxu0 0.0
    %971 = vmatpush1.xpose.msra.mxu0 0.0
    %972 = vmatprep.subr.mxu0 0.0
    %973 = vmatpush1.xpose.msra.mxu0 0.0
    %974 = vmatprep.subr.mxu0 0.0
    %975 = vmatpush1.xpose.msra.mxu0 0.0
    %976 = vmatprep.subr.mxu0 0.0
    %977 = vmatpush1.xpose.msra.mxu0 0.0
    %978 = vmatprep.subr.mxu0 0.0
    %979 = vmatpush1.xpose.msra.mxu0 0.0
    %980 = vmatprep.subr.mxu0 0.0
    %981 = vmatpush1.xpose.msra.mxu0 0.0
    %982 = vmatprep.subr.mxu0 0.0
    %983 = vmatpush1.xpose.msra.mxu0 0.0
    %984 = vmatprep.subr.mxu0 0.0
    %985 = vmatpush1.xpose.msra.mxu0 0.0
    %986 = vmatprep.subr.mxu0 0.0
    %987 = vmatpush1.xpose.msra.mxu0 0.0
    %988 = vmatprep.subr.mxu0 0.0
    %989 = vmatpush1.xpose.msra.mxu0 0.0
    %990 = vmatprep.subr.mxu0 0.0
    %991 = vmatpush1.xpose.msra.mxu0 0.0
    %992 = vmatprep.subr.mxu0 0.0
    %993 = vmatpush1.xpose.msra.mxu0 0.0
    %994 = vmatprep.subr.mxu0 0.0
    %995 = vmatpush1.xpose.msra.mxu0 0.0
    %996 = vmatprep.subr.mxu0 0.0
    %997 = vmatpush1.xpose.msra.mxu0 0.0
    %998 = vmatprep.subr.mxu0 0.0
    %999 = vmatpush1.xpose.msra.mxu0 0.0
    %1000 = vmatprep.subr.mxu0 0.0
    %1001 = vmatpush1.xpose.msra.mxu0 0.0
    %1002 = vmatprep.subr.mxu0 0.0
    %1003 = vmatpush1.xpose.msra.mxu0 0.0
    %1004 = vmatprep.subr.mxu0 0.0
    %1005 = vmatpush1.xpose.msra.mxu0 0.0
    %1006 = vmatprep.subr.mxu0 0.0
    %1007 = vmatpush1.xpose.msra.mxu0 0.0
    %1008 = vmatprep.subr.mxu0 0.0
    %1009 = vmatpush1.xpose.msra.mxu0 0.0
    %1010 = vmatprep.subr.mxu0 0.0
    %1011 = vmatpush1.xpose.msra.mxu0 0.0
    %1012 = vmatprep.subr.mxu0 0.0
    %1013 = vmatpush1.xpose.msra.mxu0 0.0
    %1014 = vmatprep.subr.mxu0 0.0
    %1015 = vmatpush1.xpose.msra.mxu0 0.0
    %1016 = vmatprep.subr.mxu0 0.0
    %1017 = vmatpush1.xpose.msra.mxu0 0.0
    %1018 = vmatprep.subr.mxu0 0.0
    %1019 = vmatpush1.xpose.msra.mxu0 0.0
    %1020 = vmatprep.subr.mxu0 0.0
    %1021 = vmatpush1.xpose.msra.mxu0 0.0
    %1022 = vmatprep.subr.mxu0 0.0
    %1023 = vmatpush1.xpose.msra.mxu0 0.0
    %1024 = vmatprep.mubr.f32.mxu0 0.0
    %1025 = vmatmul.mubr.f32.gmra.mrb[0].mxu0 %v956
    %v1026 = vpop.f32.mrb[0].mxu0
    %v1027 = vadd.f32 0.0, %v1026
    %v1028 = vpop.f32.mrb[0].mxu0
    %1029 = vdwg.mxu0
    %v1030 = vsel %vm213, %v949, -inf
    %1031 = vmax.xlane.f32.xlu0 %v1030
    %v1032 = vpop.xlane.xlu0 %1031
    %v1033 = vsel %vm213, %v1027, -inf
    %1034 = vmax.xlane.f32.xlu0 %v1033
    %v1035 = vpop.xlane.xlu0 %1034
    %v1036 = vsub.f32 %v949, %v1032
    %v1037 = vsub.f32 %v1027, %v1035
    %v1038 = vmul.f32 %v1036, 1.442695
    %v1039 = vpow.pop %v1038
    %v1040 = vmul.f32 %v1037, 1.442695
    %v1041 = vpow.pop %v1040
    %v1042 = vsel %vm213, %v1039, 0.0
    %1043 = vadd.xlane.f32.xlu0 %v1042
    %v1044 = vpop.xlane.xlu0 %1043
    %v1045 = vsel %vm213, %v1041, 0.0
    %1046 = vadd.xlane.f32.xlu0 %v1045
    %v1047 = vpop.xlane.xlu0 %1046
    %v1048 = vrcp.pop %v1044
    %v1049 = vrcp.pop %v1047
    %v1050 = vmul.f32 %v1039, %v1048
    %v1051 = vmul.f32 %v1041, %v1049
    %s1052 = scalar_lea.vmem %s14, 32
    %1053 = vst.msk [vmem:[%s1052] sm:$0xff] %vm213, %v1050
    %1054 = vst.msk [vmem:[%s1052 + $0x8] sm:$0xff] %vm213, %v1051
    %1055 = vrot.lane.b32.xlu0 %v202, 48
    %v1056 = vpop.permute.xlu0 %1055
    %v1059 = vsel %vm213, %v1050, 0
    %1061 = vmatprep.subr.mxu0 0.0
    %1062 = vmatpush1.msra.mxu0 %v1056
    %1063 = vmatprep.subr.mxu0 0.0
    %1064 = vmatpush1.msra.mxu0 0.0
    %1065 = vmatprep.subr.mxu0 0.0
    %1066 = vmatpush1.msra.mxu0 0.0
    %1067 = vmatprep.subr.mxu0 0.0
    %1068 = vmatpush1.msra.mxu0 0.0
    %1069 = vmatprep.subr.mxu0 0.0
    %1070 = vmatpush1.msra.mxu0 0.0
    %1071 = vmatprep.subr.mxu0 0.0
    %1072 = vmatpush1.msra.mxu0 0.0
    %1073 = vmatprep.subr.mxu0 0.0
    %1074 = vmatpush1.msra.mxu0 0.0
    %1075 = vmatprep.subr.mxu0 0.0
    %1076 = vmatpush1.msra.mxu0 0.0
    %1077 = vmatprep.subr.mxu0 0.0
    %1078 = vmatpush1.msra.mxu0 0.0
    %1079 = vmatprep.subr.mxu0 0.0
    %1080 = vmatpush1.msra.mxu0 0.0
    %1081 = vmatprep.subr.mxu0 0.0
    %1082 = vmatpush1.msra.mxu0 0.0
    %1083 = vmatprep.subr.mxu0 0.0
    %1084 = vmatpush1.msra.mxu0 0.0
    %1085 = vmatprep.subr.mxu0 0.0
    %1086 = vmatpush1.msra.mxu0 0.0
    %1087 = vmatprep.subr.mxu0 0.0
    %1088 = vmatpush1.msra.mxu0 0.0
    %1089 = vmatprep.subr.mxu0 0.0
    %1090 = vmatpush1.msra.mxu0 0.0
    %1091 = vmatprep.subr.mxu0 0.0
    %1092 = vmatpush1.msra.mxu0 0.0
    %1093 = vmatprep.subr.mxu0 0.0
    %1094 = vmatpush1.msra.mxu0 0.0
    %1095 = vmatprep.subr.mxu0 0.0
    %1096 = vmatpush1.msra.mxu0 0.0
    %1097 = vmatprep.subr.mxu0 0.0
    %1098 = vmatpush1.msra.mxu0 0.0
    %1099 = vmatprep.subr.mxu0 0.0
    %1100 = vmatpush1.msra.mxu0 0.0
    %1101 = vmatprep.subr.mxu0 0.0
    %1102 = vmatpush1.msra.mxu0 0.0
    %1103 = vmatprep.subr.mxu0 0.0
    %1104 = vmatpush1.msra.mxu0 0.0
    %1105 = vmatprep.subr.mxu0 0.0
    %1106 = vmatpush1.msra.mxu0 0.0
    %1107 = vmatprep.subr.mxu0 0.0
    %1108 = vmatpush1.msra.mxu0 0.0
    %1109 = vmatprep.subr.mxu0 0.0
    %1110 = vmatpush1.msra.mxu0 0.0
    %1111 = vmatprep.subr.mxu0 0.0
    %1112 = vmatpush1.msra.mxu0 0.0
    %1113 = vmatprep.subr.mxu0 0.0
    %1114 = vmatpush1.msra.mxu0 0.0
    %1115 = vmatprep.subr.mxu0 0.0
    %1116 = vmatpush1.msra.mxu0 0.0
    %1117 = vmatprep.subr.mxu0 0.0
    %1118 = vmatpush1.msra.mxu0 0.0
    %1119 = vmatprep.subr.mxu0 0.0
    %1120 = vmatpush1.msra.mxu0 0.0
    %1121 = vmatprep.subr.mxu0 0.0
    %1122 = vmatpush1.msra.mxu0 0.0
    %1123 = vmatprep.subr.mxu0 0.0
    %1124 = vmatpush1.msra.mxu0 0.0
    %1125 = vmatprep.mubr.f32.mxu0 0.0
    %1126 = vmatmul.mubr.f32.gmra.mrb[0].mxu0 %v1059
    %v1127 = vpop.f32.mrb[0].mxu0
    %v1128 = vadd.f32 0.0, %v1127
    %v1129 = vpop.f32.mrb[0].mxu0
    %1130 = vdwg.mxu0
    %1131 = vrot.lane.b32.xlu0 %v207, 48
    %v1132 = vpop.permute.xlu0 %1131
    %v1135 = vsel %vm213, %v1051, 0
    %1137 = vmatprep.subr.mxu0 0.0
    %1138 = vmatpush1.msra.mxu0 %v1132
    %1139 = vmatprep.subr.mxu0 0.0
    %1140 = vmatpush1.msra.mxu0 0.0
    %1141 = vmatprep.subr.mxu0 0.0
    %1142 = vmatpush1.msra.mxu0 0.0
    %1143 = vmatprep.subr.mxu0 0.0
    %1144 = vmatpush1.msra.mxu0 0.0
    %1145 = vmatprep.subr.mxu0 0.0
    %1146 = vmatpush1.msra.mxu0 0.0
    %1147 = vmatprep.subr.mxu0 0.0
    %1148 = vmatpush1.msra.mxu0 0.0
    %1149 = vmatprep.subr.mxu0 0.0
    %1150 = vmatpush1.msra.mxu0 0.0
    %1151 = vmatprep.subr.mxu0 0.0
    %1152 = vmatpush1.msra.mxu0 0.0
    %1153 = vmatprep.subr.mxu0 0.0
    %1154 = vmatpush1.msra.mxu0 0.0
    %1155 = vmatprep.subr.mxu0 0.0
    %1156 = vmatpush1.msra.mxu0 0.0
    %1157 = vmatprep.subr.mxu0 0.0
    %1158 = vmatpush1.msra.mxu0 0.0
    %1159 = vmatprep.subr.mxu0 0.0
    %1160 = vmatpush1.msra.mxu0 0.0
    %1161 = vmatprep.subr.mxu0 0.0
    %1162 = vmatpush1.msra.mxu0 0.0
    %1163 = vmatprep.subr.mxu0 0.0
    %1164 = vmatpush1.msra.mxu0 0.0
    %1165 = vmatprep.subr.mxu0 0.0
    %1166 = vmatpush1.msra.mxu0 0.0
    %1167 = vmatprep.subr.mxu0 0.0
    %1168 = vmatpush1.msra.mxu0 0.0
    %1169 = vmatprep.subr.mxu0 0.0
    %1170 = vmatpush1.msra.mxu0 0.0
    %1171 = vmatprep.subr.mxu0 0.0
    %1172 = vmatpush1.msra.mxu0 0.0
    %1173 = vmatprep.subr.mxu0 0.0
    %1174 = vmatpush1.msra.mxu0 0.0
    %1175 = vmatprep.subr.mxu0 0.0
    %1176 = vmatpush1.msra.mxu0 0.0
    %1177 = vmatprep.subr.mxu0 0.0
    %1178 = vmatpush1.msra.mxu0 0.0
    %1179 = vmatprep.subr.mxu0 0.0
    %1180 = vmatpush1.msra.mxu0 0.0
    %1181 = vmatprep.subr.mxu0 0.0
    %1182 = vmatpush1.msra.mxu0 0.0
    %1183 = vmatprep.subr.mxu0 0.0
    %1184 = vmatpush1.msra.mxu0 0.0
    %1185 = vmatprep.subr.mxu0 0.0
    %1186 = vmatpush1.msra.mxu0 0.0
    %1187 = vmatprep.subr.mxu0 0.0
    %1188 = vmatpush1.msra.mxu0 0.0
    %1189 = vmatprep.subr.mxu0 0.0
    %1190 = vmatpush1.msra.mxu0 0.0
    %1191 = vmatprep.subr.mxu0 0.0
    %1192 = vmatpush1.msra.mxu0 0.0
    %1193 = vmatprep.subr.mxu0 0.0
    %1194 = vmatpush1.msra.mxu0 0.0
    %1195 = vmatprep.subr.mxu0 0.0
    %1196 = vmatpush1.msra.mxu0 0.0
    %1197 = vmatprep.subr.mxu0 0.0
    %1198 = vmatpush1.msra.mxu0 0.0
    %1199 = vmatprep.subr.mxu0 0.0
    %1200 = vmatpush1.msra.mxu0 0.0
    %1201 = vmatprep.mubr.f32.mxu0 0.0
    %1202 = vmatmul.mubr.f32.gmra.mrb[0].mxu0 %v1135
    %v1203 = vpop.f32.mrb[0].mxu0
    %v1204 = vadd.f32 0.0, %v1203
    %v1205 = vpop.f32.mrb[0].mxu0
    %1206 = vdwg.mxu0
    %1207 = vrot.lane.b32.xlu0 %v202, 104
    %v1208 = vpop.permute.xlu0 %1207
    %1209 = vrot.lane.b32.xlu0 %v202, 72
    %v1210 = vpop.permute.xlu0 %1209
    %v1211 = vsel %vm213, %v1208, 0
    %v1213 = vsel %vm213, %v1210, 0
    %1215 = vmatprep.subr.mxu0 0.0
    %1216 = vmatpush1.xpose.msra.mxu0 %v1213
    %1217 = vmatprep.subr.mxu0 0.0
    %1218 = vmatpush1.xpose.msra.mxu0 0.0
    %1219 = vmatprep.subr.mxu0 0.0
    %1220 = vmatpush1.xpose.msra.mxu0 0.0
    %1221 = vmatprep.subr.mxu0 0.0
    %1222 = vmatpush1.xpose.msra.mxu0 0.0
    %1223 = vmatprep.subr.mxu0 0.0
    %1224 = vmatpush1.xpose.msra.mxu0 0.0
    %1225 = vmatprep.subr.mxu0 0.0
    %1226 = vmatpush1.xpose.msra.mxu0 0.0
    %1227 = vmatprep.subr.mxu0 0.0
    %1228 = vmatpush1.xpose.msra.mxu0 0.0
    %1229 = vmatprep.subr.mxu0 0.0
    %1230 = vmatpush1.xpose.msra.mxu0 0.0
    %1231 = vmatprep.subr.mxu0 0.0
    %1232 = vmatpush1.xpose.msra.mxu0 0.0
    %1233 = vmatprep.subr.mxu0 0.0
    %1234 = vmatpush1.xpose.msra.mxu0 0.0
    %1235 = vmatprep.subr.mxu0 0.0
    %1236 = vmatpush1.xpose.msra.mxu0 0.0
    %1237 = vmatprep.subr.mxu0 0.0
    %1238 = vmatpush1.xpose.msra.mxu0 0.0
    %1239 = vmatprep.subr.mxu0 0.0
    %1240 = vmatpush1.xpose.msra.mxu0 0.0
    %1241 = vmatprep.subr.mxu0 0.0
    %1242 = vmatpush1.xpose.msra.mxu0 0.0
    %1243 = vmatprep.subr.mxu0 0.0
    %1244 = vmatpush1.xpose.msra.mxu0 0.0
    %1245 = vmatprep.subr.mxu0 0.0
    %1246 = vmatpush1.xpose.msra.mxu0 0.0
    %1247 = vmatprep.subr.mxu0 0.0
    %1248 = vmatpush1.xpose.msra.mxu0 0.0
    %1249 = vmatprep.subr.mxu0 0.0
    %1250 = vmatpush1.xpose.msra.mxu0 0.0
    %1251 = vmatprep.subr.mxu0 0.0
    %1252 = vmatpush1.xpose.msra.mxu0 0.0
    %1253 = vmatprep.subr.mxu0 0.0
    %1254 = vmatpush1.xpose.msra.mxu0 0.0
    %1255 = vmatprep.subr.mxu0 0.0
    %1256 = vmatpush1.xpose.msra.mxu0 0.0
    %1257 = vmatprep.subr.mxu0 0.0
    %1258 = vmatpush1.xpose.msra.mxu0 0.0
    %1259 = vmatprep.subr.mxu0 0.0
    %1260 = vmatpush1.xpose.msra.mxu0 0.0
    %1261 = vmatprep.subr.mxu0 0.0
    %1262 = vmatpush1.xpose.msra.mxu0 0.0
    %1263 = vmatprep.subr.mxu0 0.0
    %1264 = vmatpush1.xpose.msra.mxu0 0.0
    %1265 = vmatprep.subr.mxu0 0.0
    %1266 = vmatpush1.xpose.msra.mxu0 0.0
    %1267 = vmatprep.subr.mxu0 0.0
    %1268 = vmatpush1.xpose.msra.mxu0 0.0
    %1269 = vmatprep.subr.mxu0 0.0
    %1270 = vmatpush1.xpose.msra.mxu0 0.0
    %1271 = vmatprep.subr.mxu0 0.0
    %1272 = vmatpush1.xpose.msra.mxu0 0.0
    %1273 = vmatprep.subr.mxu0 0.0
    %1274 = vmatpush1.xpose.msra.mxu0 0.0
    %1275 = vmatprep.subr.mxu0 0.0
    %1276 = vmatpush1.xpose.msra.mxu0 0.0
    %1277 = vmatprep.subr.mxu0 0.0
    %1278 = vmatpush1.xpose.msra.mxu0 0.0
    %1279 = vmatprep.mubr.f32.mxu0 0.0
    %1280 = vmatmul.mubr.f32.gmra.mrb[0].mxu0 %v1211
    %v1281 = vpop.f32.mrb[0].mxu0
    %v1282 = vadd.f32 0.0, %v1281
    %v1283 = vpop.f32.mrb[0].mxu0
    %1284 = vdwg.mxu0
    %1285 = vrot.lane.b32.xlu0 %v207, 104
    %v1286 = vpop.permute.xlu0 %1285
    %1287 = vrot.lane.b32.xlu0 %v207, 72
    %v1288 = vpop.permute.xlu0 %1287
    %v1289 = vsel %vm213, %v1286, 0
    %v1291 = vsel %vm213, %v1288, 0
    %1293 = vmatprep.subr.mxu0 0.0
    %1294 = vmatpush1.xpose.msra.mxu0 %v1291
    %1295 = vmatprep.subr.mxu0 0.0
    %1296 = vmatpush1.xpose.msra.mxu0 0.0
    %1297 = vmatprep.subr.mxu0 0.0
    %1298 = vmatpush1.xpose.msra.mxu0 0.0
    %1299 = vmatprep.subr.mxu0 0.0
    %1300 = vmatpush1.xpose.msra.mxu0 0.0
    %1301 = vmatprep.subr.mxu0 0.0
    %1302 = vmatpush1.xpose.msra.mxu0 0.0
    %1303 = vmatprep.subr.mxu0 0.0
    %1304 = vmatpush1.xpose.msra.mxu0 0.0
    %1305 = vmatprep.subr.mxu0 0.0
    %1306 = vmatpush1.xpose.msra.mxu0 0.0
    %1307 = vmatprep.subr.mxu0 0.0
    %1308 = vmatpush1.xpose.msra.mxu0 0.0
    %1309 = vmatprep.subr.mxu0 0.0
    %1310 = vmatpush1.xpose.msra.mxu0 0.0
    %1311 = vmatprep.subr.mxu0 0.0
    %1312 = vmatpush1.xpose.msra.mxu0 0.0
    %1313 = vmatprep.subr.mxu0 0.0
    %1314 = vmatpush1.xpose.msra.mxu0 0.0
    %1315 = vmatprep.subr.mxu0 0.0
    %1316 = vmatpush1.xpose.msra.mxu0 0.0
    %1317 = vmatprep.subr.mxu0 0.0
    %1318 = vmatpush1.xpose.msra.mxu0 0.0
    %1319 = vmatprep.subr.mxu0 0.0
    %1320 = vmatpush1.xpose.msra.mxu0 0.0
    %1321 = vmatprep.subr.mxu0 0.0
    %1322 = vmatpush1.xpose.msra.mxu0 0.0
    %1323 = vmatprep.subr.mxu0 0.0
    %1324 = vmatpush1.xpose.msra.mxu0 0.0
    %1325 = vmatprep.subr.mxu0 0.0
    %1326 = vmatpush1.xpose.msra.mxu0 0.0
    %1327 = vmatprep.subr.mxu0 0.0
    %1328 = vmatpush1.xpose.msra.mxu0 0.0
    %1329 = vmatprep.subr.mxu0 0.0
    %1330 = vmatpush1.xpose.msra.mxu0 0.0
    %1331 = vmatprep.subr.mxu0 0.0
    %1332 = vmatpush1.xpose.msra.mxu0 0.0
    %1333 = vmatprep.subr.mxu0 0.0
    %1334 = vmatpush1.xpose.msra.mxu0 0.0
    %1335 = vmatprep.subr.mxu0 0.0
    %1336 = vmatpush1.xpose.msra.mxu0 0.0
    %1337 = vmatprep.subr.mxu0 0.0
    %1338 = vmatpush1.xpose.msra.mxu0 0.0
    %1339 = vmatprep.subr.mxu0 0.0
    %1340 = vmatpush1.xpose.msra.mxu0 0.0
    %1341 = vmatprep.subr.mxu0 0.0
    %1342 = vmatpush1.xpose.msra.mxu0 0.0
    %1343 = vmatprep.subr.mxu0 0.0
    %1344 = vmatpush1.xpose.msra.mxu0 0.0
    %1345 = vmatprep.subr.mxu0 0.0
    %1346 = vmatpush1.xpose.msra.mxu0 0.0
    %1347 = vmatprep.subr.mxu0 0.0
    %1348 = vmatpush1.xpose.msra.mxu0 0.0
    %1349 = vmatprep.subr.mxu0 0.0
    %1350 = vmatpush1.xpose.msra.mxu0 0.0
    %1351 = vmatprep.subr.mxu0 0.0
    %1352 = vmatpush1.xpose.msra.mxu0 0.0
    %1353 = vmatprep.subr.mxu0 0.0
    %1354 = vmatpush1.xpose.msra.mxu0 0.0
    %1355 = vmatprep.subr.mxu0 0.0
    %1356 = vmatpush1.xpose.msra.mxu0 0.0
    %1357 = vmatprep.mubr.f32.mxu0 0.0
    %1358 = vmatmul.mubr.f32.gmra.mrb[0].mxu0 %v1289
    %v1359 = vpop.f32.mrb[0].mxu0
    %v1360 = vadd.f32 0.0, %v1359
    %v1361 = vpop.f32.mrb[0].mxu0
    %1362 = vdwg.mxu0
    %v1363 = vsel %vm213, %v1282, -inf
    %1364 = vmax.xlane.f32.xlu0 %v1363
    %v1365 = vpop.xlane.xlu0 %1364
    %v1366 = vsel %vm213, %v1360, -inf
    %1367 = vmax.xlane.f32.xlu0 %v1366
    %v1368 = vpop.xlane.xlu0 %1367
    %v1369 = vsub.f32 %v1282, %v1365
    %v1370 = vsub.f32 %v1360, %v1368
    %v1371 = vmul.f32 %v1369, 1.442695
    %v1372 = vpow.pop %v1371
    %v1373 = vmul.f32 %v1370, 1.442695
    %v1374 = vpow.pop %v1373
    %v1375 = vsel %vm213, %v1372, 0.0
    %1376 = vadd.xlane.f32.xlu0 %v1375
    %v1377 = vpop.xlane.xlu0 %1376
    %v1378 = vsel %vm213, %v1374, 0.0
    %1379 = vadd.xlane.f32.xlu0 %v1378
    %v1380 = vpop.xlane.xlu0 %1379
    %v1381 = vrcp.pop %v1377
    %v1382 = vrcp.pop %v1380
    %v1383 = vmul.f32 %v1372, %v1381
    %v1384 = vmul.f32 %v1374, %v1382
    %s1385 = scalar_lea.vmem %s14, 48
    %1386 = vst.msk [vmem:[%s1385] sm:$0xff] %vm213, %v1383
    %1387 = vst.msk [vmem:[%s1385 + $0x8] sm:$0xff] %vm213, %v1384
    %1388 = vrot.lane.b32.xlu0 %v202, 40
    %v1389 = vpop.permute.xlu0 %1388
    %v1392 = vsel %vm213, %v1383, 0
    %1394 = vmatprep.subr.mxu0 0.0
    %1395 = vmatpush1.msra.mxu0 %v1389
    %1396 = vmatprep.subr.mxu0 0.0
    %1397 = vmatpush1.msra.mxu0 0.0
    %1398 = vmatprep.subr.mxu0 0.0
    %1399 = vmatpush1.msra.mxu0 0.0
    %1400 = vmatprep.subr.mxu0 0.0
    %1401 = vmatpush1.msra.mxu0 0.0
    %1402 = vmatprep.subr.mxu0 0.0
    %1403 = vmatpush1.msra.mxu0 0.0
    %1404 = vmatprep.subr.mxu0 0.0
    %1405 = vmatpush1.msra.mxu0 0.0
    %1406 = vmatprep.subr.mxu0 0.0
    %1407 = vmatpush1.msra.mxu0 0.0
    %1408 = vmatprep.subr.mxu0 0.0
    %1409 = vmatpush1.msra.mxu0 0.0
    %1410 = vmatprep.subr.mxu0 0.0
    %1411 = vmatpush1.msra.mxu0 0.0
    %1412 = vmatprep.subr.mxu0 0.0
    %1413 = vmatpush1.msra.mxu0 0.0
    %1414 = vmatprep.subr.mxu0 0.0
    %1415 = vmatpush1.msra.mxu0 0.0
    %1416 = vmatprep.subr.mxu0 0.0
    %1417 = vmatpush1.msra.mxu0 0.0
    %1418 = vmatprep.subr.mxu0 0.0
    %1419 = vmatpush1.msra.mxu0 0.0
    %1420 = vmatprep.subr.mxu0 0.0
    %1421 = vmatpush1.msra.mxu0 0.0
    %1422 = vmatprep.subr.mxu0 0.0
    %1423 = vmatpush1.msra.mxu0 0.0
    %1424 = vmatprep.subr.mxu0 0.0
    %1425 = vmatpush1.msra.mxu0 0.0
    %1426 = vmatprep.subr.mxu0 0.0
    %1427 = vmatpush1.msra.mxu0 0.0
    %1428 = vmatprep.subr.mxu0 0.0
    %1429 = vmatpush1.msra.mxu0 0.0
    %1430 = vmatprep.subr.mxu0 0.0
    %1431 = vmatpush1.msra.mxu0 0.0
    %1432 = vmatprep.subr.mxu0 0.0
    %1433 = vmatpush1.msra.mxu0 0.0
    %1434 = vmatprep.subr.mxu0 0.0
    %1435 = vmatpush1.msra.mxu0 0.0
    %1436 = vmatprep.subr.mxu0 0.0
    %1437 = vmatpush1.msra.mxu0 0.0
    %1438 = vmatprep.subr.mxu0 0.0
    %1439 = vmatpush1.msra.mxu0 0.0
    %1440 = vmatprep.subr.mxu0 0.0
    %1441 = vmatpush1.msra.mxu0 0.0
    %1442 = vmatprep.subr.mxu0 0.0
    %1443 = vmatpush1.msra.mxu0 0.0
    %1444 = vmatprep.subr.mxu0 0.0
    %1445 = vmatpush1.msra.mxu0 0.0
    %1446 = vmatprep.subr.mxu0 0.0
    %1447 = vmatpush1.msra.mxu0 0.0
    %1448 = vmatprep.subr.mxu0 0.0
    %1449 = vmatpush1.msra.mxu0 0.0
    %1450 = vmatprep.subr.mxu0 0.0
    %1451 = vmatpush1.msra.mxu0 0.0
    %1452 = vmatprep.subr.mxu0 0.0
    %1453 = vmatpush1.msra.mxu0 0.0
    %1454 = vmatprep.subr.mxu0 0.0
    %1455 = vmatpush1.msra.mxu0 0.0
    %1456 = vmatprep.subr.mxu0 0.0
    %1457 = vmatpush1.msra.mxu0 0.0
    %1458 = vmatprep.mubr.f32.mxu0 0.0
    %1459 = vmatmul.mubr.f32.gmra.mrb[0].mxu0 %v1392
    %v1460 = vpop.f32.mrb[0].mxu0
    %v1461 = vadd.f32 0.0, %v1460
    %v1462 = vpop.f32.mrb[0].mxu0
    %1463 = vdwg.mxu0
    %1464 = vrot.lane.b32.xlu0 %v207, 40
    %v1465 = vpop.permute.xlu0 %1464
    %v1468 = vsel %vm213, %v1384, 0
    %1470 = vmatprep.subr.mxu0 0.0
    %1471 = vmatpush1.msra.mxu0 %v1465
    %1472 = vmatprep.subr.mxu0 0.0
    %1473 = vmatpush1.msra.mxu0 0.0
    %1474 = vmatprep.subr.mxu0 0.0
    %1475 = vmatpush1.msra.mxu0 0.0
    %1476 = vmatprep.subr.mxu0 0.0
    %1477 = vmatpush1.msra.mxu0 0.0
    %1478 = vmatprep.subr.mxu0 0.0
    %1479 = vmatpush1.msra.mxu0 0.0
    %1480 = vmatprep.subr.mxu0 0.0
    %1481 = vmatpush1.msra.mxu0 0.0
    %1482 = vmatprep.subr.mxu0 0.0
    %1483 = vmatpush1.msra.mxu0 0.0
    %1484 = vmatprep.subr.mxu0 0.0
    %1485 = vmatpush1.msra.mxu0 0.0
    %1486 = vmatprep.subr.mxu0 0.0
    %1487 = vmatpush1.msra.mxu0 0.0
    %1488 = vmatprep.subr.mxu0 0.0
    %1489 = vmatpush1.msra.mxu0 0.0
    %1490 = vmatprep.subr.mxu0 0.0
    %1491 = vmatpush1.msra.mxu0 0.0
    %1492 = vmatprep.subr.mxu0 0.0
    %1493 = vmatpush1.msra.mxu0 0.0
    %1494 = vmatprep.subr.mxu0 0.0
    %1495 = vmatpush1.msra.mxu0 0.0
    %1496 = vmatprep.subr.mxu0 0.0
    %1497 = vmatpush1.msra.mxu0 0.0
    %1498 = vmatprep.subr.mxu0 0.0
    %1499 = vmatpush1.msra.mxu0 0.0
    %1500 = vmatprep.subr.mxu0 0.0
    %1501 = vmatpush1.msra.mxu0 0.0
    %1502 = vmatprep.subr.mxu0 0.0
    %1503 = vmatpush1.msra.mxu0 0.0
    %1504 = vmatprep.subr.mxu0 0.0
    %1505 = vmatpush1.msra.mxu0 0.0
    %1506 = vmatprep.subr.mxu0 0.0
    %1507 = vmatpush1.msra.mxu0 0.0
    %1508 = vmatprep.subr.mxu0 0.0
    %1509 = vmatpush1.msra.mxu0 0.0
    %1510 = vmatprep.subr.mxu0 0.0
    %1511 = vmatpush1.msra.mxu0 0.0
    %1512 = vmatprep.subr.mxu0 0.0
    %1513 = vmatpush1.msra.mxu0 0.0
    %1514 = vmatprep.subr.mxu0 0.0
    %1515 = vmatpush1.msra.mxu0 0.0
    %1516 = vmatprep.subr.mxu0 0.0
    %1517 = vmatpush1.msra.mxu0 0.0
    %1518 = vmatprep.subr.mxu0 0.0
    %1519 = vmatpush1.msra.mxu0 0.0
    %1520 = vmatprep.subr.mxu0 0.0
    %1521 = vmatpush1.msra.mxu0 0.0
    %1522 = vmatprep.subr.mxu0 0.0
    %1523 = vmatpush1.msra.mxu0 0.0
    %1524 = vmatprep.subr.mxu0 0.0
    %1525 = vmatpush1.msra.mxu0 0.0
    %1526 = vmatprep.subr.mxu0 0.0
    %1527 = vmatpush1.msra.mxu0 0.0
    %1528 = vmatprep.subr.mxu0 0.0
    %1529 = vmatpush1.msra.mxu0 0.0
    %1530 = vmatprep.subr.mxu0 0.0
    %1531 = vmatpush1.msra.mxu0 0.0
    %1532 = vmatprep.subr.mxu0 0.0
    %1533 = vmatpush1.msra.mxu0 0.0
    %1534 = vmatprep.mubr.f32.mxu0 0.0
    %1535 = vmatmul.mubr.f32.gmra.mrb[0].mxu0 %v1468
    %v1536 = vpop.f32.mrb[0].mxu0
    %v1537 = vadd.f32 0.0, %v1536
    %v1538 = vpop.f32.mrb[0].mxu0
    %1539 = vdwg.mxu0
    %1542 = vrot.lane.b32.xlu0 %v795, 8
    %v1543 = vpop.permute.xlu0 %1542
    %1544 = vrot.lane.b32.xlu0 %v871, 8
    %v1545 = vpop.permute.xlu0 %1544
    %1550 = vrot.lane.b32.xlu0 %v1128, 16
    %v1551 = vpop.permute.xlu0 %1550
    %1552 = vrot.lane.b32.xlu0 %v1204, 16
    %v1553 = vpop.permute.xlu0 %1552
    %1558 = vrot.lane.b32.xlu0 %v1461, 24
    %v1559 = vpop.permute.xlu0 %1558
    %1560 = vrot.lane.b32.xlu0 %v1537, 24
    %v1561 = vpop.permute.xlu0 %1560
    %v1564 = vsel %vm213, %v462, %v1543
    %v1565 = vsel %vm213, %v538, %v1545
    %vm1566 = vcmask 130048
    %v1567 = vsel %vm1566, %v1564, %v1551
    %v1568 = vsel %vm1566, %v1565, %v1553
    %vm1569 = vcmask 195584
    %v1570 = vsel %vm1569, %v1567, %v1559
    %v1571 = vsel %vm1569, %v1568, %v1561
    %v1572 = vld [vmem:[#allocation7] sm:$0xff]
    %v1573 = vld [vmem:[#allocation7 + $0x8] sm:$0xff]
    %v1574 = vld [vmem:[#allocation7 + $0x10] sm:$0xff]
    %v1575 = vld [vmem:[#allocation7 + $0x18] sm:$0xff]
    %v1576 = vld [vmem:[%s4] sm:$0x1]
    %v1578 = vlaneseq
    %v1579 = vshrl.u32 %v1578, 7
    %v1580 = vsub.s32 0, %v1579
    %v1581 = vrot.slane %v1576, %v1580
    %v1584 = vsel %vm128, %v1570, 0
    %v1587 = vsel %vm128, %v1571, 0
    %1589 = vmatprep.subr.mxu0 0.0
    %1590 = vmatpush1.msra.mxu0 %v1572
    %1591 = vmatprep.subr.mxu0 0.0
    %1592 = vmatpush1.msra.mxu0 %v1573
    %1593 = vmatprep.subr.mxu0 0.0
    %1594 = vmatpush1.msra.mxu0 %v1574
    %1595 = vmatprep.subr.mxu0 0.0
    %1596 = vmatpush1.msra.mxu0 %v1575
    %1597 = vmatprep.subr.mxu0 0.0
    %1598 = vmatpush1.msra.mxu0 0.0
    %1599 = vmatprep.subr.mxu0 0.0
    %1600 = vmatpush1.msra.mxu0 0.0
    %1601 = vmatprep.subr.mxu0 0.0
    %1602 = vmatpush1.msra.mxu0 0.0
    %1603 = vmatprep.subr.mxu0 0.0
    %1604 = vmatpush1.msra.mxu0 0.0
    %1605 = vmatprep.subr.mxu0 0.0
    %1606 = vmatpush1.msra.mxu0 0.0
    %1607 = vmatprep.subr.mxu0 0.0
    %1608 = vmatpush1.msra.mxu0 0.0
    %1609 = vmatprep.subr.mxu0 0.0
    %1610 = vmatpush1.msra.mxu0 0.0
    %1611 = vmatprep.subr.mxu0 0.0
    %1612 = vmatpush1.msra.mxu0 0.0
    %1613 = vmatprep.subr.mxu0 0.0
    %1614 = vmatpush1.msra.mxu0 0.0
    %1615 = vmatprep.subr.mxu0 0.0
    %1616 = vmatpush1.msra.mxu0 0.0
    %1617 = vmatprep.subr.mxu0 0.0
    %1618 = vmatpush1.msra.mxu0 0.0
    %1619 = vmatprep.subr.mxu0 0.0
    %1620 = vmatpush1.msra.mxu0 0.0
    %1621 = vmatprep.subr.mxu0 0.0
    %1622 = vmatpush1.msra.mxu0 0.0
    %1623 = vmatprep.subr.mxu0 0.0
    %1624 = vmatpush1.msra.mxu0 0.0
    %1625 = vmatprep.subr.mxu0 0.0
    %1626 = vmatpush1.msra.mxu0 0.0
    %1627 = vmatprep.subr.mxu0 0.0
    %1628 = vmatpush1.msra.mxu0 0.0
    %1629 = vmatprep.subr.mxu0 0.0
    %1630 = vmatpush1.msra.mxu0 0.0
    %1631 = vmatprep.subr.mxu0 0.0
    %1632 = vmatpush1.msra.mxu0 0.0
    %1633 = vmatprep.subr.mxu0 0.0
    %1634 = vmatpush1.msra.mxu0 0.0
    %1635 = vmatprep.subr.mxu0 0.0
    %1636 = vmatpush1.msra.mxu0 0.0
    %1637 = vmatprep.subr.mxu0 0.0
    %1638 = vmatpush1.msra.mxu0 0.0
    %1639 = vmatprep.subr.mxu0 0.0
    %1640 = vmatpush1.msra.mxu0 0.0
    %1641 = vmatprep.subr.mxu0 0.0
    %1642 = vmatpush1.msra.mxu0 0.0
    %1643 = vmatprep.subr.mxu0 0.0
    %1644 = vmatpush1.msra.mxu0 0.0
    %1645 = vmatprep.subr.mxu0 0.0
    %1646 = vmatpush1.msra.mxu0 0.0
    %1647 = vmatprep.subr.mxu0 0.0
    %1648 = vmatpush1.msra.mxu0 0.0
    %1649 = vmatprep.subr.mxu0 0.0
    %1650 = vmatpush1.msra.mxu0 0.0
    %1651 = vmatprep.subr.mxu0 0.0
    %1652 = vmatpush1.msra.mxu0 0.0
    %1653 = vmatprep.mubr.f32.mxu0 0.0
    %1654 = vmatmul.mubr.f32.gmra.mrb[0].mxu0 %v1584
    %v1655 = vpop.f32.mrb[0].mxu0
    %v1656 = vadd.f32 %v1581, %v1655
    %v1657 = vpop.f32.mrb[0].mxu0
    %1658 = vmatprep.mubr.f32.mxu0 0.0
    %1659 = vmatmul.mubr.f32.gmra.mrb[0].mxu0 %v1587
    %v1660 = vpop.f32.mrb[0].mxu0
    %v1661 = vadd.f32 %v1581, %v1660
    %v1662 = vpop.f32.mrb[0].mxu0
    %1663 = vdwg.mxu0
    %v1664 = vadd.f32 %v115, %v1656
    %v1665 = vadd.f32 %v116, %v1661
    %v1666 = vld [vmem:[%s5] sm:$0x1]
    %v1667 = vld [vmem:[%s6] sm:$0x1]
    %v1668 = vsel %vm128, %v1664, 0.0
    %1669 = vadd.xlane.f32.xlu0 %v1668
    %v1670 = vpop.xlane.xlu0 %1669
    %v1671 = vsel %vm128, %v1665, 0.0
    %1672 = vadd.xlane.f32.xlu0 %v1671
    %v1673 = vpop.xlane.xlu0 %1672
    %v1674 = vrcp.pop 32.0
    %v1675 = vmul.f32 %v1670, %v1674
    %v1676 = vmul.f32 %v1673, %v1674
    %v1677 = vsub.f32 %v1664, %v1675
    %v1678 = vsub.f32 %v1665, %v1676
    %v1679 = vmul.f32 %v1677, %v1677
    %v1680 = vmul.f32 %v1678, %v1678
    %v1681 = vsel %vm128, %v1679, 0.0
    %1682 = vadd.xlane.f32.xlu0 %v1681
    %v1683 = vpop.xlane.xlu0 %1682
    %v1684 = vsel %vm128, %v1680, 0.0
    %1685 = vadd.xlane.f32.xlu0 %v1684
    %v1686 = vpop.xlane.xlu0 %1685
    %v1687 = vmul.f32 %v1683, %v1674
    %v1688 = vmul.f32 %v1686, %v1674
    %v1689 = vadd.f32 %v1687, 1e-05
    %v1690 = vadd.f32 %v1688, 1e-05
    %v1691 = vrsqrt.pop %v1689
    %v1692 = vrsqrt.pop %v1690
    %v1693 = vmul.f32 %v1677, %v1691
    %v1694 = vmul.f32 %v1678, %v1692
    %v1696 = vlaneseq
    %v1697 = vshrl.u32 %v1696, 7
    %v1698 = vsub.s32 0, %v1697
    %v1699 = vrot.slane %v1666, %v1698
    %v1701 = vmul.f32 %v1693, %v1699
    %v1702 = vmul.f32 %v1694, %v1699
    %v1704 = vlaneseq
    %v1705 = vshrl.u32 %v1704, 7
    %v1706 = vsub.s32 0, %v1705
    %v1707 = vrot.slane %v1667, %v1706
    %v1709 = vadd.f32 %v1701, %v1707
    %v1710 = vadd.f32 %v1702, %v1707
    %v1711 = vld [vmem:[#allocation8] sm:$0xff]
    %v1712 = vld [vmem:[#allocation8 + $0x8] sm:$0xff]
    %v1713 = vld [vmem:[#allocation8 + $0x10] sm:$0xff]
    %v1714 = vld [vmem:[#allocation8 + $0x18] sm:$0xff]
    %v1715 = vld [vmem:[%s8] sm:$0x1]
    %v1717 = vlaneseq
    %v1718 = vshrl.u32 %v1717, 7
    %v1719 = vsub.s32 0, %v1718
    %v1720 = vrot.slane %v1715, %v1719
    %v1723 = vsel %vm128, %v1709, 0
    %v1726 = vsel %vm128, %v1710, 0
    %1728 = vmatprep.subr.mxu0 0.0
    %1729 = vmatpush1.msra.mxu0 %v1711
    %1730 = vmatprep.subr.mxu0 0.0
    %1731 = vmatpush1.msra.mxu0 %v1712
    %1732 = vmatprep.subr.mxu0 0.0
    %1733 = vmatpush1.msra.mxu0 %v1713
    %1734 = vmatprep.subr.mxu0 0.0
    %1735 = vmatpush1.msra.mxu0 %v1714
    %1736 = vmatprep.subr.mxu0 0.0
    %1737 = vmatpush1.msra.mxu0 0.0
    %1738 = vmatprep.subr.mxu0 0.0
    %1739 = vmatpush1.msra.mxu0 0.0
    %1740 = vmatprep.subr.mxu0 0.0
    %1741 = vmatpush1.msra.mxu0 0.0
    %1742 = vmatprep.subr.mxu0 0.0
    %1743 = vmatpush1.msra.mxu0 0.0
    %1744 = vmatprep.subr.mxu0 0.0
    %1745 = vmatpush1.msra.mxu0 0.0
    %1746 = vmatprep.subr.mxu0 0.0
    %1747 = vmatpush1.msra.mxu0 0.0
    %1748 = vmatprep.subr.mxu0 0.0
    %1749 = vmatpush1.msra.mxu0 0.0
    %1750 = vmatprep.subr.mxu0 0.0
    %1751 = vmatpush1.msra.mxu0 0.0
    %1752 = vmatprep.subr.mxu0 0.0
    %1753 = vmatpush1.msra.mxu0 0.0
    %1754 = vmatprep.subr.mxu0 0.0
    %1755 = vmatpush1.msra.mxu0 0.0
    %1756 = vmatprep.subr.mxu0 0.0
    %1757 = vmatpush1.msra.mxu0 0.0
    %1758 = vmatprep.subr.mxu0 0.0
    %1759 = vmatpush1.msra.mxu0 0.0
    %1760 = vmatprep.subr.mxu0 0.0
    %1761 = vmatpush1.msra.mxu0 0.0
    %1762 = vmatprep.subr.mxu0 0.0
    %1763 = vmatpush1.msra.mxu0 0.0
    %1764 = vmatprep.subr.mxu0 0.0
    %1765 = vmatpush1.msra.mxu0 0.0
    %1766 = vmatprep.subr.mxu0 0.0
    %1767 = vmatpush1.msra.mxu0 0.0
    %1768 = vmatprep.subr.mxu0 0.0
    %1769 = vmatpush1.msra.mxu0 0.0
    %1770 = vmatprep.subr.mxu0 0.0
    %1771 = vmatpush1.msra.mxu0 0.0
    %1772 = vmatprep.subr.mxu0 0.0
    %1773 = vmatpush1.msra.mxu0 0.0
    %1774 = vmatprep.subr.mxu0 0.0
    %1775 = vmatpush1.msra.mxu0 0.0
    %1776 = vmatprep.subr.mxu0 0.0
    %1777 = vmatpush1.msra.mxu0 0.0
    %1778 = vmatprep.subr.mxu0 0.0
    %1779 = vmatpush1.msra.mxu0 0.0
    %1780 = vmatprep.subr.mxu0 0.0
    %1781 = vmatpush1.msra.mxu0 0.0
    %1782 = vmatprep.subr.mxu0 0.0
    %1783 = vmatpush1.msra.mxu0 0.0
    %1784 = vmatprep.subr.mxu0 0.0
    %1785 = vmatpush1.msra.mxu0 0.0
    %1786 = vmatprep.subr.mxu0 0.0
    %1787 = vmatpush1.msra.mxu0 0.0
    %1788 = vmatprep.subr.mxu0 0.0
    %1789 = vmatpush1.msra.mxu0 0.0
    %1790 = vmatprep.subr.mxu0 0.0
    %1791 = vmatpush1.msra.mxu0 0.0
    %1792 = vmatprep.mubr.f32.mxu0 0.0
    %1793 = vmatmul.mubr.f32.gmra.mrb[0].mxu0 %v1723
    %v1794 = vpop.f32.mrb[0].mxu0
    %v1795 = vadd.f32 %v1720, %v1794
    %v1796 = vpop.f32.mrb[0].mxu0
    %1797 = vmatprep.mubr.f32.mxu0 0.0
    %1798 = vmatmul.mubr.f32.gmra.mrb[0].mxu0 %v1726
    %v1799 = vpop.f32.mrb[0].mxu0
    %v1800 = vadd.f32 %v1720, %v1799
    %v1801 = vpop.f32.mrb[0].mxu0
    %1802 = vdwg.mxu0
    %v1803 = vmax.f32 %v1795, 0.0
    %v1804 = vmax.f32 %v1800, 0.0
    %v1805 = vld [vmem:[#allocation10] sm:$0xff]
    %v1806 = vld [vmem:[#allocation10 + $0x8] sm:$0xff]
    %v1807 = vld [vmem:[#allocation10 + $0x10] sm:$0xff]
    %v1808 = vld [vmem:[#allocation10 + $0x18] sm:$0xff]
    %v1809 = vld [vmem:[#allocation10 + $0x20] sm:$0xff]
    %v1810 = vld [vmem:[#allocation10 + $0x28] sm:$0xff]
    %v1811 = vld [vmem:[#allocation10 + $0x30] sm:$0xff]
    %v1812 = vld [vmem:[#allocation10 + $0x38] sm:$0xff]
    %v1813 = vld [vmem:[%s10] sm:$0x1]
    %v1815 = vlaneseq
    %v1816 = vshrl.u32 %v1815, 7
    %v1817 = vsub.s32 0, %v1816
    %v1818 = vrot.slane %v1813, %v1817
    %vm1820 = vcmask 523264
    %v1822 = vsel %vm1820, %v1803, 0
    %v1825 = vsel %vm1820, %v1804, 0
    %1827 = vmatprep.subr.mxu0 0.0
    %1828 = vmatpush1.msra.mxu0 %v1805
    %1829 = vmatprep.subr.mxu0 0.0
    %1830 = vmatpush1.msra.mxu0 %v1806
    %1831 = vmatprep.subr.mxu0 0.0
    %1832 = vmatpush1.msra.mxu0 %v1807
    %1833 = vmatprep.subr.mxu0 0.0
    %1834 = vmatpush1.msra.mxu0 %v1808
    %1835 = vmatprep.subr.mxu0 0.0
    %1836 = vmatpush1.msra.mxu0 %v1809
    %1837 = vmatprep.subr.mxu0 0.0
    %1838 = vmatpush1.msra.mxu0 %v1810
    %1839 = vmatprep.subr.mxu0 0.0
    %1840 = vmatpush1.msra.mxu0 %v1811
    %1841 = vmatprep.subr.mxu0 0.0
    %1842 = vmatpush1.msra.mxu0 %v1812
    %1843 = vmatprep.subr.mxu0 0.0
    %1844 = vmatpush1.msra.mxu0 0.0
    %1845 = vmatprep.subr.mxu0 0.0
    %1846 = vmatpush1.msra.mxu0 0.0
    %1847 = vmatprep.subr.mxu0 0.0
    %1848 = vmatpush1.msra.mxu0 0.0
    %1849 = vmatprep.subr.mxu0 0.0
    %1850 = vmatpush1.msra.mxu0 0.0
    %1851 = vmatprep.subr.mxu0 0.0
    %1852 = vmatpush1.msra.mxu0 0.0
    %1853 = vmatprep.subr.mxu0 0.0
    %1854 = vmatpush1.msra.mxu0 0.0
    %1855 = vmatprep.subr.mxu0 0.0
    %1856 = vmatpush1.msra.mxu0 0.0
    %1857 = vmatprep.subr.mxu0 0.0
    %1858 = vmatpush1.msra.mxu0 0.0
    %1859 = vmatprep.subr.mxu0 0.0
    %1860 = vmatpush1.msra.mxu0 0.0
    %1861 = vmatprep.subr.mxu0 0.0
    %1862 = vmatpush1.msra.mxu0 0.0
    %1863 = vmatprep.subr.mxu0 0.0
    %1864 = vmatpush1.msra.mxu0 0.0
    %1865 = vmatprep.subr.mxu0 0.0
    %1866 = vmatpush1.msra.mxu0 0.0
    %1867 = vmatprep.subr.mxu0 0.0
    %1868 = vmatpush1.msra.mxu0 0.0
    %1869 = vmatprep.subr.mxu0 0.0
    %1870 = vmatpush1.msra.mxu0 0.0
    %1871 = vmatprep.subr.mxu0 0.0
    %1872 = vmatpush1.msra.mxu0 0.0
    %1873 = vmatprep.subr.mxu0 0.0
    %1874 = vmatpush1.msra.mxu0 0.0
    %1875 = vmatprep.subr.mxu0 0.0
    %1876 = vmatpush1.msra.mxu0 0.0
    %1877 = vmatprep.subr.mxu0 0.0
    %1878 = vmatpush1.msra.mxu0 0.0
    %1879 = vmatprep.subr.mxu0 0.0
    %1880 = vmatpush1.msra.mxu0 0.0
    %1881 = vmatprep.subr.mxu0 0.0
    %1882 = vmatpush1.msra.mxu0 0.0
    %1883 = vmatprep.subr.mxu0 0.0
    %1884 = vmatpush1.msra.mxu0 0.0
    %1885 = vmatprep.subr.mxu0 0.0
    %1886 = vmatpush1.msra.mxu0 0.0
    %1887 = vmatprep.subr.mxu0 0.0
    %1888 = vmatpush1.msra.mxu0 0.0
    %1889 = vmatprep.subr.mxu0 0.0
    %1890 = vmatpush1.msra.mxu0 0.0
    %1891 = vmatprep.mubr.f32.mxu0 0.0
    %1892 = vmatmul.mubr.f32.gmra.mrb[0].mxu0 %v1822
    %v1893 = vpop.f32.mrb[0].mxu0
    %v1894 = vadd.f32 %v1818, %v1893
    %v1895 = vpop.f32.mrb[0].mxu0
    %1896 = vmatprep.mubr.f32.mxu0 0.0
    %1897 = vmatmul.mubr.f32.gmra.mrb[0].mxu0 %v1825
    %v1898 = vpop.f32.mrb[0].mxu0
    %v1899 = vadd.f32 %v1818, %v1898
    %v1900 = vpop.f32.mrb[0].mxu0
    %1901 = vdwg.mxu0
    %v1902 = vadd.f32 %v1709, %v1894
    %v1903 = vadd.f32 %v1710, %v1899
    %v1904 = vld [vmem:[%s11] sm:$0x1]
    %v1905 = vld [vmem:[%s12] sm:$0x1]
    %v1906 = vsel %vm128, %v1902, 0.0
    %1907 = vadd.xlane.f32.xlu0 %v1906
    %v1908 = vpop.xlane.xlu0 %1907
    %v1909 = vsel %vm128, %v1903, 0.0
    %1910 = vadd.xlane.f32.xlu0 %v1909
    %v1911 = vpop.xlane.xlu0 %1910
    %v1912 = vmul.f32 %v1908, %v1674
    %v1913 = vmul.f32 %v1911, %v1674
    %v1914 = vsub.f32 %v1902, %v1912
    %v1915 = vsub.f32 %v1903, %v1913
    %v1916 = vmul.f32 %v1914, %v1914
    %v1917 = vmul.f32 %v1915, %v1915
    %v1918 = vsel %vm128, %v1916, 0.0
    %1919 = vadd.xlane.f32.xlu0 %v1918
    %v1920 = vpop.xlane.xlu0 %1919
    %v1921 = vsel %vm128, %v1917, 0.0
    %1922 = vadd.xlane.f32.xlu0 %v1921
    %v1923 = vpop.xlane.xlu0 %1922
    %v1924 = vmul.f32 %v1920, %v1674
    %v1925 = vmul.f32 %v1923, %v1674
    %v1926 = vadd.f32 %v1924, 1e-05
    %v1927 = vadd.f32 %v1925, 1e-05
    %v1928 = vrsqrt.pop %v1926
    %v1929 = vrsqrt.pop %v1927
    %v1930 = vmul.f32 %v1914, %v1928
    %v1931 = vmul.f32 %v1915, %v1929
    %v1933 = vlaneseq
    %v1934 = vshrl.u32 %v1933, 7
    %v1935 = vsub.s32 0, %v1934
    %v1936 = vrot.slane %v1904, %v1935
    %v1938 = vmul.f32 %v1930, %v1936
    %v1939 = vmul.f32 %v1931, %v1936
    %v1941 = vlaneseq
    %v1942 = vshrl.u32 %v1941, 7
    %v1943 = vsub.s32 0, %v1942
    %v1944 = vrot.slane %v1905, %v1943
    %v1946 = vadd.f32 %v1938, %v1944
    %v1947 = vadd.f32 %v1939, %v1944
    %s1948 = scalar_lea.vmem [#allocation5], 32
    %v1949 = vld [vmem:[%s1948] sm:$0xff]
    %v1950 = vld [vmem:[%s1948 + $0x8] sm:$0xff]
    %v1951 = vld [vmem:[%s1948 + $0x10] sm:$0xff]
    %v1952 = vld [vmem:[%s1948 + $0x18] sm:$0xff]
    %s1953 = scalar_lea.vmem %s2, 1
    %v1954 = vld [vmem:[%s1953] sm:$0x1]
    %v1956 = vlaneseq
    %v1957 = vshrl.u32 %v1956, 7
    %v1958 = vsub.s32 0, %v1957
    %v1959 = vrot.slane %v1954, %v1958
    %v1962 = vsel %vm128, %v1946, 0
    %v1965 = vsel %vm128, %v1947, 0
    %1967 = vmatprep.subr.mxu0 0.0
    %1968 = vmatpush1.msra.mxu0 %v1949
    %1969 = vmatprep.subr.mxu0 0.0
    %1970 = vmatpush1.msra.mxu0 %v1950
    %1971 = vmatprep.subr.mxu0 0.0
    %1972 = vmatpush1.msra.mxu0 %v1951
    %1973 = vmatprep.subr.mxu0 0.0
    %1974 = vmatpush1.msra.mxu0 %v1952
    %1975 = vmatprep.subr.mxu0 0.0
    %1976 = vmatpush1.msra.mxu0 0.0
    %1977 = vmatprep.subr.mxu0 0.0
    %1978 = vmatpush1.msra.mxu0 0.0
    %1979 = vmatprep.subr.mxu0 0.0
    %1980 = vmatpush1.msra.mxu0 0.0
    %1981 = vmatprep.subr.mxu0 0.0
    %1982 = vmatpush1.msra.mxu0 0.0
    %1983 = vmatprep.subr.mxu0 0.0
    %1984 = vmatpush1.msra.mxu0 0.0
    %1985 = vmatprep.subr.mxu0 0.0
    %1986 = vmatpush1.msra.mxu0 0.0
    %1987 = vmatprep.subr.mxu0 0.0
    %1988 = vmatpush1.msra.mxu0 0.0
    %1989 = vmatprep.subr.mxu0 0.0
    %1990 = vmatpush1.msra.mxu0 0.0
    %1991 = vmatprep.subr.mxu0 0.0
    %1992 = vmatpush1.msra.mxu0 0.0
    %1993 = vmatprep.subr.mxu0 0.0
    %1994 = vmatpush1.msra.mxu0 0.0
    %1995 = vmatprep.subr.mxu0 0.0
    %1996 = vmatpush1.msra.mxu0 0.0
    %1997 = vmatprep.subr.mxu0 0.0
    %1998 = vmatpush1.msra.mxu0 0.0
    %1999 = vmatprep.subr.mxu0 0.0
    %2000 = vmatpush1.msra.mxu0 0.0
    %2001 = vmatprep.subr.mxu0 0.0
    %2002 = vmatpush1.msra.mxu0 0.0
    %2003 = vmatprep.subr.mxu0 0.0
    %2004 = vmatpush1.msra.mxu0 0.0
    %2005 = vmatprep.subr.mxu0 0.0
    %2006 = vmatpush1.msra.mxu0 0.0
    %2007 = vmatprep.subr.mxu0 0.0
    %2008 = vmatpush1.msra.mxu0 0.0
    %2009 = vmatprep.subr.mxu0 0.0
    %2010 = vmatpush1.msra.mxu0 0.0
    %2011 = vmatprep.subr.mxu0 0.0
    %2012 = vmatpush1.msra.mxu0 0.0
    %2013 = vmatprep.subr.mxu0 0.0
    %2014 = vmatpush1.msra.mxu0 0.0
    %2015 = vmatprep.subr.mxu0 0.0
    %2016 = vmatpush1.msra.mxu0 0.0
    %2017 = vmatprep.subr.mxu0 0.0
    %2018 = vmatpush1.msra.mxu0 0.0
    %2019 = vmatprep.subr.mxu0 0.0
    %2020 = vmatpush1.msra.mxu0 0.0
    %2021 = vmatprep.subr.mxu0 0.0
    %2022 = vmatpush1.msra.mxu0 0.0
    %2023 = vmatprep.subr.mxu0 0.0
    %2024 = vmatpush1.msra.mxu0 0.0
    %2025 = vmatprep.subr.mxu0 0.0
    %2026 = vmatpush1.msra.mxu0 0.0
    %2027 = vmatprep.subr.mxu0 0.0
    %2028 = vmatpush1.msra.mxu0 0.0
    %2029 = vmatprep.subr.mxu0 0.0
    %2030 = vmatpush1.msra.mxu0 0.0
    %2031 = vmatprep.mubr.f32.mxu0 0.0
    %2032 = vmatmul.mubr.f32.gmra.mrb[0].mxu0 %v1962
    %v2033 = vpop.f32.mrb[0].mxu0
    %v2034 = vadd.f32 %v1959, %v2033
    %v2035 = vpop.f32.mrb[0].mxu0
    %2036 = vmatprep.mubr.f32.mxu0 0.0
    %2037 = vmatmul.mubr.f32.gmra.mrb[0].mxu0 %v1965
    %v2038 = vpop.f32.mrb[0].mxu0
    %v2039 = vadd.f32 %v1959, %v2038
    %v2040 = vpop.f32.mrb[0].mxu0
    %2041 = vdwg.mxu0
    %2043 = vrot.lane.b32.xlu0 %v2034, 96
    %v2044 = vpop.permute.xlu0 %2043
    %v2045 = vsel %vm213, %v2034, 0
    %v2047 = vsel %vm213, %v2044, 0
    %2049 = vmatprep.subr.mxu0 0.0
    %2050 = vmatpush1.xpose.msra.mxu0 %v2047
    %2051 = vmatprep.subr.mxu0 0.0
    %2052 = vmatpush1.xpose.msra.mxu0 0.0
    %2053 = vmatprep.subr.mxu0 0.0
    %2054 = vmatpush1.xpose.msra.mxu0 0.0
    %2055 = vmatprep.subr.mxu0 0.0
    %2056 = vmatpush1.xpose.msra.mxu0 0.0
    %2057 = vmatprep.subr.mxu0 0.0
    %2058 = vmatpush1.xpose.msra.mxu0 0.0
    %2059 = vmatprep.subr.mxu0 0.0
    %2060 = vmatpush1.xpose.msra.mxu0 0.0
    %2061 = vmatprep.subr.mxu0 0.0
    %2062 = vmatpush1.xpose.msra.mxu0 0.0
    %2063 = vmatprep.subr.mxu0 0.0
    %2064 = vmatpush1.xpose.msra.mxu0 0.0
    %2065 = vmatprep.subr.mxu0 0.0
    %2066 = vmatpush1.xpose.msra.mxu0 0.0
    %2067 = vmatprep.subr.mxu0 0.0
    %2068 = vmatpush1.xpose.msra.mxu0 0.0
    %2069 = vmatprep.subr.mxu0 0.0
    %2070 = vmatpush1.xpose.msra.mxu0 0.0
    %2071 = vmatprep.subr.mxu0 0.0
    %2072 = vmatpush1.xpose.msra.mxu0 0.0
    %2073 = vmatprep.subr.mxu0 0.0
    %2074 = vmatpush1.xpose.msra.mxu0 0.0
    %2075 = vmatprep.subr.mxu0 0.0
    %2076 = vmatpush1.xpose.msra.mxu0 0.0
    %2077 = vmatprep.subr.mxu0 0.0
    %2078 = vmatpush1.xpose.msra.mxu0 0.0
    %2079 = vmatprep.subr.mxu0 0.0
    %2080 = vmatpush1.xpose.msra.mxu0 0.0
    %2081 = vmatprep.subr.mxu0 0.0
    %2082 = vmatpush1.xpose.msra.mxu0 0.0
    %2083 = vmatprep.subr.mxu0 0.0
    %2084 = vmatpush1.xpose.msra.mxu0 0.0
    %2085 = vmatprep.subr.mxu0 0.0
    %2086 = vmatpush1.xpose.msra.mxu0 0.0
    %2087 = vmatprep.subr.mxu0 0.0
    %2088 = vmatpush1.xpose.msra.mxu0 0.0
    %2089 = vmatprep.subr.mxu0 0.0
    %2090 = vmatpush1.xpose.msra.mxu0 0.0
    %2091 = vmatprep.subr.mxu0 0.0
    %2092 = vmatpush1.xpose.msra.mxu0 0.0
    %2093 = vmatprep.subr.mxu0 0.0
    %2094 = vmatpush1.xpose.msra.mxu0 0.0
    %2095 = vmatprep.subr.mxu0 0.0
    %2096 = vmatpush1.xpose.msra.mxu0 0.0
    %2097 = vmatprep.subr.mxu0 0.0
    %2098 = vmatpush1.xpose.msra.mxu0 0.0
    %2099 = vmatprep.subr.mxu0 0.0
    %2100 = vmatpush1.xpose.msra.mxu0 0.0
    %2101 = vmatprep.subr.mxu0 0.0
    %2102 = vmatpush1.xpose.msra.mxu0 0.0
    %2103 = vmatprep.subr.mxu0 0.0
    %2104 = vmatpush1.xpose.msra.mxu0 0.0
    %2105 = vmatprep.subr.mxu0 0.0
    %2106 = vmatpush1.xpose.msra.mxu0 0.0
    %2107 = vmatprep.subr.mxu0 0.0
    %2108 = vmatpush1.xpose.msra.mxu0 0.0
    %2109 = vmatprep.subr.mxu0 0.0
    %2110 = vmatpush1.xpose.msra.mxu0 0.0
    %2111 = vmatprep.subr.mxu0 0.0
    %2112 = vmatpush1.xpose.msra.mxu0 0.0
    %2113 = vmatprep.mubr.f32.mxu0 0.0
    %2114 = vmatmul.mubr.f32.gmra.mrb[0].mxu0 %v2045
    %v2115 = vpop.f32.mrb[0].mxu0
    %v2116 = vadd.f32 0.0, %v2115
    %v2117 = vpop.f32.mrb[0].mxu0
    %2118 = vdwg.mxu0
    %2120 = vrot.lane.b32.xlu0 %v2039, 96
    %v2121 = vpop.permute.xlu0 %2120
    %v2122 = vsel %vm213, %v2039, 0
    %v2124 = vsel %vm213, %v2121, 0
    %2126 = vmatprep.subr.mxu0 0.0
    %2127 = vmatpush1.xpose.msra.mxu0 %v2124
    %2128 = vmatprep.subr.mxu0 0.0
    %2129 = vmatpush1.xpose.msra.mxu0 0.0
    %2130 = vmatprep.subr.mxu0 0.0
    %2131 = vmatpush1.xpose.msra.mxu0 0.0
    %2132 = vmatprep.subr.mxu0 0.0
    %2133 = vmatpush1.xpose.msra.mxu0 0.0
    %2134 = vmatprep.subr.mxu0 0.0
    %2135 = vmatpush1.xpose.msra.mxu0 0.0
    %2136 = vmatprep.subr.mxu0 0.0
    %2137 = vmatpush1.xpose.msra.mxu0 0.0
    %2138 = vmatprep.subr.mxu0 0.0
    %2139 = vmatpush1.xpose.msra.mxu0 0.0
    %2140 = vmatprep.subr.mxu0 0.0
    %2141 = vmatpush1.xpose.msra.mxu0 0.0
    %2142 = vmatprep.subr.mxu0 0.0
    %2143 = vmatpush1.xpose.msra.mxu0 0.0
    %2144 = vmatprep.subr.mxu0 0.0
    %2145 = vmatpush1.xpose.msra.mxu0 0.0
    %2146 = vmatprep.subr.mxu0 0.0
    %2147 = vmatpush1.xpose.msra.mxu0 0.0
    %2148 = vmatprep.subr.mxu0 0.0
    %2149 = vmatpush1.xpose.msra.mxu0 0.0
    %2150 = vmatprep.subr.mxu0 0.0
    %2151 = vmatpush1.xpose.msra.mxu0 0.0
    %2152 = vmatprep.subr.mxu0 0.0
    %2153 = vmatpush1.xpose.msra.mxu0 0.0
    %2154 = vmatprep.subr.mxu0 0.0
    %2155 = vmatpush1.xpose.msra.mxu0 0.0
    %2156 = vmatprep.subr.mxu0 0.0
    %2157 = vmatpush1.xpose.msra.mxu0 0.0
    %2158 = vmatprep.subr.mxu0 0.0
    %2159 = vmatpush1.xpose.msra.mxu0 0.0
    %2160 = vmatprep.subr.mxu0 0.0
    %2161 = vmatpush1.xpose.msra.mxu0 0.0
    %2162 = vmatprep.subr.mxu0 0.0
    %2163 = vmatpush1.xpose.msra.mxu0 0.0
    %2164 = vmatprep.subr.mxu0 0.0
    %2165 = vmatpush1.xpose.msra.mxu0 0.0
    %2166 = vmatprep.subr.mxu0 0.0
    %2167 = vmatpush1.xpose.msra.mxu0 0.0
    %2168 = vmatprep.subr.mxu0 0.0
    %2169 = vmatpush1.xpose.msra.mxu0 0.0
    %2170 = vmatprep.subr.mxu0 0.0
    %2171 = vmatpush1.xpose.msra.mxu0 0.0
    %2172 = vmatprep.subr.mxu0 0.0
    %2173 = vmatpush1.xpose.msra.mxu0 0.0
    %2174 = vmatprep.subr.mxu0 0.0
    %2175 = vmatpush1.xpose.msra.mxu0 0.0
    %2176 = vmatprep.subr.mxu0 0.0
    %2177 = vmatpush1.xpose.msra.mxu0 0.0
    %2178 = vmatprep.subr.mxu0 0.0
    %2179 = vmatpush1.xpose.msra.mxu0 0.0
    %2180 = vmatprep.subr.mxu0 0.0
    %2181 = vmatpush1.xpose.msra.mxu0 0.0
    %2182 = vmatprep.subr.mxu0 0.0
    %2183 = vmatpush1.xpose.msra.mxu0 0.0
    %2184 = vmatprep.subr.mxu0 0.0
    %2185 = vmatpush1.xpose.msra.mxu0 0.0
    %2186 = vmatprep.subr.mxu0 0.0
    %2187 = vmatpush1.xpose.msra.mxu0 0.0
    %2188 = vmatprep.subr.mxu0 0.0
    %2189 = vmatpush1.xpose.msra.mxu0 0.0
    %2190 = vmatprep.mubr.f32.mxu0 0.0
    %2191 = vmatmul.mubr.f32.gmra.mrb[0].mxu0 %v2122
    %v2192 = vpop.f32.mrb[0].mxu0
    %v2193 = vadd.f32 0.0, %v2192
    %v2194 = vpop.f32.mrb[0].mxu0
    %2195 = vdwg.mxu0
    %v2196 = vsel %vm213, %v2116, -inf
    %2197 = vmax.xlane.f32.xlu0 %v2196
    %v2198 = vpop.xlane.xlu0 %2197
    %v2199 = vsel %vm213, %v2193, -inf
    %2200 = vmax.xlane.f32.xlu0 %v2199
    %v2201 = vpop.xlane.xlu0 %2200
    %v2202 = vsub.f32 %v2116, %v2198
    %v2203 = vsub.f32 %v2193, %v2201
    %v2204 = vmul.f32 %v2202, 1.442695
    %v2205 = vpow.pop %v2204
    %v2206 = vmul.f32 %v2203, 1.442695
    %v2207 = vpow.pop %v2206
    %v2208 = vsel %vm213, %v2205, 0.0
    %2209 = vadd.xlane.f32.xlu0 %v2208
    %v2210 = vpop.xlane.xlu0 %2209
    %v2211 = vsel %vm213, %v2207, 0.0
    %2212 = vadd.xlane.f32.xlu0 %v2211
    %v2213 = vpop.xlane.xlu0 %2212
    %v2214 = vrcp.pop %v2210
    %v2215 = vrcp.pop %v2213
    %v2216 = vmul.f32 %v2205, %v2214
    %v2217 = vmul.f32 %v2207, %v2215
    %s2218 = scalar_lea.vmem %s14, 64
    %2219 = vst.msk [vmem:[%s2218] sm:$0xff] %vm213, %v2216
    %2220 = vst.msk [vmem:[%s2218 + $0x8] sm:$0xff] %vm213, %v2217
    %2221 = vrot.lane.b32.xlu0 %v2034, 64
    %v2222 = vpop.permute.xlu0 %2221
    %v2225 = vsel %vm213, %v2216, 0
    %2227 = vmatprep.subr.mxu0 0.0
    %2228 = vmatpush1.msra.mxu0 %v2222
    %2229 = vmatprep.subr.mxu0 0.0
    %2230 = vmatpush1.msra.mxu0 0.0
    %2231 = vmatprep.subr.mxu0 0.0
    %2232 = vmatpush1.msra.mxu0 0.0
    %2233 = vmatprep.subr.mxu0 0.0
    %2234 = vmatpush1.msra.mxu0 0.0
    %2235 = vmatprep.subr.mxu0 0.0
    %2236 = vmatpush1.msra.mxu0 0.0
    %2237 = vmatprep.subr.mxu0 0.0
    %2238 = vmatpush1.msra.mxu0 0.0
    %2239 = vmatprep.subr.mxu0 0.0
    %2240 = vmatpush1.msra.mxu0 0.0
    %2241 = vmatprep.subr.mxu0 0.0
    %2242 = vmatpush1.msra.mxu0 0.0
    %2243 = vmatprep.subr.mxu0 0.0
    %2244 = vmatpush1.msra.mxu0 0.0
    %2245 = vmatprep.subr.mxu0 0.0
    %2246 = vmatpush1.msra.mxu0 0.0
    %2247 = vmatprep.subr.mxu0 0.0
    %2248 = vmatpush1.msra.mxu0 0.0
    %2249 = vmatprep.subr.mxu0 0.0
    %2250 = vmatpush1.msra.mxu0 0.0
    %2251 = vmatprep.subr.mxu0 0.0
    %2252 = vmatpush1.msra.mxu0 0.0
    %2253 = vmatprep.subr.mxu0 0.0
    %2254 = vmatpush1.msra.mxu0 0.0
    %2255 = vmatprep.subr.mxu0 0.0
    %2256 = vmatpush1.msra.mxu0 0.0
    %2257 = vmatprep.subr.mxu0 0.0
    %2258 = vmatpush1.msra.mxu0 0.0
    %2259 = vmatprep.subr.mxu0 0.0
    %2260 = vmatpush1.msra.mxu0 0.0
    %2261 = vmatprep.subr.mxu0 0.0
    %2262 = vmatpush1.msra.mxu0 0.0
    %2263 = vmatprep.subr.mxu0 0.0
    %2264 = vmatpush1.msra.mxu0 0.0
    %2265 = vmatprep.subr.mxu0 0.0
    %2266 = vmatpush1.msra.mxu0 0.0
    %2267 = vmatprep.subr.mxu0 0.0
    %2268 = vmatpush1.msra.mxu0 0.0
    %2269 = vmatprep.subr.mxu0 0.0
    %2270 = vmatpush1.msra.mxu0 0.0
    %2271 = vmatprep.subr.mxu0 0.0
    %2272 = vmatpush1.msra.mxu0 0.0
    %2273 = vmatprep.subr.mxu0 0.0
    %2274 = vmatpush1.msra.mxu0 0.0
    %2275 = vmatprep.subr.mxu0 0.0
    %2276 = vmatpush1.msra.mxu0 0.0
    %2277 = vmatprep.subr.mxu0 0.0
    %2278 = vmatpush1.msra.mxu0 0.0
    %2279 = vmatprep.subr.mxu0 0.0
    %2280 = vmatpush1.msra.mxu0 0.0
    %2281 = vmatprep.subr.mxu0 0.0
    %2282 = vmatpush1.msra.mxu0 0.0
    %2283 = vmatprep.subr.mxu0 0.0
    %2284 = vmatpush1.msra.mxu0 0.0
    %2285 = vmatprep.subr.mxu0 0.0
    %2286 = vmatpush1.msra.mxu0 0.0
    %2287 = vmatprep.subr.mxu0 0.0
    %2288 = vmatpush1.msra.mxu0 0.0
    %2289 = vmatprep.subr.mxu0 0.0
    %2290 = vmatpush1.msra.mxu0 0.0
    %2291 = vmatprep.mubr.f32.mxu0 0.0
    %2292 = vmatmul.mubr.f32.gmra.mrb[0].mxu0 %v2225
    %v2293 = vpop.f32.mrb[0].mxu0
    %v2294 = vadd.f32 0.0, %v2293
    %v2295 = vpop.f32.mrb[0].mxu0
    %2296 = vdwg.mxu0
    %2297 = vrot.lane.b32.xlu0 %v2039, 64
    %v2298 = vpop.permute.xlu0 %2297
    %v2301 = vsel %vm213, %v2217, 0
    %2303 = vmatprep.subr.mxu0 0.0
    %2304 = vmatpush1.msra.mxu0 %v2298
    %2305 = vmatprep.subr.mxu0 0.0
    %2306 = vmatpush1.msra.mxu0 0.0
    %2307 = vmatprep.subr.mxu0 0.0
    %2308 = vmatpush1.msra.mxu0 0.0
    %2309 = vmatprep.subr.mxu0 0.0
    %2310 = vmatpush1.msra.mxu0 0.0
    %2311 = vmatprep.subr.mxu0 0.0
    %2312 = vmatpush1.msra.mxu0 0.0
    %2313 = vmatprep.subr.mxu0 0.0
    %2314 = vmatpush1.msra.mxu0 0.0
    %2315 = vmatprep.subr.mxu0 0.0
    %2316 = vmatpush1.msra.mxu0 0.0
    %2317 = vmatprep.subr.mxu0 0.0
    %2318 = vmatpush1.msra.mxu0 0.0
    %2319 = vmatprep.subr.mxu0 0.0
    %2320 = vmatpush1.msra.mxu0 0.0
    %2321 = vmatprep.subr.mxu0 0.0
    %2322 = vmatpush1.msra.mxu0 0.0
    %2323 = vmatprep.subr.mxu0 0.0
    %2324 = vmatpush1.msra.mxu0 0.0
    %2325 = vmatprep.subr.mxu0 0.0
    %2326 = vmatpush1.msra.mxu0 0.0
    %2327 = vmatprep.subr.mxu0 0.0
    %2328 = vmatpush1.msra.mxu0 0.0
    %2329 = vmatprep.subr.mxu0 0.0
    %2330 = vmatpush1.msra.mxu0 0.0
    %2331 = vmatprep.subr.mxu0 0.0
    %2332 = vmatpush1.msra.mxu0 0.0
    %2333 = vmatprep.subr.mxu0 0.0
    %2334 = vmatpush1.msra.mxu0 0.0
    %2335 = vmatprep.subr.mxu0 0.0
    %2336 = vmatpush1.msra.mxu0 0.0
    %2337 = vmatprep.subr.mxu0 0.0
    %2338 = vmatpush1.msra.mxu0 0.0
    %2339 = vmatprep.subr.mxu0 0.0
    %2340 = vmatpush1.msra.mxu0 0.0
    %2341 = vmatprep.subr.mxu0 0.0
    %2342 = vmatpush1.msra.mxu0 0.0
    %2343 = vmatprep.subr.mxu0 0.0
    %2344 = vmatpush1.msra.mxu0 0.0
    %2345 = vmatprep.subr.mxu0 0.0
    %2346 = vmatpush1.msra.mxu0 0.0
    %2347 = vmatprep.subr.mxu0 0.0
    %2348 = vmatpush1.msra.mxu0 0.0
    %2349 = vmatprep.subr.mxu0 0.0
    %2350 = vmatpush1.msra.mxu0 0.0
    %2351 = vmatprep.subr.mxu0 0.0
    %2352 = vmatpush1.msra.mxu0 0.0
    %2353 = vmatprep.subr.mxu0 0.0
    %2354 = vmatpush1.msra.mxu0 0.0
    %2355 = vmatprep.subr.mxu0 0.0
    %2356 = vmatpush1.msra.mxu0 0.0
    %2357 = vmatprep.subr.mxu0 0.0
    %2358 = vmatpush1.msra.mxu0 0.0
    %2359 = vmatprep.subr.mxu0 0.0
    %2360 = vmatpush1.msra.mxu0 0.0
    %2361 = vmatprep.subr.mxu0 0.0
    %2362 = vmatpush1.msra.mxu0 0.0
    %2363 = vmatprep.subr.mxu0 0.0
    %2364 = vmatpush1.msra.mxu0 0.0
    %2365 = vmatprep.subr.mxu0 0.0
    %2366 = vmatpush1.msra.mxu0 0.0
    %2367 = vmatprep.mubr.f32.mxu0 0.0
    %2368 = vmatmul.mubr.f32.gmra.mrb[0].mxu0 %v2301
    %v2369 = vpop.f32.mrb[0].mxu0
    %v2370 = vadd.f32 0.0, %v2369
    %v2371 = vpop.f32.mrb[0].mxu0
    %2372 = vdwg.mxu0
    %2373 = vrot.lane.b32.xlu0 %v2034, 120
    %v2374 = vpop.permute.xlu0 %2373
    %2375 = vrot.lane.b32.xlu0 %v2034, 88
    %v2376 = vpop.permute.xlu0 %2375
    %v2377 = vsel %vm213, %v2374, 0
    %v2379 = vsel %vm213, %v2376, 0
    %2381 = vmatprep.subr.mxu0 0.0
    %2382 = vmatpush1.xpose.msra.mxu0 %v2379
    %2383 = vmatprep.subr.mxu0 0.0
    %2384 = vmatpush1.xpose.msra.mxu0 0.0
    %2385 = vmatprep.subr.mxu0 0.0
    %2386 = vmatpush1.xpose.msra.mxu0 0.0
    %2387 = vmatprep.subr.mxu0 0.0
    %2388 = vmatpush1.xpose.msra.mxu0 0.0
    %2389 = vmatprep.subr.mxu0 0.0
    %2390 = vmatpush1.xpose.msra.mxu0 0.0
    %2391 = vmatprep.subr.mxu0 0.0
    %2392 = vmatpush1.xpose.msra.mxu0 0.0
    %2393 = vmatprep.subr.mxu0 0.0
    %2394 = vmatpush1.xpose.msra.mxu0 0.0
    %2395 = vmatprep.subr.mxu0 0.0
    %2396 = vmatpush1.xpose.msra.mxu0 0.0
    %2397 = vmatprep.subr.mxu0 0.0
    %2398 = vmatpush1.xpose.msra.mxu0 0.0
    %2399 = vmatprep.subr.mxu0 0.0
    %2400 = vmatpush1.xpose.msra.mxu0 0.0
    %2401 = vmatprep.subr.mxu0 0.0
    %2402 = vmatpush1.xpose.msra.mxu0 0.0
    %2403 = vmatprep.subr.mxu0 0.0
    %2404 = vmatpush1.xpose.msra.mxu0 0.0
    %2405 = vmatprep.subr.mxu0 0.0
    %2406 = vmatpush1.xpose.msra.mxu0 0.0
    %2407 = vmatprep.subr.mxu0 0.0
    %2408 = vmatpush1.xpose.msra.mxu0 0.0
    %2409 = vmatprep.subr.mxu0 0.0
    %2410 = vmatpush1.xpose.msra.mxu0 0.0
    %2411 = vmatprep.subr.mxu0 0.0
    %2412 = vmatpush1.xpose.msra.mxu0 0.0
    %2413 = vmatprep.subr.mxu0 0.0
    %2414 = vmatpush1.xpose.msra.mxu0 0.0
    %2415 = vmatprep.subr.mxu0 0.0
    %2416 = vmatpush1.xpose.msra.mxu0 0.0
    %2417 = vmatprep.subr.mxu0 0.0
    %2418 = vmatpush1.xpose.msra.mxu0 0.0
    %2419 = vmatprep.subr.mxu0 0.0
    %2420 = vmatpush1.xpose.msra.mxu0 0.0
    %2421 = vmatprep.subr.mxu0 0.0
    %2422 = vmatpush1.xpose.msra.mxu0 0.0
    %2423 = vmatprep.subr.mxu0 0.0
    %2424 = vmatpush1.xpose.msra.mxu0 0.0
    %2425 = vmatprep.subr.mxu0 0.0
    %2426 = vmatpush1.xpose.msra.mxu0 0.0
    %2427 = vmatprep.subr.mxu0 0.0
    %2428 = vmatpush1.xpose.msra.mxu0 0.0
    %2429 = vmatprep.subr.mxu0 0.0
    %2430 = vmatpush1.xpose.msra.mxu0 0.0
    %2431 = vmatprep.subr.mxu0 0.0
    %2432 = vmatpush1.xpose.msra.mxu0 0.0
    %2433 = vmatprep.subr.mxu0 0.0
    %2434 = vmatpush1.xpose.msra.mxu0 0.0
    %2435 = vmatprep.subr.mxu0 0.0
    %2436 = vmatpush1.xpose.msra.mxu0 0.0
    %2437 = vmatprep.subr.mxu0 0.0
    %2438 = vmatpush1.xpose.msra.mxu0 0.0
    %2439 = vmatprep.subr.mxu0 0.0
    %2440 = vmatpush1.xpose.msra.mxu0 0.0
    %2441 = vmatprep.subr.mxu0 0.0
    %2442 = vmatpush1.xpose.msra.mxu0 0.0
    %2443 = vmatprep.subr.mxu0 0.0
    %2444 = vmatpush1.xpose.msra.mxu0 0.0
    %2445 = vmatprep.mubr.f32.mxu0 0.0
    %2446 = vmatmul.mubr.f32.gmra.mrb[0].mxu0 %v2377
    %v2447 = vpop.f32.mrb[0].mxu0
    %v2448 = vadd.f32 0.0, %v2447
    %v2449 = vpop.f32.mrb[0].mxu0
    %2450 = vdwg.mxu0
    %2451 = vrot.lane.b32.xlu0 %v2039, 120
    %v2452 = vpop.permute.xlu0 %2451
    %2453 = vrot.lane.b32.xlu0 %v2039, 88
    %v2454 = vpop.permute.xlu0 %2453
    %v2455 = vsel %vm213, %v2452, 0
    %v2457 = vsel %vm213, %v2454, 0
    %2459 = vmatprep.subr.mxu0 0.0
    %2460 = vmatpush1.xpose.msra.mxu0 %v2457
    %2461 = vmatprep.subr.mxu0 0.0
    %2462 = vmatpush1.xpose.msra.mxu0 0.0
    %2463 = vmatprep.subr.mxu0 0.0
    %2464 = vmatpush1.xpose.msra.mxu0 0.0
    %2465 = vmatprep.subr.mxu0 0.0
    %2466 = vmatpush1.xpose.msra.mxu0 0.0
    %2467 = vmatprep.subr.mxu0 0.0
    %2468 = vmatpush1.xpose.msra.mxu0 0.0
    %2469 = vmatprep.subr.mxu0 0.0
    %2470 = vmatpush1.xpose.msra.mxu0 0.0
    %2471 = vmatprep.subr.mxu0 0.0
    %2472 = vmatpush1.xpose.msra.mxu0 0.0
    %2473 = vmatprep.subr.mxu0 0.0
    %2474 = vmatpush1.xpose.msra.mxu0 0.0
    %2475 = vmatprep.subr.mxu0 0.0
    %2476 = vmatpush1.xpose.msra.mxu0 0.0
    %2477 = vmatprep.subr.mxu0 0.0
    %2478 = vmatpush1.xpose.msra.mxu0 0.0
    %2479 = vmatprep.subr.mxu0 0.0
    %2480 = vmatpush1.xpose.msra.mxu0 0.0
    %2481 = vmatprep.subr.mxu0 0.0
    %2482 = vmatpush1.xpose.msra.mxu0 0.0
    %2483 = vmatprep.subr.mxu0 0.0
    %2484 = vmatpush1.xpose.msra.mxu0 0.0
    %2485 = vmatprep.subr.mxu0 0.0
    %2486 = vmatpush1.xpose.msra.mxu0 0.0
    %2487 = vmatprep.subr.mxu0 0.0
    %2488 = vmatpush1.xpose.msra.mxu0 0.0
    %2489 = vmatprep.subr.mxu0 0.0
    %2490 = vmatpush1.xpose.msra.mxu0 0.0
    %2491 = vmatprep.subr.mxu0 0.0
    %2492 = vmatpush1.xpose.msra.mxu0 0.0
    %2493 = vmatprep.subr.mxu0 0.0
    %2494 = vmatpush1.xpose.msra.mxu0 0.0
    %2495 = vmatprep.subr.mxu0 0.0
    %2496 = vmatpush1.xpose.msra.mxu0 0.0
    %2497 = vmatprep.subr.mxu0 0.0
    %2498 = vmatpush1.xpose.msra.mxu0 0.0
    %2499 = vmatprep.subr.mxu0 0.0
    %2500 = vmatpush1.xpose.msra.mxu0 0.0
    %2501 = vmatprep.subr.mxu0 0.0
    %2502 = vmatpush1.xpose.msra.mxu0 0.0
    %2503 = vmatprep.subr.mxu0 0.0
    %2504 = vmatpush1.xpose.msra.mxu0 0.0
    %2505 = vmatprep.subr.mxu0 0.0
    %2506 = vmatpush1.xpose.msra.mxu0 0.0
    %2507 = vmatprep.subr.mxu0 0.0
    %2508 = vmatpush1.xpose.msra.mxu0 0.0
    %2509 = vmatprep.subr.mxu0 0.0
    %2510 = vmatpush1.xpose.msra.mxu0 0.0
    %2511 = vmatprep.subr.mxu0 0.0
    %2512 = vmatpush1.xpose.msra.mxu0 0.0
    %2513 = vmatprep.subr.mxu0 0.0
    %2514 = vmatpush1.xpose.msra.mxu0 0.0
    %2515 = vmatprep.subr.mxu0 0.0
    %2516 = vmatpush1.xpose.msra.mxu0 0.0
    %2517 = vmatprep.subr.mxu0 0.0
    %2518 = vmatpush1.xpose.msra.mxu0 0.0
    %2519 = vmatprep.subr.mxu0 0.0
    %2520 = vmatpush1.xpose.msra.mxu0 0.0
    %2521 = vmatprep.subr.mxu0 0.0
    %2522 = vmatpush1.xpose.msra.mxu0 0.0
    %2523 = vmatprep.mubr.f32.mxu0 0.0
    %2524 = vmatmul.mubr.f32.gmra.mrb[0].mxu0 %v2455
    %v2525 = vpop.f32.mrb[0].mxu0
    %v2526 = vadd.f32 0.0, %v2525
    %v2527 = vpop.f32.mrb[0].mxu0
    %2528 = vdwg.mxu0
    %v2529 = vsel %vm213, %v2448, -inf
    %2530 = vmax.xlane.f32.xlu0 %v2529
    %v2531 = vpop.xlane.xlu0 %2530
    %v2532 = vsel %vm213, %v2526, -inf
    %2533 = vmax.xlane.f32.xlu0 %v2532
    %v2534 = vpop.xlane.xlu0 %2533
    %v2535 = vsub.f32 %v2448, %v2531
    %v2536 = vsub.f32 %v2526, %v2534
    %v2537 = vmul.f32 %v2535, 1.442695
    %v2538 = vpow.pop %v2537
    %v2539 = vmul.f32 %v2536, 1.442695
    %v2540 = vpow.pop %v2539
    %v2541 = vsel %vm213, %v2538, 0.0
    %2542 = vadd.xlane.f32.xlu0 %v2541
    %v2543 = vpop.xlane.xlu0 %2542
    %v2544 = vsel %vm213, %v2540, 0.0
    %2545 = vadd.xlane.f32.xlu0 %v2544
    %v2546 = vpop.xlane.xlu0 %2545
    %v2547 = vrcp.pop %v2543
    %v2548 = vrcp.pop %v2546
    %v2549 = vmul.f32 %v2538, %v2547
    %v2550 = vmul.f32 %v2540, %v2548
    %s2551 = scalar_lea.vmem %s14, 80
    %2552 = vst.msk [vmem:[%s2551] sm:$0xff] %vm213, %v2549
    %2553 = vst.msk [vmem:[%s2551 + $0x8] sm:$0xff] %vm213, %v2550
    %2554 = vrot.lane.b32.xlu0 %v2034, 56
    %v2555 = vpop.permute.xlu0 %2554
    %v2558 = vsel %vm213, %v2549, 0
    %2560 = vmatprep.subr.mxu0 0.0
    %2561 = vmatpush1.msra.mxu0 %v2555
    %2562 = vmatprep.subr.mxu0 0.0
    %2563 = vmatpush1.msra.mxu0 0.0
    %2564 = vmatprep.subr.mxu0 0.0
    %2565 = vmatpush1.msra.mxu0 0.0
    %2566 = vmatprep.subr.mxu0 0.0
    %2567 = vmatpush1.msra.mxu0 0.0
    %2568 = vmatprep.subr.mxu0 0.0
    %2569 = vmatpush1.msra.mxu0 0.0
    %2570 = vmatprep.subr.mxu0 0.0
    %2571 = vmatpush1.msra.mxu0 0.0
    %2572 = vmatprep.subr.mxu0 0.0
    %2573 = vmatpush1.msra.mxu0 0.0
    %2574 = vmatprep.subr.mxu0 0.0
    %2575 = vmatpush1.msra.mxu0 0.0
    %2576 = vmatprep.subr.mxu0 0.0
    %2577 = vmatpush1.msra.mxu0 0.0
    %2578 = vmatprep.subr.mxu0 0.0
    %2579 = vmatpush1.msra.mxu0 0.0
    %2580 = vmatprep.subr.mxu0 0.0
    %2581 = vmatpush1.msra.mxu0 0.0
    %2582 = vmatprep.subr.mxu0 0.0
    %2583 = vmatpush1.msra.mxu0 0.0
    %2584 = vmatprep.subr.mxu0 0.0
    %2585 = vmatpush1.msra.mxu0 0.0
    %2586 = vmatprep.subr.mxu0 0.0
    %2587 = vmatpush1.msra.mxu0 0.0
    %2588 = vmatprep.subr.mxu0 0.0
    %2589 = vmatpush1.msra.mxu0 0.0
    %2590 = vmatprep.subr.mxu0 0.0
    %2591 = vmatpush1.msra.mxu0 0.0
    %2592 = vmatprep.subr.mxu0 0.0
    %2593 = vmatpush1.msra.mxu0 0.0
    %2594 = vmatprep.subr.mxu0 0.0
    %2595 = vmatpush1.msra.mxu0 0.0
    %2596 = vmatprep.subr.mxu0 0.0
    %2597 = vmatpush1.msra.mxu0 0.0
    %2598 = vmatprep.subr.mxu0 0.0
    %2599 = vmatpush1.msra.mxu0 0.0
    %2600 = vmatprep.subr.mxu0 0.0
    %2601 = vmatpush1.msra.mxu0 0.0
    %2602 = vmatprep.subr.mxu0 0.0
    %2603 = vmatpush1.msra.mxu0 0.0
    %2604 = vmatprep.subr.mxu0 0.0
    %2605 = vmatpush1.msra.mxu0 0.0
    %2606 = vmatprep.subr.mxu0 0.0
    %2607 = vmatpush1.msra.mxu0 0.0
    %2608 = vmatprep.subr.mxu0 0.0
    %2609 = vmatpush1.msra.mxu0 0.0
    %2610 = vmatprep.subr.mxu0 0.0
    %2611 = vmatpush1.msra.mxu0 0.0
    %2612 = vmatprep.subr.mxu0 0.0
    %2613 = vmatpush1.msra.mxu0 0.0
    %2614 = vmatprep.subr.mxu0 0.0
    %2615 = vmatpush1.msra.mxu0 0.0
    %2616 = vmatprep.subr.mxu0 0.0
    %2617 = vmatpush1.msra.mxu0 0.0
    %2618 = vmatprep.subr.mxu0 0.0
    %2619 = vmatpush1.msra.mxu0 0.0
    %2620 = vmatprep.subr.mxu0 0.0
    %2621 = vmatpush1.msra.mxu0 0.0
    %2622 = vmatprep.subr.mxu0 0.0
    %2623 = vmatpush1.msra.mxu0 0.0
    %2624 = vmatprep.mubr.f32.mxu0 0.0
    %2625 = vmatmul.mubr.f32.gmra.mrb[0].mxu0 %v2558
    %v2626 = vpop.f32.mrb[0].mxu0
    %v2627 = vadd.f32 0.0, %v2626
    %v2628 = vpop.f32.mrb[0].mxu0
    %2629 = vdwg.mxu0
    %2630 = vrot.lane.b32.xlu0 %v2039, 56
    %v2631 = vpop.permute.xlu0 %2630
    %v2634 = vsel %vm213, %v2550, 0
    %2636 = vmatprep.subr.mxu0 0.0
    %2637 = vmatpush1.msra.mxu0 %v2631
    %2638 = vmatprep.subr.mxu0 0.0
    %2639 = vmatpush1.msra.mxu0 0.0
    %2640 = vmatprep.subr.mxu0 0.0
    %2641 = vmatpush1.msra.mxu0 0.0
    %2642 = vmatprep.subr.mxu0 0.0
    %2643 = vmatpush1.msra.mxu0 0.0
    %2644 = vmatprep.subr.mxu0 0.0
    %2645 = vmatpush1.msra.mxu0 0.0
    %2646 = vmatprep.subr.mxu0 0.0
    %2647 = vmatpush1.msra.mxu0 0.0
    %2648 = vmatprep.subr.mxu0 0.0
    %2649 = vmatpush1.msra.mxu0 0.0
    %2650 = vmatprep.subr.mxu0 0.0
    %2651 = vmatpush1.msra.mxu0 0.0
    %2652 = vmatprep.subr.mxu0 0.0
    %2653 = vmatpush1.msra.mxu0 0.0
    %2654 = vmatprep.subr.mxu0 0.0
    %2655 = vmatpush1.msra.mxu0 0.0
    %2656 = vmatprep.subr.mxu0 0.0
    %2657 = vmatpush1.msra.mxu0 0.0
    %2658 = vmatprep.subr.mxu0 0.0
    %2659 = vmatpush1.msra.mxu0 0.0
    %2660 = vmatprep.subr.mxu0 0.0
    %2661 = vmatpush1.msra.mxu0 0.0
    %2662 = vmatprep.subr.mxu0 0.0
    %2663 = vmatpush1.msra.mxu0 0.0
    %2664 = vmatprep.subr.mxu0 0.0
    %2665 = vmatpush1.msra.mxu0 0.0
    %2666 = vmatprep.subr.mxu0 0.0
    %2667 = vmatpush1.msra.mxu0 0.0
    %2668 = vmatprep.subr.mxu0 0.0
    %2669 = vmatpush1.msra.mxu0 0.0
    %2670 = vmatprep.subr.mxu0 0.0
    %2671 = vmatpush1.msra.mxu0 0.0
    %2672 = vmatprep.subr.mxu0 0.0
    %2673 = vmatpush1.msra.mxu0 0.0
    %2674 = vmatprep.subr.mxu0 0.0
    %2675 = vmatpush1.msra.mxu0 0.0
    %2676 = vmatprep.subr.mxu0 0.0
    %2677 = vmatpush1.msra.mxu0 0.0
    %2678 = vmatprep.subr.mxu0 0.0
    %2679 = vmatpush1.msra.mxu0 0.0
    %2680 = vmatprep.subr.mxu0 0.0
    %2681 = vmatpush1.msra.mxu0 0.0
    %2682 = vmatprep.subr.mxu0 0.0
    %2683 = vmatpush1.msra.mxu0 0.0
    %2684 = vmatprep.subr.mxu0 0.0
    %2685 = vmatpush1.msra.mxu0 0.0
    %2686 = vmatprep.subr.mxu0 0.0
    %2687 = vmatpush1.msra.mxu0 0.0
    %2688 = vmatprep.subr.mxu0 0.0
    %2689 = vmatpush1.msra.mxu0 0.0
    %2690 = vmatprep.subr.mxu0 0.0
    %2691 = vmatpush1.msra.mxu0 0.0
    %2692 = vmatprep.subr.mxu0 0.0
    %2693 = vmatpush1.msra.mxu0 0.0
    %2694 = vmatprep.subr.mxu0 0.0
    %2695 = vmatpush1.msra.mxu0 0.0
    %2696 = vmatprep.subr.mxu0 0.0
    %2697 = vmatpush1.msra.mxu0 0.0
    %2698 = vmatprep.subr.mxu0 0.0
    %2699 = vmatpush1.msra.mxu0 0.0
    %2700 = vmatprep.mubr.f32.mxu0 0.0
    %2701 = vmatmul.mubr.f32.gmra.mrb[0].mxu0 %v2634
    %v2702 = vpop.f32.mrb[0].mxu0
    %v2703 = vadd.f32 0.0, %v2702
    %v2704 = vpop.f32.mrb[0].mxu0
    %2705 = vdwg.mxu0
    %2706 = vrot.lane.b32.xlu0 %v2034, 112
    %v2707 = vpop.permute.xlu0 %2706
    %2708 = vrot.lane.b32.xlu0 %v2034, 80
    %v2709 = vpop.permute.xlu0 %2708
    %v2710 = vsel %vm213, %v2707, 0
    %v2712 = vsel %vm213, %v2709, 0
    %2714 = vmatprep.subr.mxu0 0.0
    %2715 = vmatpush1.xpose.msra.mxu0 %v2712
    %2716 = vmatprep.subr.mxu0 0.0
    %2717 = vmatpush1.xpose.msra.mxu0 0.0
    %2718 = vmatprep.subr.mxu0 0.0
    %2719 = vmatpush1.xpose.msra.mxu0 0.0
    %2720 = vmatprep.subr.mxu0 0.0
    %2721 = vmatpush1.xpose.msra.mxu0 0.0
    %2722 = vmatprep.subr.mxu0 0.0
    %2723 = vmatpush1.xpose.msra.mxu0 0.0
    %2724 = vmatprep.subr.mxu0 0.0
    %2725 = vmatpush1.xpose.msra.mxu0 0.0
    %2726 = vmatprep.subr.mxu0 0.0
    %2727 = vmatpush1.xpose.msra.mxu0 0.0
    %2728 = vmatprep.subr.mxu0 0.0
    %2729 = vmatpush1.xpose.msra.mxu0 0.0
    %2730 = vmatprep.subr.mxu0 0.0
    %2731 = vmatpush1.xpose.msra.mxu0 0.0
    %2732 = vmatprep.subr.mxu0 0.0
    %2733 = vmatpush1.xpose.msra.mxu0 0.0
    %2734 = vmatprep.subr.mxu0 0.0
    %2735 = vmatpush1.xpose.msra.mxu0 0.0
    %2736 = vmatprep.subr.mxu0 0.0
    %2737 = vmatpush1.xpose.msra.mxu0 0.0
    %2738 = vmatprep.subr.mxu0 0.0
    %2739 = vmatpush1.xpose.msra.mxu0 0.0
    %2740 = vmatprep.subr.mxu0 0.0
    %2741 = vmatpush1.xpose.msra.mxu0 0.0
    %2742 = vmatprep.subr.mxu0 0.0
    %2743 = vmatpush1.xpose.msra.mxu0 0.0
    %2744 = vmatprep.subr.mxu0 0.0
    %2745 = vmatpush1.xpose.msra.mxu0 0.0
    %2746 = vmatprep.subr.mxu0 0.0
    %2747 = vmatpush1.xpose.msra.mxu0 0.0
    %2748 = vmatprep.subr.mxu0 0.0
    %2749 = vmatpush1.xpose.msra.mxu0 0.0
    %2750 = vmatprep.subr.mxu0 0.0
    %2751 = vmatpush1.xpose.msra.mxu0 0.0
    %2752 = vmatprep.subr.mxu0 0.0
    %2753 = vmatpush1.xpose.msra.mxu0 0.0
    %2754 = vmatprep.subr.mxu0 0.0
    %2755 = vmatpush1.xpose.msra.mxu0 0.0
    %2756 = vmatprep.subr.mxu0 0.0
    %2757 = vmatpush1.xpose.msra.mxu0 0.0
    %2758 = vmatprep.subr.mxu0 0.0
    %2759 = vmatpush1.xpose.msra.mxu0 0.0
    %2760 = vmatprep.subr.mxu0 0.0
    %2761 = vmatpush1.xpose.msra.mxu0 0.0
    %2762 = vmatprep.subr.mxu0 0.0
    %2763 = vmatpush1.xpose.msra.mxu0 0.0
    %2764 = vmatprep.subr.mxu0 0.0
    %2765 = vmatpush1.xpose.msra.mxu0 0.0
    %2766 = vmatprep.subr.mxu0 0.0
    %2767 = vmatpush1.xpose.msra.mxu0 0.0
    %2768 = vmatprep.subr.mxu0 0.0
    %2769 = vmatpush1.xpose.msra.mxu0 0.0
    %2770 = vmatprep.subr.mxu0 0.0
    %2771 = vmatpush1.xpose.msra.mxu0 0.0
    %2772 = vmatprep.subr.mxu0 0.0
    %2773 = vmatpush1.xpose.msra.mxu0 0.0
    %2774 = vmatprep.subr.mxu0 0.0
    %2775 = vmatpush1.xpose.msra.mxu0 0.0
    %2776 = vmatprep.subr.mxu0 0.0
    %2777 = vmatpush1.xpose.msra.mxu0 0.0
    %2778 = vmatprep.mubr.f32.mxu0 0.0
    %2779 = vmatmul.mubr.f32.gmra.mrb[0].mxu0 %v2710
    %v2780 = vpop.f32.mrb[0].mxu0
    %v2781 = vadd.f32 0.0, %v2780
    %v2782 = vpop.f32.mrb[0].mxu0
    %2783 = vdwg.mxu0
    %2784 = vrot.lane.b32.xlu0 %v2039, 112
    %v2785 = vpop.permute.xlu0 %2784
    %2786 = vrot.lane.b32.xlu0 %v2039, 80
    %v2787 = vpop.permute.xlu0 %2786
    %v2788 = vsel %vm213, %v2785, 0
    %v2790 = vsel %vm213, %v2787, 0
    %2792 = vmatprep.subr.mxu0 0.0
    %2793 = vmatpush1.xpose.msra.mxu0 %v2790
    %2794 = vmatprep.subr.mxu0 0.0
    %2795 = vmatpush1.xpose.msra.mxu0 0.0
    %2796 = vmatprep.subr.mxu0 0.0
    %2797 = vmatpush1.xpose.msra.mxu0 0.0
    %2798 = vmatprep.subr.mxu0 0.0
    %2799 = vmatpush1.xpose.msra.mxu0 0.0
    %2800 = vmatprep.subr.mxu0 0.0
    %2801 = vmatpush1.xpose.msra.mxu0 0.0
    %2802 = vmatprep.subr.mxu0 0.0
    %2803 = vmatpush1.xpose.msra.mxu0 0.0
    %2804 = vmatprep.subr.mxu0 0.0
    %2805 = vmatpush1.xpose.msra.mxu0 0.0
    %2806 = vmatprep.subr.mxu0 0.0
    %2807 = vmatpush1.xpose.msra.mxu0 0.0
    %2808 = vmatprep.subr.mxu0 0.0
    %2809 = vmatpush1.xpose.msra.mxu0 0.0
    %2810 = vmatprep.subr.mxu0 0.0
    %2811 = vmatpush1.xpose.msra.mxu0 0.0
    %2812 = vmatprep.subr.mxu0 0.0
    %2813 = vmatpush1.xpose.msra.mxu0 0.0
    %2814 = vmatprep.subr.mxu0 0.0
    %2815 = vmatpush1.xpose.msra.mxu0 0.0
    %2816 = vmatprep.subr.mxu0 0.0
    %2817 = vmatpush1.xpose.msra.mxu0 0.0
    %2818 = vmatprep.subr.mxu0 0.0
    %2819 = vmatpush1.xpose.msra.mxu0 0.0
    %2820 = vmatprep.subr.mxu0 0.0
    %2821 = vmatpush1.xpose.msra.mxu0 0.0
    %2822 = vmatprep.subr.mxu0 0.0
    %2823 = vmatpush1.xpose.msra.mxu0 0.0
    %2824 = vmatprep.subr.mxu0 0.0
    %2825 = vmatpush1.xpose.msra.mxu0 0.0
    %2826 = vmatprep.subr.mxu0 0.0
    %2827 = vmatpush1.xpose.msra.mxu0 0.0
    %2828 = vmatprep.subr.mxu0 0.0
    %2829 = vmatpush1.xpose.msra.mxu0 0.0
    %2830 = vmatprep.subr.mxu0 0.0
    %2831 = vmatpush1.xpose.msra.mxu0 0.0
    %2832 = vmatprep.subr.mxu0 0.0
    %2833 = vmatpush1.xpose.msra.mxu0 0.0
    %2834 = vmatprep.subr.mxu0 0.0
    %2835 = vmatpush1.xpose.msra.mxu0 0.0
    %2836 = vmatprep.subr.mxu0 0.0
    %2837 = vmatpush1.xpose.msra.mxu0 0.0
    %2838 = vmatprep.subr.mxu0 0.0
    %2839 = vmatpush1.xpose.msra.mxu0 0.0
    %2840 = vmatprep.subr.mxu0 0.0
    %2841 = vmatpush1.xpose.msra.mxu0 0.0
    %2842 = vmatprep.subr.mxu0 0.0
    %2843 = vmatpush1.xpose.msra.mxu0 0.0
    %2844 = vmatprep.subr.mxu0 0.0
    %2845 = vmatpush1.xpose.msra.mxu0 0.0
    %2846 = vmatprep.subr.mxu0 0.0
    %2847 = vmatpush1.xpose.msra.mxu0 0.0
    %2848 = vmatprep.subr.mxu0 0.0
    %2849 = vmatpush1.xpose.msra.mxu0 0.0
    %2850 = vmatprep.subr.mxu0 0.0
    %2851 = vmatpush1.xpose.msra.mxu0 0.0
    %2852 = vmatprep.subr.mxu0 0.0
    %2853 = vmatpush1.xpose.msra.mxu0 0.0
    %2854 = vmatprep.subr.mxu0 0.0
    %2855 = vmatpush1.xpose.msra.mxu0 0.0
    %2856 = vmatprep.mubr.f32.mxu0 0.0
    %2857 = vmatmul.mubr.f32.gmra.mrb[0].mxu0 %v2788
    %v2858 = vpop.f32.mrb[0].mxu0
    %v2859 = vadd.f32 0.0, %v2858
    %v2860 = vpop.f32.mrb[0].mxu0
    %2861 = vdwg.mxu0
    %v2862 = vsel %vm213, %v2781, -inf
    %2863 = vmax.xlane.f32.xlu0 %v2862
    %v2864 = vpop.xlane.xlu0 %2863
    %v2865 = vsel %vm213, %v2859, -inf
    %2866 = vmax.xlane.f32.xlu0 %v2865
    %v2867 = vpop.xlane.xlu0 %2866
    %v2868 = vsub.f32 %v2781, %v2864
    %v2869 = vsub.f32 %v2859, %v2867
    %v2870 = vmul.f32 %v2868, 1.442695
    %v2871 = vpow.pop %v2870
    %v2872 = vmul.f32 %v2869, 1.442695
    %v2873 = vpow.pop %v2872
    %v2874 = vsel %vm213, %v2871, 0.0
    %2875 = vadd.xlane.f32.xlu0 %v2874
    %v2876 = vpop.xlane.xlu0 %2875
    %v2877 = vsel %vm213, %v2873, 0.0
    %2878 = vadd.xlane.f32.xlu0 %v2877
    %v2879 = vpop.xlane.xlu0 %2878
    %v2880 = vrcp.pop %v2876
    %v2881 = vrcp.pop %v2879
    %v2882 = vmul.f32 %v2871, %v2880
    %v2883 = vmul.f32 %v2873, %v2881
    %s2884 = scalar_lea.vmem %s14, 96
    %2885 = vst.msk [vmem:[%s2884] sm:$0xff] %vm213, %v2882
    %2886 = vst.msk [vmem:[%s2884 + $0x8] sm:$0xff] %vm213, %v2883
    %2887 = vrot.lane.b32.xlu0 %v2034, 48
    %v2888 = vpop.permute.xlu0 %2887
    %v2891 = vsel %vm213, %v2882, 0
    %2893 = vmatprep.subr.mxu0 0.0
    %2894 = vmatpush1.msra.mxu0 %v2888
    %2895 = vmatprep.subr.mxu0 0.0
    %2896 = vmatpush1.msra.mxu0 0.0
    %2897 = vmatprep.subr.mxu0 0.0
    %2898 = vmatpush1.msra.mxu0 0.0
    %2899 = vmatprep.subr.mxu0 0.0
    %2900 = vmatpush1.msra.mxu0 0.0
    %2901 = vmatprep.subr.mxu0 0.0
    %2902 = vmatpush1.msra.mxu0 0.0
    %2903 = vmatprep.subr.mxu0 0.0
    %2904 = vmatpush1.msra.mxu0 0.0
    %2905 = vmatprep.subr.mxu0 0.0
    %2906 = vmatpush1.msra.mxu0 0.0
    %2907 = vmatprep.subr.mxu0 0.0
    %2908 = vmatpush1.msra.mxu0 0.0
    %2909 = vmatprep.subr.mxu0 0.0
    %2910 = vmatpush1.msra.mxu0 0.0
    %2911 = vmatprep.subr.mxu0 0.0
    %2912 = vmatpush1.msra.mxu0 0.0
    %2913 = vmatprep.subr.mxu0 0.0
    %2914 = vmatpush1.msra.mxu0 0.0
    %2915 = vmatprep.subr.mxu0 0.0
    %2916 = vmatpush1.msra.mxu0 0.0
    %2917 = vmatprep.subr.mxu0 0.0
    %2918 = vmatpush1.msra.mxu0 0.0
    %2919 = vmatprep.subr.mxu0 0.0
    %2920 = vmatpush1.msra.mxu0 0.0
    %2921 = vmatprep.subr.mxu0 0.0
    %2922 = vmatpush1.msra.mxu0 0.0
    %2923 = vmatprep.subr.mxu0 0.0
    %2924 = vmatpush1.msra.mxu0 0.0
    %2925 = vmatprep.subr.mxu0 0.0
    %2926 = vmatpush1.msra.mxu0 0.0
    %2927 = vmatprep.subr.mxu0 0.0
    %2928 = vmatpush1.msra.mxu0 0.0
    %2929 = vmatprep.subr.mxu0 0.0
    %2930 = vmatpush1.msra.mxu0 0.0
    %2931 = vmatprep.subr.mxu0 0.0
    %2932 = vmatpush1.msra.mxu0 0.0
    %2933 = vmatprep.subr.mxu0 0.0
    %2934 = vmatpush1.msra.mxu0 0.0
    %2935 = vmatprep.subr.mxu0 0.0
    %2936 = vmatpush1.msra.mxu0 0.0
    %2937 = vmatprep.subr.mxu0 0.0
    %2938 = vmatpush1.msra.mxu0 0.0
    %2939 = vmatprep.subr.mxu0 0.0
    %2940 = vmatpush1.msra.mxu0 0.0
    %2941 = vmatprep.subr.mxu0 0.0
    %2942 = vmatpush1.msra.mxu0 0.0
    %2943 = vmatprep.subr.mxu0 0.0
    %2944 = vmatpush1.msra.mxu0 0.0
    %2945 = vmatprep.subr.mxu0 0.0
    %2946 = vmatpush1.msra.mxu0 0.0
    %2947 = vmatprep.subr.mxu0 0.0
    %2948 = vmatpush1.msra.mxu0 0.0
    %2949 = vmatprep.subr.mxu0 0.0
    %2950 = vmatpush1.msra.mxu0 0.0
    %2951 = vmatprep.subr.mxu0 0.0
    %2952 = vmatpush1.msra.mxu0 0.0
    %2953 = vmatprep.subr.mxu0 0.0
    %2954 = vmatpush1.msra.mxu0 0.0
    %2955 = vmatprep.subr.mxu0 0.0
    %2956 = vmatpush1.msra.mxu0 0.0
    %2957 = vmatprep.mubr.f32.mxu0 0.0
    %2958 = vmatmul.mubr.f32.gmra.mrb[0].mxu0 %v2891
    %v2959 = vpop.f32.mrb[0].mxu0
    %v2960 = vadd.f32 0.0, %v2959
    %v2961 = vpop.f32.mrb[0].mxu0
    %2962 = vdwg.mxu0
    %2963 = vrot.lane.b32.xlu0 %v2039, 48
    %v2964 = vpop.permute.xlu0 %2963
    %v2967 = vsel %vm213, %v2883, 0
    %2969 = vmatprep.subr.mxu0 0.0
    %2970 = vmatpush1.msra.mxu0 %v2964
    %2971 = vmatprep.subr.mxu0 0.0
    %2972 = vmatpush1.msra.mxu0 0.0
    %2973 = vmatprep.subr.mxu0 0.0
    %2974 = vmatpush1.msra.mxu0 0.0
    %2975 = vmatprep.subr.mxu0 0.0
    %2976 = vmatpush1.msra.mxu0 0.0
    %2977 = vmatprep.subr.mxu0 0.0
    %2978 = vmatpush1.msra.mxu0 0.0
    %2979 = vmatprep.subr.mxu0 0.0
    %2980 = vmatpush1.msra.mxu0 0.0
    %2981 = vmatprep.subr.mxu0 0.0
    %2982 = vmatpush1.msra.mxu0 0.0
    %2983 = vmatprep.subr.mxu0 0.0
    %2984 = vmatpush1.msra.mxu0 0.0
    %2985 = vmatprep.subr.mxu0 0.0
    %2986 = vmatpush1.msra.mxu0 0.0
    %2987 = vmatprep.subr.mxu0 0.0
    %2988 = vmatpush1.msra.mxu0 0.0
    %2989 = vmatprep.subr.mxu0 0.0
    %2990 = vmatpush1.msra.mxu0 0.0
    %2991 = vmatprep.subr.mxu0 0.0
    %2992 = vmatpush1.msra.mxu0 0.0
    %2993 = vmatprep.subr.mxu0 0.0
    %2994 = vmatpush1.msra.mxu0 0.0
    %2995 = vmatprep.subr.mxu0 0.0
    %2996 = vmatpush1.msra.mxu0 0.0
    %2997 = vmatprep.subr.mxu0 0.0
    %2998 = vmatpush1.msra.mxu0 0.0
    %2999 = vmatprep.subr.mxu0 0.0
    %3000 = vmatpush1.msra.mxu0 0.0
    %3001 = vmatprep.subr.mxu0 0.0
    %3002 = vmatpush1.msra.mxu0 0.0
    %3003 = vmatprep.subr.mxu0 0.0
    %3004 = vmatpush1.msra.mxu0 0.0
    %3005 = vmatprep.subr.mxu0 0.0
    %3006 = vmatpush1.msra.mxu0 0.0
    %3007 = vmatprep.subr.mxu0 0.0
    %3008 = vmatpush1.msra.mxu0 0.0
    %3009 = vmatprep.subr.mxu0 0.0
    %3010 = vmatpush1.msra.mxu0 0.0
    %3011 = vmatprep.subr.mxu0 0.0
    %3012 = vmatpush1.msra.mxu0 0.0
    %3013 = vmatprep.subr.mxu0 0.0
    %3014 = vmatpush1.msra.mxu0 0.0
    %3015 = vmatprep.subr.mxu0 0.0
    %3016 = vmatpush1.msra.mxu0 0.0
    %3017 = vmatprep.subr.mxu0 0.0
    %3018 = vmatpush1.msra.mxu0 0.0
    %3019 = vmatprep.subr.mxu0 0.0
    %3020 = vmatpush1.msra.mxu0 0.0
    %3021 = vmatprep.subr.mxu0 0.0
    %3022 = vmatpush1.msra.mxu0 0.0
    %3023 = vmatprep.subr.mxu0 0.0
    %3024 = vmatpush1.msra.mxu0 0.0
    %3025 = vmatprep.subr.mxu0 0.0
    %3026 = vmatpush1.msra.mxu0 0.0
    %3027 = vmatprep.subr.mxu0 0.0
    %3028 = vmatpush1.msra.mxu0 0.0
    %3029 = vmatprep.subr.mxu0 0.0
    %3030 = vmatpush1.msra.mxu0 0.0
    %3031 = vmatprep.subr.mxu0 0.0
    %3032 = vmatpush1.msra.mxu0 0.0
    %3033 = vmatprep.mubr.f32.mxu0 0.0
    %3034 = vmatmul.mubr.f32.gmra.mrb[0].mxu0 %v2967
    %v3035 = vpop.f32.mrb[0].mxu0
    %v3036 = vadd.f32 0.0, %v3035
    %v3037 = vpop.f32.mrb[0].mxu0
    %3038 = vdwg.mxu0
    %3039 = vrot.lane.b32.xlu0 %v2034, 104
    %v3040 = vpop.permute.xlu0 %3039
    %3041 = vrot.lane.b32.xlu0 %v2034, 72
    %v3042 = vpop.permute.xlu0 %3041
    %v3043 = vsel %vm213, %v3040, 0
    %v3045 = vsel %vm213, %v3042, 0
    %3047 = vmatprep.subr.mxu0 0.0
    %3048 = vmatpush1.xpose.msra.mxu0 %v3045
    %3049 = vmatprep.subr.mxu0 0.0
    %3050 = vmatpush1.xpose.msra.mxu0 0.0
    %3051 = vmatprep.subr.mxu0 0.0
    %3052 = vmatpush1.xpose.msra.mxu0 0.0
    %3053 = vmatprep.subr.mxu0 0.0
    %3054 = vmatpush1.xpose.msra.mxu0 0.0
    %3055 = vmatprep.subr.mxu0 0.0
    %3056 = vmatpush1.xpose.msra.mxu0 0.0
    %3057 = vmatprep.subr.mxu0 0.0
    %3058 = vmatpush1.xpose.msra.mxu0 0.0
    %3059 = vmatprep.subr.mxu0 0.0
    %3060 = vmatpush1.xpose.msra.mxu0 0.0
    %3061 = vmatprep.subr.mxu0 0.0
    %3062 = vmatpush1.xpose.msra.mxu0 0.0
    %3063 = vmatprep.subr.mxu0 0.0
    %3064 = vmatpush1.xpose.msra.mxu0 0.0
    %3065 = vmatprep.subr.mxu0 0.0
    %3066 = vmatpush1.xpose.msra.mxu0 0.0
    %3067 = vmatprep.subr.mxu0 0.0
    %3068 = vmatpush1.xpose.msra.mxu0 0.0
    %3069 = vmatprep.subr.mxu0 0.0
    %3070 = vmatpush1.xpose.msra.mxu0 0.0
    %3071 = vmatprep.subr.mxu0 0.0
    %3072 = vmatpush1.xpose.msra.mxu0 0.0
    %3073 = vmatprep.subr.mxu0 0.0
    %3074 = vmatpush1.xpose.msra.mxu0 0.0
    %3075 = vmatprep.subr.mxu0 0.0
    %3076 = vmatpush1.xpose.msra.mxu0 0.0
    %3077 = vmatprep.subr.mxu0 0.0
    %3078 = vmatpush1.xpose.msra.mxu0 0.0
    %3079 = vmatprep.subr.mxu0 0.0
    %3080 = vmatpush1.xpose.msra.mxu0 0.0
    %3081 = vmatprep.subr.mxu0 0.0
    %3082 = vmatpush1.xpose.msra.mxu0 0.0
    %3083 = vmatprep.subr.mxu0 0.0
    %3084 = vmatpush1.xpose.msra.mxu0 0.0
    %3085 = vmatprep.subr.mxu0 0.0
    %3086 = vmatpush1.xpose.msra.mxu0 0.0
    %3087 = vmatprep.subr.mxu0 0.0
    %3088 = vmatpush1.xpose.msra.mxu0 0.0
    %3089 = vmatprep.subr.mxu0 0.0
    %3090 = vmatpush1.xpose.msra.mxu0 0.0
    %3091 = vmatprep.subr.mxu0 0.0
    %3092 = vmatpush1.xpose.msra.mxu0 0.0
    %3093 = vmatprep.subr.mxu0 0.0
    %3094 = vmatpush1.xpose.msra.mxu0 0.0
    %3095 = vmatprep.subr.mxu0 0.0
    %3096 = vmatpush1.xpose.msra.mxu0 0.0
    %3097 = vmatprep.subr.mxu0 0.0
    %3098 = vmatpush1.xpose.msra.mxu0 0.0
    %3099 = vmatprep.subr.mxu0 0.0
    %3100 = vmatpush1.xpose.msra.mxu0 0.0
    %3101 = vmatprep.subr.mxu0 0.0
    %3102 = vmatpush1.xpose.msra.mxu0 0.0
    %3103 = vmatprep.subr.mxu0 0.0
    %3104 = vmatpush1.xpose.msra.mxu0 0.0
    %3105 = vmatprep.subr.mxu0 0.0
    %3106 = vmatpush1.xpose.msra.mxu0 0.0
    %3107 = vmatprep.subr.mxu0 0.0
    %3108 = vmatpush1.xpose.msra.mxu0 0.0
    %3109 = vmatprep.subr.mxu0 0.0
    %3110 = vmatpush1.xpose.msra.mxu0 0.0
    %3111 = vmatprep.mubr.f32.mxu0 0.0
    %3112 = vmatmul.mubr.f32.gmra.mrb[0].mxu0 %v3043
    %v3113 = vpop.f32.mrb[0].mxu0
    %v3114 = vadd.f32 0.0, %v3113
    %v3115 = vpop.f32.mrb[0].mxu0
    %3116 = vdwg.mxu0
    %3117 = vrot.lane.b32.xlu0 %v2039, 104
    %v3118 = vpop.permute.xlu0 %3117
    %3119 = vrot.lane.b32.xlu0 %v2039, 72
    %v3120 = vpop.permute.xlu0 %3119
    %v3121 = vsel %vm213, %v3118, 0
    %v3123 = vsel %vm213, %v3120, 0
    %3125 = vmatprep.subr.mxu0 0.0
    %3126 = vmatpush1.xpose.msra.mxu0 %v3123
    %3127 = vmatprep.subr.mxu0 0.0
    %3128 = vmatpush1.xpose.msra.mxu0 0.0
    %3129 = vmatprep.subr.mxu0 0.0
    %3130 = vmatpush1.xpose.msra.mxu0 0.0
    %3131 = vmatprep.subr.mxu0 0.0
    %3132 = vmatpush1.xpose.msra.mxu0 0.0
    %3133 = vmatprep.subr.mxu0 0.0
    %3134 = vmatpush1.xpose.msra.mxu0 0.0
    %3135 = vmatprep.subr.mxu0 0.0
    %3136 = vmatpush1.xpose.msra.mxu0 0.0
    %3137 = vmatprep.subr.mxu0 0.0
    %3138 = vmatpush1.xpose.msra.mxu0 0.0
    %3139 = vmatprep.subr.mxu0 0.0
    %3140 = vmatpush1.xpose.msra.mxu0 0.0
    %3141 = vmatprep.subr.mxu0 0.0
    %3142 = vmatpush1.xpose.msra.mxu0 0.0
    %3143 = vmatprep.subr.mxu0 0.0
    %3144 = vmatpush1.xpose.msra.mxu0 0.0
    %3145 = vmatprep.subr.mxu0 0.0
    %3146 = vmatpush1.xpose.msra.mxu0 0.0
    %3147 = vmatprep.subr.mxu0 0.0
    %3148 = vmatpush1.xpose.msra.mxu0 0.0
    %3149 = vmatprep.subr.mxu0 0.0
    %3150 = vmatpush1.xpose.msra.mxu0 0.0
    %3151 = vmatprep.subr.mxu0 0.0
    %3152 = vmatpush1.xpose.msra.mxu0 0.0
    %3153 = vmatprep.subr.mxu0 0.0
    %3154 = vmatpush1.xpose.msra.mxu0 0.0
    %3155 = vmatprep.subr.mxu0 0.0
    %3156 = vmatpush1.xpose.msra.mxu0 0.0
    %3157 = vmatprep.subr.mxu0 0.0
    %3158 = vmatpush1.xpose.msra.mxu0 0.0
    %3159 = vmatprep.subr.mxu0 0.0
    %3160 = vmatpush1.xpose.msra.mxu0 0.0
    %3161 = vmatprep.subr.mxu0 0.0
    %3162 = vmatpush1.xpose.msra.mxu0 0.0
    %3163 = vmatprep.subr.mxu0 0.0
    %3164 = vmatpush1.xpose.msra.mxu0 0.0
    %3165 = vmatprep.subr.mxu0 0.0
    %3166 = vmatpush1.xpose.msra.mxu0 0.0
    %3167 = vmatprep.subr.mxu0 0.0
    %3168 = vmatpush1.xpose.msra.mxu0 0.0
    %3169 = vmatprep.subr.mxu0 0.0
    %3170 = vmatpush1.xpose.msra.mxu0 0.0
    %3171 = vmatprep.subr.mxu0 0.0
    %3172 = vmatpush1.xpose.msra.mxu0 0.0
    %3173 = vmatprep.subr.mxu0 0.0
    %3174 = vmatpush1.xpose.msra.mxu0 0.0
    %3175 = vmatprep.subr.mxu0 0.0
    %3176 = vmatpush1.xpose.msra.mxu0 0.0
    %3177 = vmatprep.subr.mxu0 0.0
    %3178 = vmatpush1.xpose.msra.mxu0 0.0
    %3179 = vmatprep.subr.mxu0 0.0
    %3180 = vmatpush1.xpose.msra.mxu0 0.0
    %3181 = vmatprep.subr.mxu0 0.0
    %3182 = vmatpush1.xpose.msra.mxu0 0.0
    %3183 = vmatprep.subr.mxu0 0.0
    %3184 = vmatpush1.xpose.msra.mxu0 0.0
    %3185 = vmatprep.subr.mxu0 0.0
    %3186 = vmatpush1.xpose.msra.mxu0 0.0
    %3187 = vmatprep.subr.mxu0 0.0
    %3188 = vmatpush1.xpose.msra.mxu0 0.0
    %3189 = vmatprep.mubr.f32.mxu0 0.0
    %3190 = vmatmul.mubr.f32.gmra.mrb[0].mxu0 %v3121
    %v3191 = vpop.f32.mrb[0].mxu0
    %v3192 = vadd.f32 0.0, %v3191
    %v3193 = vpop.f32.mrb[0].mxu0
    %3194 = vdwg.mxu0
    %v3195 = vsel %vm213, %v3114, -inf
    %3196 = vmax.xlane.f32.xlu0 %v3195
    %v3197 = vpop.xlane.xlu0 %3196
    %v3198 = vsel %vm213, %v3192, -inf
    %3199 = vmax.xlane.f32.xlu0 %v3198
    %v3200 = vpop.xlane.xlu0 %3199
    %v3201 = vsub.f32 %v3114, %v3197
    %v3202 = vsub.f32 %v3192, %v3200
    %v3203 = vmul.f32 %v3201, 1.442695
    %v3204 = vpow.pop %v3203
    %v3205 = vmul.f32 %v3202, 1.442695
    %v3206 = vpow.pop %v3205
    %v3207 = vsel %vm213, %v3204, 0.0
    %3208 = vadd.xlane.f32.xlu0 %v3207
    %v3209 = vpop.xlane.xlu0 %3208
    %v3210 = vsel %vm213, %v3206, 0.0
    %3211 = vadd.xlane.f32.xlu0 %v3210
    %v3212 = vpop.xlane.xlu0 %3211
    %v3213 = vrcp.pop %v3209
    %v3214 = vrcp.pop %v3212
    %v3215 = vmul.f32 %v3204, %v3213
    %v3216 = vmul.f32 %v3206, %v3214
    %s3217 = scalar_lea.vmem %s14, 112
    %3218 = vst.msk [vmem:[%s3217] sm:$0xff] %vm213, %v3215
    %3219 = vst.msk [vmem:[%s3217 + $0x8] sm:$0xff] %vm213, %v3216
    %3220 = vrot.lane.b32.xlu0 %v2034, 40
    %v3221 = vpop.permute.xlu0 %3220
    %v3224 = vsel %vm213, %v3215, 0
    %3226 = vmatprep.subr.mxu0 0.0
    %3227 = vmatpush1.msra.mxu0 %v3221
    %3228 = vmatprep.subr.mxu0 0.0
    %3229 = vmatpush1.msra.mxu0 0.0
    %3230 = vmatprep.subr.mxu0 0.0
    %3231 = vmatpush1.msra.mxu0 0.0
    %3232 = vmatprep.subr.mxu0 0.0
    %3233 = vmatpush1.msra.mxu0 0.0
    %3234 = vmatprep.subr.mxu0 0.0
    %3235 = vmatpush1.msra.mxu0 0.0
    %3236 = vmatprep.subr.mxu0 0.0
    %3237 = vmatpush1.msra.mxu0 0.0
    %3238 = vmatprep.subr.mxu0 0.0
    %3239 = vmatpush1.msra.mxu0 0.0
    %3240 = vmatprep.subr.mxu0 0.0
    %3241 = vmatpush1.msra.mxu0 0.0
    %3242 = vmatprep.subr.mxu0 0.0
    %3243 = vmatpush1.msra.mxu0 0.0
    %3244 = vmatprep.subr.mxu0 0.0
    %3245 = vmatpush1.msra.mxu0 0.0
    %3246 = vmatprep.subr.mxu0 0.0
    %3247 = vmatpush1.msra.mxu0 0.0
    %3248 = vmatprep.subr.mxu0 0.0
    %3249 = vmatpush1.msra.mxu0 0.0
    %3250 = vmatprep.subr.mxu0 0.0
    %3251 = vmatpush1.msra.mxu0 0.0
    %3252 = vmatprep.subr.mxu0 0.0
    %3253 = vmatpush1.msra.mxu0 0.0
    %3254 = vmatprep.subr.mxu0 0.0
    %3255 = vmatpush1.msra.mxu0 0.0
    %3256 = vmatprep.subr.mxu0 0.0
    %3257 = vmatpush1.msra.mxu0 0.0
    %3258 = vmatprep.subr.mxu0 0.0
    %3259 = vmatpush1.msra.mxu0 0.0
    %3260 = vmatprep.subr.mxu0 0.0
    %3261 = vmatpush1.msra.mxu0 0.0
    %3262 = vmatprep.subr.mxu0 0.0
    %3263 = vmatpush1.msra.mxu0 0.0
    %3264 = vmatprep.subr.mxu0 0.0
    %3265 = vmatpush1.msra.mxu0 0.0
    %3266 = vmatprep.subr.mxu0 0.0
    %3267 = vmatpush1.msra.mxu0 0.0
    %3268 = vmatprep.subr.mxu0 0.0
    %3269 = vmatpush1.msra.mxu0 0.0
    %3270 = vmatprep.subr.mxu0 0.0
    %3271 = vmatpush1.msra.mxu0 0.0
    %3272 = vmatprep.subr.mxu0 0.0
    %3273 = vmatpush1.msra.mxu0 0.0
    %3274 = vmatprep.subr.mxu0 0.0
    %3275 = vmatpush1.msra.mxu0 0.0
    %3276 = vmatprep.subr.mxu0 0.0
    %3277 = vmatpush1.msra.mxu0 0.0
    %3278 = vmatprep.subr.mxu0 0.0
    %3279 = vmatpush1.msra.mxu0 0.0
    %3280 = vmatprep.subr.mxu0 0.0
    %3281 = vmatpush1.msra.mxu0 0.0
    %3282 = vmatprep.subr.mxu0 0.0
    %3283 = vmatpush1.msra.mxu0 0.0
    %3284 = vmatprep.subr.mxu0 0.0
    %3285 = vmatpush1.msra.mxu0 0.0
    %3286 = vmatprep.subr.mxu0 0.0
    %3287 = vmatpush1.msra.mxu0 0.0
    %3288 = vmatprep.subr.mxu0 0.0
    %3289 = vmatpush1.msra.mxu0 0.0
    %3290 = vmatprep.mubr.f32.mxu0 0.0
    %3291 = vmatmul.mubr.f32.gmra.mrb[0].mxu0 %v3224
    %v3292 = vpop.f32.mrb[0].mxu0
    %v3293 = vadd.f32 0.0, %v3292
    %v3294 = vpop.f32.mrb[0].mxu0
    %3295 = vdwg.mxu0
    %3296 = vrot.lane.b32.xlu0 %v2039, 40
    %v3297 = vpop.permute.xlu0 %3296
    %v3300 = vsel %vm213, %v3216, 0
    %3302 = vmatprep.subr.mxu0 0.0
    %3303 = vmatpush1.msra.mxu0 %v3297
    %3304 = vmatprep.subr.mxu0 0.0
    %3305 = vmatpush1.msra.mxu0 0.0
    %3306 = vmatprep.subr.mxu0 0.0
    %3307 = vmatpush1.msra.mxu0 0.0
    %3308 = vmatprep.subr.mxu0 0.0
    %3309 = vmatpush1.msra.mxu0 0.0
    %3310 = vmatprep.subr.mxu0 0.0
    %3311 = vmatpush1.msra.mxu0 0.0
    %3312 = vmatprep.subr.mxu0 0.0
    %3313 = vmatpush1.msra.mxu0 0.0
    %3314 = vmatprep.subr.mxu0 0.0
    %3315 = vmatpush1.msra.mxu0 0.0
    %3316 = vmatprep.subr.mxu0 0.0
    %3317 = vmatpush1.msra.mxu0 0.0
    %3318 = vmatprep.subr.mxu0 0.0
    %3319 = vmatpush1.msra.mxu0 0.0
    %3320 = vmatprep.subr.mxu0 0.0
    %3321 = vmatpush1.msra.mxu0 0.0
    %3322 = vmatprep.subr.mxu0 0.0
    %3323 = vmatpush1.msra.mxu0 0.0
    %3324 = vmatprep.subr.mxu0 0.0
    %3325 = vmatpush1.msra.mxu0 0.0
    %3326 = vmatprep.subr.mxu0 0.0
    %3327 = vmatpush1.msra.mxu0 0.0
    %3328 = vmatprep.subr.mxu0 0.0
    %3329 = vmatpush1.msra.mxu0 0.0
    %3330 = vmatprep.subr.mxu0 0.0
    %3331 = vmatpush1.msra.mxu0 0.0
    %3332 = vmatprep.subr.mxu0 0.0
    %3333 = vmatpush1.msra.mxu0 0.0
    %3334 = vmatprep.subr.mxu0 0.0
    %3335 = vmatpush1.msra.mxu0 0.0
    %3336 = vmatprep.subr.mxu0 0.0
    %3337 = vmatpush1.msra.mxu0 0.0
    %3338 = vmatprep.subr.mxu0 0.0
    %3339 = vmatpush1.msra.mxu0 0.0
    %3340 = vmatprep.subr.mxu0 0.0
    %3341 = vmatpush1.msra.mxu0 0.0
    %3342 = vmatprep.subr.mxu0 0.0
    %3343 = vmatpush1.msra.mxu0 0.0
    %3344 = vmatprep.subr.mxu0 0.0
    %3345 = vmatpush1.msra.mxu0 0.0
    %3346 = vmatprep.subr.mxu0 0.0
    %3347 = vmatpush1.msra.mxu0 0.0
    %3348 = vmatprep.subr.mxu0 0.0
    %3349 = vmatpush1.msra.mxu0 0.0
    %3350 = vmatprep.subr.mxu0 0.0
    %3351 = vmatpush1.msra.mxu0 0.0
    %3352 = vmatprep.subr.mxu0 0.0
    %3353 = vmatpush1.msra.mxu0 0.0
    %3354 = vmatprep.subr.mxu0 0.0
    %3355 = vmatpush1.msra.mxu0 0.0
    %3356 = vmatprep.subr.mxu0 0.0
    %3357 = vmatpush1.msra.mxu0 0.0
    %3358 = vmatprep.subr.mxu0 0.0
    %3359 = vmatpush1.msra.mxu0 0.0
    %3360 = vmatprep.subr.mxu0 0.0
    %3361 = vmatpush1.msra.mxu0 0.0
    %3362 = vmatprep.subr.mxu0 0.0
    %3363 = vmatpush1.msra.mxu0 0.0
    %3364 = vmatprep.subr.mxu0 0.0
    %3365 = vmatpush1.msra.mxu0 0.0
    %3366 = vmatprep.mubr.f32.mxu0 0.0
    %3367 = vmatmul.mubr.f32.gmra.mrb[0].mxu0 %v3300
    %v3368 = vpop.f32.mrb[0].mxu0
    %v3369 = vadd.f32 0.0, %v3368
    %v3370 = vpop.f32.mrb[0].mxu0
    %3371 = vdwg.mxu0
    %3374 = vrot.lane.b32.xlu0 %v2627, 8
    %v3375 = vpop.permute.xlu0 %3374
    %3376 = vrot.lane.b32.xlu0 %v2703, 8
    %v3377 = vpop.permute.xlu0 %3376
    %3382 = vrot.lane.b32.xlu0 %v2960, 16
    %v3383 = vpop.permute.xlu0 %3382
    %3384 = vrot.lane.b32.xlu0 %v3036, 16
    %v3385 = vpop.permute.xlu0 %3384
    %3390 = vrot.lane.b32.xlu0 %v3293, 24
    %v3391 = vpop.permute.xlu0 %3390
    %3392 = vrot.lane.b32.xlu0 %v3369, 24
    %v3393 = vpop.permute.xlu0 %3392
    %v3396 = vsel %vm213, %v2294, %v3375
    %v3397 = vsel %vm213, %v2370, %v3377
    %v3398 = vsel %vm1566, %v3396, %v3383
    %v3399 = vsel %vm1566, %v3397, %v3385
    %v3400 = vsel %vm1569, %v3398, %v3391
    %v3401 = vsel %vm1569, %v3399, %v3393
    %s3402 = scalar_lea.vmem [#allocation7], 32
    %v3403 = vld [vmem:[%s3402] sm:$0xff]
    %v3404 = vld [vmem:[%s3402 + $0x8] sm:$0xff]
    %v3405 = vld [vmem:[%s3402 + $0x10] sm:$0xff]
    %v3406 = vld [vmem:[%s3402 + $0x18] sm:$0xff]
    %s3407 = scalar_lea.vmem %s4, 1
    %v3408 = vld [vmem:[%s3407] sm:$0x1]
    %v3410 = vlaneseq
    %v3411 = vshrl.u32 %v3410, 7
    %v3412 = vsub.s32 0, %v3411
    %v3413 = vrot.slane %v3408, %v3412
    %v3416 = vsel %vm128, %v3400, 0
    %v3419 = vsel %vm128, %v3401, 0
    %3421 = vmatprep.subr.mxu0 0.0
    %3422 = vmatpush1.msra.mxu0 %v3403
    %3423 = vmatprep.subr.mxu0 0.0
    %3424 = vmatpush1.msra.mxu0 %v3404
    %3425 = vmatprep.subr.mxu0 0.0
    %3426 = vmatpush1.msra.mxu0 %v3405
    %3427 = vmatprep.subr.mxu0 0.0
    %3428 = vmatpush1.msra.mxu0 %v3406
    %3429 = vmatprep.subr.mxu0 0.0
    %3430 = vmatpush1.msra.mxu0 0.0
    %3431 = vmatprep.subr.mxu0 0.0
    %3432 = vmatpush1.msra.mxu0 0.0
    %3433 = vmatprep.subr.mxu0 0.0
    %3434 = vmatpush1.msra.mxu0 0.0
    %3435 = vmatprep.subr.mxu0 0.0
    %3436 = vmatpush1.msra.mxu0 0.0
    %3437 = vmatprep.subr.mxu0 0.0
    %3438 = vmatpush1.msra.mxu0 0.0
    %3439 = vmatprep.subr.mxu0 0.0
    %3440 = vmatpush1.msra.mxu0 0.0
    %3441 = vmatprep.subr.mxu0 0.0
    %3442 = vmatpush1.msra.mxu0 0.0
    %3443 = vmatprep.subr.mxu0 0.0
    %3444 = vmatpush1.msra.mxu0 0.0
    %3445 = vmatprep.subr.mxu0 0.0
    %3446 = vmatpush1.msra.mxu0 0.0
    %3447 = vmatprep.subr.mxu0 0.0
    %3448 = vmatpush1.msra.mxu0 0.0
    %3449 = vmatprep.subr.mxu0 0.0
    %3450 = vmatpush1.msra.mxu0 0.0
    %3451 = vmatprep.subr.mxu0 0.0
    %3452 = vmatpush1.msra.mxu0 0.0
    %3453 = vmatprep.subr.mxu0 0.0
    %3454 = vmatpush1.msra.mxu0 0.0
    %3455 = vmatprep.subr.mxu0 0.0
    %3456 = vmatpush1.msra.mxu0 0.0
    %3457 = vmatprep.subr.mxu0 0.0
    %3458 = vmatpush1.msra.mxu0 0.0
    %3459 = vmatprep.subr.mxu0 0.0
    %3460 = vmatpush1.msra.mxu0 0.0
    %3461 = vmatprep.subr.mxu0 0.0
    %3462 = vmatpush1.msra.mxu0 0.0
    %3463 = vmatprep.subr.mxu0 0.0
    %3464 = vmatpush1.msra.mxu0 0.0
    %3465 = vmatprep.subr.mxu0 0.0
    %3466 = vmatpush1.msra.mxu0 0.0
    %3467 = vmatprep.subr.mxu0 0.0
    %3468 = vmatpush1.msra.mxu0 0.0
    %3469 = vmatprep.subr.mxu0 0.0
    %3470 = vmatpush1.msra.mxu0 0.0
    %3471 = vmatprep.subr.mxu0 0.0
    %3472 = vmatpush1.msra.mxu0 0.0
    %3473 = vmatprep.subr.mxu0 0.0
    %3474 = vmatpush1.msra.mxu0 0.0
    %3475 = vmatprep.subr.mxu0 0.0
    %3476 = vmatpush1.msra.mxu0 0.0
    %3477 = vmatprep.subr.mxu0 0.0
    %3478 = vmatpush1.msra.mxu0 0.0
    %3479 = vmatprep.subr.mxu0 0.0
    %3480 = vmatpush1.msra.mxu0 0.0
    %3481 = vmatprep.subr.mxu0 0.0
    %3482 = vmatpush1.msra.mxu0 0.0
    %3483 = vmatprep.subr.mxu0 0.0
    %3484 = vmatpush1.msra.mxu0 0.0
    %3485 = vmatprep.mubr.f32.mxu0 0.0
    %3486 = vmatmul.mubr.f32.gmra.mrb[0].mxu0 %v3416
    %v3487 = vpop.f32.mrb[0].mxu0
    %v3488 = vadd.f32 %v3413, %v3487
    %v3489 = vpop.f32.mrb[0].mxu0
    %3490 = vmatprep.mubr.f32.mxu0 0.0
    %3491 = vmatmul.mubr.f32.gmra.mrb[0].mxu0 %v3419
    %v3492 = vpop.f32.mrb[0].mxu0
    %v3493 = vadd.f32 %v3413, %v3492
    %v3494 = vpop.f32.mrb[0].mxu0
    %3495 = vdwg.mxu0
    %v3496 = vadd.f32 %v1946, %v3488
    %v3497 = vadd.f32 %v1947, %v3493
    %s3498 = scalar_lea.vmem %s5, 1
    %v3499 = vld [vmem:[%s3498] sm:$0x1]
    %s3500 = scalar_lea.vmem %s6, 1
    %v3501 = vld [vmem:[%s3500] sm:$0x1]
    %v3502 = vsel %vm128, %v3496, 0.0
    %3503 = vadd.xlane.f32.xlu0 %v3502
    %v3504 = vpop.xlane.xlu0 %3503
    %v3505 = vsel %vm128, %v3497, 0.0
    %3506 = vadd.xlane.f32.xlu0 %v3505
    %v3507 = vpop.xlane.xlu0 %3506
    %v3508 = vmul.f32 %v3504, %v1674
    %v3509 = vmul.f32 %v3507, %v1674
    %v3510 = vsub.f32 %v3496, %v3508
    %v3511 = vsub.f32 %v3497, %v3509
    %v3512 = vmul.f32 %v3510, %v3510
    %v3513 = vmul.f32 %v3511, %v3511
    %v3514 = vsel %vm128, %v3512, 0.0
    %3515 = vadd.xlane.f32.xlu0 %v3514
    %v3516 = vpop.xlane.xlu0 %3515
    %v3517 = vsel %vm128, %v3513, 0.0
    %3518 = vadd.xlane.f32.xlu0 %v3517
    %v3519 = vpop.xlane.xlu0 %3518
    %v3520 = vmul.f32 %v3516, %v1674
    %v3521 = vmul.f32 %v3519, %v1674
    %v3522 = vadd.f32 %v3520, 1e-05
    %v3523 = vadd.f32 %v3521, 1e-05
    %v3524 = vrsqrt.pop %v3522
    %v3525 = vrsqrt.pop %v3523
    %v3526 = vmul.f32 %v3510, %v3524
    %v3527 = vmul.f32 %v3511, %v3525
    %v3529 = vlaneseq
    %v3530 = vshrl.u32 %v3529, 7
    %v3531 = vsub.s32 0, %v3530
    %v3532 = vrot.slane %v3499, %v3531
    %v3534 = vmul.f32 %v3526, %v3532
    %v3535 = vmul.f32 %v3527, %v3532
    %v3537 = vlaneseq
    %v3538 = vshrl.u32 %v3537, 7
    %v3539 = vsub.s32 0, %v3538
    %v3540 = vrot.slane %v3501, %v3539
    %v3542 = vadd.f32 %v3534, %v3540
    %v3543 = vadd.f32 %v3535, %v3540
    %s3544 = scalar_lea.vmem [#allocation8], 32
    %v3545 = vld [vmem:[%s3544] sm:$0xff]
    %v3546 = vld [vmem:[%s3544 + $0x8] sm:$0xff]
    %v3547 = vld [vmem:[%s3544 + $0x10] sm:$0xff]
    %v3548 = vld [vmem:[%s3544 + $0x18] sm:$0xff]
    %s3549 = scalar_lea.vmem %s8, 1
    %v3550 = vld [vmem:[%s3549] sm:$0x1]
    %v3552 = vlaneseq
    %v3553 = vshrl.u32 %v3552, 7
    %v3554 = vsub.s32 0, %v3553
    %v3555 = vrot.slane %v3550, %v3554
    %v3558 = vsel %vm128, %v3542, 0
    %v3561 = vsel %vm128, %v3543, 0
    %3563 = vmatprep.subr.mxu0 0.0
    %3564 = vmatpush1.msra.mxu0 %v3545
    %3565 = vmatprep.subr.mxu0 0.0
    %3566 = vmatpush1.msra.mxu0 %v3546
    %3567 = vmatprep.subr.mxu0 0.0
    %3568 = vmatpush1.msra.mxu0 %v3547
    %3569 = vmatprep.subr.mxu0 0.0
    %3570 = vmatpush1.msra.mxu0 %v3548
    %3571 = vmatprep.subr.mxu0 0.0
    %3572 = vmatpush1.msra.mxu0 0.0
    %3573 = vmatprep.subr.mxu0 0.0
    %3574 = vmatpush1.msra.mxu0 0.0
    %3575 = vmatprep.subr.mxu0 0.0
    %3576 = vmatpush1.msra.mxu0 0.0
    %3577 = vmatprep.subr.mxu0 0.0
    %3578 = vmatpush1.msra.mxu0 0.0
    %3579 = vmatprep.subr.mxu0 0.0
    %3580 = vmatpush1.msra.mxu0 0.0
    %3581 = vmatprep.subr.mxu0 0.0
    %3582 = vmatpush1.msra.mxu0 0.0
    %3583 = vmatprep.subr.mxu0 0.0
    %3584 = vmatpush1.msra.mxu0 0.0
    %3585 = vmatprep.subr.mxu0 0.0
    %3586 = vmatpush1.msra.mxu0 0.0
    %3587 = vmatprep.subr.mxu0 0.0
    %3588 = vmatpush1.msra.mxu0 0.0
    %3589 = vmatprep.subr.mxu0 0.0
    %3590 = vmatpush1.msra.mxu0 0.0
    %3591 = vmatprep.subr.mxu0 0.0
    %3592 = vmatpush1.msra.mxu0 0.0
    %3593 = vmatprep.subr.mxu0 0.0
    %3594 = vmatpush1.msra.mxu0 0.0
    %3595 = vmatprep.subr.mxu0 0.0
    %3596 = vmatpush1.msra.mxu0 0.0
    %3597 = vmatprep.subr.mxu0 0.0
    %3598 = vmatpush1.msra.mxu0 0.0
    %3599 = vmatprep.subr.mxu0 0.0
    %3600 = vmatpush1.msra.mxu0 0.0
    %3601 = vmatprep.subr.mxu0 0.0
    %3602 = vmatpush1.msra.mxu0 0.0
    %3603 = vmatprep.subr.mxu0 0.0
    %3604 = vmatpush1.msra.mxu0 0.0
    %3605 = vmatprep.subr.mxu0 0.0
    %3606 = vmatpush1.msra.mxu0 0.0
    %3607 = vmatprep.subr.mxu0 0.0
    %3608 = vmatpush1.msra.mxu0 0.0
    %3609 = vmatprep.subr.mxu0 0.0
    %3610 = vmatpush1.msra.mxu0 0.0
    %3611 = vmatprep.subr.mxu0 0.0
    %3612 = vmatpush1.msra.mxu0 0.0
    %3613 = vmatprep.subr.mxu0 0.0
    %3614 = vmatpush1.msra.mxu0 0.0
    %3615 = vmatprep.subr.mxu0 0.0
    %3616 = vmatpush1.msra.mxu0 0.0
    %3617 = vmatprep.subr.mxu0 0.0
    %3618 = vmatpush1.msra.mxu0 0.0
    %3619 = vmatprep.subr.mxu0 0.0
    %3620 = vmatpush1.msra.mxu0 0.0
    %3621 = vmatprep.subr.mxu0 0.0
    %3622 = vmatpush1.msra.mxu0 0.0
    %3623 = vmatprep.subr.mxu0 0.0
    %3624 = vmatpush1.msra.mxu0 0.0
    %3625 = vmatprep.subr.mxu0 0.0
    %3626 = vmatpush1.msra.mxu0 0.0
    %3627 = vmatprep.mubr.f32.mxu0 0.0
    %3628 = vmatmul.mubr.f32.gmra.mrb[0].mxu0 %v3558
    %v3629 = vpop.f32.mrb[0].mxu0
    %v3630 = vadd.f32 %v3555, %v3629
    %v3631 = vpop.f32.mrb[0].mxu0
    %3632 = vmatprep.mubr.f32.mxu0 0.0
    %3633 = vmatmul.mubr.f32.gmra.mrb[0].mxu0 %v3561
    %v3634 = vpop.f32.mrb[0].mxu0
    %v3635 = vadd.f32 %v3555, %v3634
    %v3636 = vpop.f32.mrb[0].mxu0
    %3637 = vdwg.mxu0
    %v3638 = vmax.f32 %v3630, 0.0
    %v3639 = vmax.f32 %v3635, 0.0
    %s3640 = scalar_lea.vmem [#allocation10], 64
    %v3641 = vld [vmem:[%s3640] sm:$0xff]
    %v3642 = vld [vmem:[%s3640 + $0x8] sm:$0xff]
    %v3643 = vld [vmem:[%s3640 + $0x10] sm:$0xff]
    %v3644 = vld [vmem:[%s3640 + $0x18] sm:$0xff]
    %v3645 = vld [vmem:[%s3640 + $0x20] sm:$0xff]
    %v3646 = vld [vmem:[%s3640 + $0x28] sm:$0xff]
    %v3647 = vld [vmem:[%s3640 + $0x30] sm:$0xff]
    %v3648 = vld [vmem:[%s3640 + $0x38] sm:$0xff]
    %s3649 = scalar_lea.vmem %s10, 1
    %v3650 = vld [vmem:[%s3649] sm:$0x1]
    %v3652 = vlaneseq
    %v3653 = vshrl.u32 %v3652, 7
    %v3654 = vsub.s32 0, %v3653
    %v3655 = vrot.slane %v3650, %v3654
    %v3658 = vsel %vm1820, %v3638, 0
    %v3661 = vsel %vm1820, %v3639, 0
    %3663 = vmatprep.subr.mxu0 0.0
    %3664 = vmatpush1.msra.mxu0 %v3641
    %3665 = vmatprep.subr.mxu0 0.0
    %3666 = vmatpush1.msra.mxu0 %v3642
    %3667 = vmatprep.subr.mxu0 0.0
    %3668 = vmatpush1.msra.mxu0 %v3643
    %3669 = vmatprep.subr.mxu0 0.0
    %3670 = vmatpush1.msra.mxu0 %v3644
    %3671 = vmatprep.subr.mxu0 0.0
    %3672 = vmatpush1.msra.mxu0 %v3645
    %3673 = vmatprep.subr.mxu0 0.0
    %3674 = vmatpush1.msra.mxu0 %v3646
    %3675 = vmatprep.subr.mxu0 0.0
    %3676 = vmatpush1.msra.mxu0 %v3647
    %3677 = vmatprep.subr.mxu0 0.0
    %3678 = vmatpush1.msra.mxu0 %v3648
    %3679 = vmatprep.subr.mxu0 0.0
    %3680 = vmatpush1.msra.mxu0 0.0
    %3681 = vmatprep.subr.mxu0 0.0
    %3682 = vmatpush1.msra.mxu0 0.0
    %3683 = vmatprep.subr.mxu0 0.0
    %3684 = vmatpush1.msra.mxu0 0.0
    %3685 = vmatprep.subr.mxu0 0.0
    %3686 = vmatpush1.msra.mxu0 0.0
    %3687 = vmatprep.subr.mxu0 0.0
    %3688 = vmatpush1.msra.mxu0 0.0
    %3689 = vmatprep.subr.mxu0 0.0
    %3690 = vmatpush1.msra.mxu0 0.0
    %3691 = vmatprep.subr.mxu0 0.0
    %3692 = vmatpush1.msra.mxu0 0.0
    %3693 = vmatprep.subr.mxu0 0.0
    %3694 = vmatpush1.msra.mxu0 0.0
    %3695 = vmatprep.subr.mxu0 0.0
    %3696 = vmatpush1.msra.mxu0 0.0
    %3697 = vmatprep.subr.mxu0 0.0
    %3698 = vmatpush1.msra.mxu0 0.0
    %3699 = vmatprep.subr.mxu0 0.0
    %3700 = vmatpush1.msra.mxu0 0.0
    %3701 = vmatprep.subr.mxu0 0.0
    %3702 = vmatpush1.msra.mxu0 0.0
    %3703 = vmatprep.subr.mxu0 0.0
    %3704 = vmatpush1.msra.mxu0 0.0
    %3705 = vmatprep.subr.mxu0 0.0
    %3706 = vmatpush1.msra.mxu0 0.0
    %3707 = vmatprep.subr.mxu0 0.0
    %3708 = vmatpush1.msra.mxu0 0.0
    %3709 = vmatprep.subr.mxu0 0.0
    %3710 = vmatpush1.msra.mxu0 0.0
    %3711 = vmatprep.subr.mxu0 0.0
    %3712 = vmatpush1.msra.mxu0 0.0
    %3713 = vmatprep.subr.mxu0 0.0
    %3714 = vmatpush1.msra.mxu0 0.0
    %3715 = vmatprep.subr.mxu0 0.0
    %3716 = vmatpush1.msra.mxu0 0.0
    %3717 = vmatprep.subr.mxu0 0.0
    %3718 = vmatpush1.msra.mxu0 0.0
    %3719 = vmatprep.subr.mxu0 0.0
    %3720 = vmatpush1.msra.mxu0 0.0
    %3721 = vmatprep.subr.mxu0 0.0
    %3722 = vmatpush1.msra.mxu0 0.0
    %3723 = vmatprep.subr.mxu0 0.0
    %3724 = vmatpush1.msra.mxu0 0.0
    %3725 = vmatprep.subr.mxu0 0.0
    %3726 = vmatpush1.msra.mxu0 0.0
    %3727 = vmatprep.mubr.f32.mxu0 0.0
    %3728 = vmatmul.mubr.f32.gmra.mrb[0].mxu0 %v3658
    %v3729 = vpop.f32.mrb[0].mxu0
    %v3730 = vadd.f32 %v3655, %v3729
    %v3731 = vpop.f32.mrb[0].mxu0
    %3732 = vmatprep.mubr.f32.mxu0 0.0
    %3733 = vmatmul.mubr.f32.gmra.mrb[0].mxu0 %v3661
    %v3734 = vpop.f32.mrb[0].mxu0
    %v3735 = vadd.f32 %v3655, %v3734
    %v3736 = vpop.f32.mrb[0].mxu0
    %3737 = vdwg.mxu0
    %v3738 = vadd.f32 %v3542, %v3730
    %v3739 = vadd.f32 %v3543, %v3735
    %s3740 = scalar_lea.vmem %s11, 1
    %v3741 = vld [vmem:[%s3740] sm:$0x1]
    %s3742 = scalar_lea.vmem %s12, 1
    %v3743 = vld [vmem:[%s3742] sm:$0x1]
    %v3744 = vsel %vm128, %v3738, 0.0
    %3745 = vadd.xlane.f32.xlu0 %v3744
    %v3746 = vpop.xlane.xlu0 %3745
    %v3747 = vsel %vm128, %v3739, 0.0
    %3748 = vadd.xlane.f32.xlu0 %v3747
    %v3749 = vpop.xlane.xlu0 %3748
    %v3750 = vmul.f32 %v3746, %v1674
    %v3751 = vmul.f32 %v3749, %v1674
    %v3752 = vsub.f32 %v3738, %v3750
    %v3753 = vsub.f32 %v3739, %v3751
    %v3754 = vmul.f32 %v3752, %v3752
    %v3755 = vmul.f32 %v3753, %v3753
    %v3756 = vsel %vm128, %v3754, 0.0
    %3757 = vadd.xlane.f32.xlu0 %v3756
    %v3758 = vpop.xlane.xlu0 %3757
    %v3759 = vsel %vm128, %v3755, 0.0
    %3760 = vadd.xlane.f32.xlu0 %v3759
    %v3761 = vpop.xlane.xlu0 %3760
    %v3762 = vmul.f32 %v3758, %v1674
    %v3763 = vmul.f32 %v3761, %v1674
    %v3764 = vadd.f32 %v3762, 1e-05
    %v3765 = vadd.f32 %v3763, 1e-05
    %v3766 = vrsqrt.pop %v3764
    %v3767 = vrsqrt.pop %v3765
    %v3768 = vmul.f32 %v3752, %v3766
    %v3769 = vmul.f32 %v3753, %v3767
    %v3771 = vlaneseq
    %v3772 = vshrl.u32 %v3771, 7
    %v3773 = vsub.s32 0, %v3772
    %v3774 = vrot.slane %v3741, %v3773
    %v3776 = vmul.f32 %v3768, %v3774
    %v3777 = vmul.f32 %v3769, %v3774
    %v3779 = vlaneseq
    %v3780 = vshrl.u32 %v3779, 7
    %v3781 = vsub.s32 0, %v3780
    %v3782 = vrot.slane %v3743, %v3781
    %v3784 = vadd.f32 %v3776, %v3782
    %v3785 = vadd.f32 %v3777, %v3782
    %3786 = vst.msk [vmem:[#allocation11] sm:$0xff] %vm128, %v3784
    %3787 = vst.msk [vmem:[#allocation11 + $0x8] sm:$0xff] %vm128, %v3785
    // Predicated region
    $region74: #{_lambda_.1} parent=1 // pred_check
      _
    $region75: #{_lambda_.1} parent=1 // pred_check_branch
      %3789 = sbr.rel (0) target = $region77
    $region76: #{_lambda_.1} parent=1 // pred_region
      %s3791 = ssub.s32 256, 256
      %3792 = vsyncadd [#allocation4], %s3791
      %s3793 = sshll.u32 [#allocation11], 4
      %s3794 = int_to_ptr.vmem [resolvable:$true] %s3793
      %3799 = dma.vmem_to_hbm [thread:$0]  %s3794, 256, %s13, [#allocation4], 128, 128, 8
    $region77: #{_lambda_.1} parent=1 // pred_fallthru
      _
    // Predicated region
    $region78: #{_lambda_.1} parent=1 // pred_check
      _
    $region79: #{_lambda_.1} parent=1 // pred_check_branch
      %3801 = sbr.rel (0) target = $region81
    $region80: #{_lambda_.1} parent=1 // pred_region
      _
    $region81: #{_lambda_.1} parent=1 // pred_fallthru
      _
    // Predicated region
    $region82: #{_lambda_.1} parent=1 // pred_check
      _
    $region83: #{_lambda_.1} parent=1 // pred_check_branch
      %3803 = sbr.rel (0) target = $region85
    $region84: #{_lambda_.1} parent=1 // pred_region
      %3804 = dma.done [#allocation4], 256
    $region85: #{_lambda_.1} parent=1 // pred_fallthru
      _
    // Predicated region
    $region86: #{_lambda_.1} parent=1 // pred_check
      _
    $region87: #{_lambda_.1} parent=1 // pred_check_branch
      %3806 = sbr.rel (0) target = $region89
    $region88: #{_lambda_.1} parent=1 // pred_region
      _
    $region89: #{_lambda_.1} parent=1 // pred_fallthru
      _
    %3807 = vsyncpa [#allocation3], 1
    %3808 = vsyncpa [#allocation6], 1
    %3809 = vsyncpa [#allocation9], 1
    %3810 = vsyncpa [#allocation4], 1

</llo_original>
